<compile_context>
chip_gen: v7x
topology: tpu7x:2x2x1
jax: 0.10.0
libtpu: 0.0.40
codegen_flags: <defaults>
</compile_context>

<pallas_src>
import functools

import jax
import jax.numpy as jnp
from jax.experimental import pallas as pl
from jax.experimental.pallas import tpu as pltpu


# ----------------------------------------------------------------------------
# Kernel
# ----------------------------------------------------------------------------
def lstm_encode_kernel(num_layers, seq_len, batch, hidden_size, *refs):
    """Stacked GRU encoder + Linear on the final hidden state.

    Ref order:
      inputs : x_flat (T*B, D0)  [time-major],
               per layer: W_ir^T, W_iz^T, W_in^T, W_hr^T, W_hz^T, W_hn^T,
                          b_r (=b_ir+b_hr), b_z (=b_iz+b_hz), b_in, b_hn,
               W_lin^T (H, O), b_lin (1, O)
      outputs: y_last (B, O), h_last (B, H)
      scratch: seq (T*B, H)  -- layer-to-layer sequence buffer
    """
    H, T, B = hidden_size, seq_len, batch
    n_layer_refs = 10 * num_layers

    x_ref = refs[0]
    layer_refs = refs[1:1 + n_layer_refs]
    wlin_ref = refs[1 + n_layer_refs]
    blin_ref = refs[2 + n_layer_refs]
    y_ref = refs[3 + n_layer_refs]
    h_ref = refs[4 + n_layer_refs]
    seq_ref = refs[5 + n_layer_refs]

    x_flat = x_ref[...]                                   # (T*B, D0)
    h = jnp.zeros((B, H), jnp.float32)

    for layer in range(num_layers):
        (wir_ref, wiz_ref, win_ref, whr_ref, whz_ref, whn_ref,
         br_ref, bz_ref, bin_ref, bhn_ref) = layer_refs[10 * layer:10 * layer + 10]
        whr = whr_ref[...]
        whz = whz_ref[...]
        whn = whn_ref[...]
        bhn = bhn_ref[...]

        # Hoisted input projections: one batched matmul per gate per layer.
        # Biases for r/z are pre-folded (b_ih + b_hh); b_hh_n stays separate
        # because it sits inside the r * (.) term of the GRU cell.
        gi_r = jnp.dot(x_flat, wir_ref[...],
                       preferred_element_type=jnp.float32) + br_ref[...]
        gi_z = jnp.dot(x_flat, wiz_ref[...],
                       preferred_element_type=jnp.float32) + bz_ref[...]
        gi_n = jnp.dot(x_flat, win_ref[...],
                       preferred_element_type=jnp.float32) + bin_ref[...]

        h = jnp.zeros((B, H), jnp.float32)
        last_layer = (layer == num_layers - 1)

        for t in range(T):                                # static full unroll
            lo, hi = t * B, (t + 1) * B
            gh_r = jnp.dot(h, whr, preferred_element_type=jnp.float32)
            gh_z = jnp.dot(h, whz, preferred_element_type=jnp.float32)
            gh_n = jnp.dot(h, whn, preferred_element_type=jnp.float32) + bhn
            r = jax.nn.sigmoid(gi_r[lo:hi] + gh_r)
            z = jax.nn.sigmoid(gi_z[lo:hi] + gh_z)
            n = jnp.tanh(gi_n[lo:hi] + r * gh_n)
            h = (1.0 - z) * n + z * h
            if not last_layer:
                seq_ref[lo:hi, :] = h                     # feeds next layer

        if not last_layer:
            x_flat = seq_ref[...]                         # (T*B, H), time-major

    h_ref[...] = h                                        # ht[-1, :, :]
    y_ref[...] = (jnp.dot(h, wlin_ref[...],
                          preferred_element_type=jnp.float32)
                  + blin_ref[...])                        # linear(out)[:, -1, :]


# ----------------------------------------------------------------------------
# Wrapper
# ----------------------------------------------------------------------------
def lstm_encode_forward(x_past, y_past, params, hidden_size, num_layers):
    B, T, input_size = x_past.shape
    O = y_past.shape[2]
    H = hidden_size

    # Glue (plain JAX): concat, time-major flatten, per-gate weight split.
    x = jnp.concatenate([x_past, y_past], axis=2).astype(jnp.float32)
    x_flat = x.transpose(1, 0, 2).reshape(T * B, input_size + O)

    inputs = [x_flat]
    for l in range(num_layers):
        p = params["gru"][l]
        w_ih, w_hh = p["w_ih"], p["w_hh"]                 # (3H, D_l), (3H, H)
        b_ih, b_hh = p["b_ih"], p["b_hh"]                 # (3H,), (3H,)
        inputs += [
            w_ih[0 * H:1 * H].T, w_ih[1 * H:2 * H].T, w_ih[2 * H:3 * H].T,
            w_hh[0 * H:1 * H].T, w_hh[1 * H:2 * H].T, w_hh[2 * H:3 * H].T,
            (b_ih[0 * H:1 * H] + b_hh[0 * H:1 * H])[None, :],   # b_r
            (b_ih[1 * H:2 * H] + b_hh[1 * H:2 * H])[None, :],   # b_z
            b_ih[2 * H:3 * H][None, :],                          # b_in
            b_hh[2 * H:3 * H][None, :],                          # b_hn
        ]
    inputs += [params["w_lin"].T, params["b_lin"][None, :]]

    kernel = functools.partial(lstm_encode_kernel, num_layers, T, B, H)
    vmem = pl.BlockSpec(memory_space=pltpu.MemorySpace.VMEM)
    y_last, h_last = pl.pallas_call(
        kernel,
        out_shape=(jax.ShapeDtypeStruct((B, O), jnp.float32),
                   jax.ShapeDtypeStruct((B, H), jnp.float32)),
        in_specs=[vmem] * len(inputs),
        out_specs=(vmem, vmem),
        scratch_shapes=[pltpu.VMEM((T * B, H), jnp.float32)],
        compiler_params=pltpu.CompilerParams(
            vmem_limit_bytes=64 * 1024 * 1024),
    )(*inputs)
    return y_last, h_last


# ----------------------------------------------------------------------------
# Pure-JAX reference (mirrors the PyTorch forward exactly)
# ----------------------------------------------------------------------------
def _gru_cell_ref(x, h, w_ih, w_hh, b_ih, b_hh, H):
    gi = x @ w_ih.T + b_ih
    gh = h @ w_hh.T + b_hh
    r = jax.nn.sigmoid(gi[:, :H] + gh[:, :H])
    z = jax.nn.sigmoid(gi[:, H:2 * H] + gh[:, H:2 * H])
    n = jnp.tanh(gi[:, 2 * H:] + r * gh[:, 2 * H:])
    return (1.0 - z) * n + z * h


def lstm_encode_reference(x_past, y_past, params, H, num_layers):
    B = x_past.shape[0]
    layer_in = jnp.concatenate([x_past, y_past], axis=2)
    h_last = None
    for l in range(num_layers):
        p = params["gru"][l]
        h = jnp.zeros((B, H), jnp.float32)
        outs = []
        for t in range(layer_in.shape[1]):
            h = _gru_cell_ref(layer_in[:, t, :], h,
                              p["w_ih"], p["w_hh"], p["b_ih"], p["b_hh"], H)
            outs.append(h)
        layer_in = jnp.stack(outs, axis=1)
        h_last = h
    y_all = layer_in @ params["w_lin"].T + params["b_lin"]
    return y_all[:, -1, :], h_last


# ----------------------------------------------------------------------------
# Deterministic parameter init (PyTorch-style U(-1/sqrt(H), 1/sqrt(H)))
# ----------------------------------------------------------------------------
def init_params(key, input_size, hidden_size, output_size, num_layers):
    H = hidden_size
    d_in = input_size + output_size
    bound = 1.0 / float(H) ** 0.5
    keys = iter(jax.random.split(key, 4 * num_layers + 2))

    def uni(shape):
        return jax.random.uniform(next(keys), shape, jnp.float32, -bound, bound)

    gru = []
    for l in range(num_layers):
        in_l = d_in if l == 0 else H
        gru.append(dict(w_ih=uni((3 * H, in_l)), w_hh=uni((3 * H, H)),
                        b_ih=uni((3 * H,)), b_hh=uni((3 * H,))))
    return {"gru": gru,
            "w_lin": uni((output_size, H)),
            "b_lin": uni((output_size,))}


# ----------------------------------------------------------------------------
if __name__ == "__main__":
    B, T = 2, 8
    input_size, output_size = 4, 1
    hidden_size, num_layers = 32, 2

    key = jax.random.PRNGKey(0)
    kp, kx, ky = jax.random.split(key, 3)
    params = init_params(kp, input_size, hidden_size, output_size, num_layers)
    x_past = jax.random.normal(kx, (B, T, input_size), jnp.float32)
    y_past = jax.random.normal(ky, (B, T, output_size), jnp.float32)

    y_last, h_last = lstm_encode_forward(x_past, y_past, params,
                                         hidden_size, num_layers)
    y_last, h_last = jax.block_until_ready((y_last, h_last))

    y_ref, h_ref = lstm_encode_reference(x_past, y_past, params,
                                         hidden_size, num_layers)
    assert y_last.shape == (B, output_size), y_last.shape
    assert h_last.shape == (B, hidden_size), h_last.shape
    err_y = float(jnp.max(jnp.abs(y_last - y_ref)))
    err_h = float(jnp.max(jnp.abs(h_last - h_ref)))
    assert err_y < 1e-3 and err_h < 1e-3, (err_y, err_h)
    print("KERNEL_OK")
</pallas_src>

<mosaic_0001>
module attributes {stable_mosaic.version = 11 : i64} {
  func.func @lstm_encode_kernel(%arg0: memref<16x5xf32, #tpu.memory_space<vmem>>, %arg1: memref<5x32xf32, #tpu.memory_space<vmem>>, %arg2: memref<5x32xf32, #tpu.memory_space<vmem>>, %arg3: memref<5x32xf32, #tpu.memory_space<vmem>>, %arg4: memref<32x32xf32, #tpu.memory_space<vmem>>, %arg5: memref<32x32xf32, #tpu.memory_space<vmem>>, %arg6: memref<32x32xf32, #tpu.memory_space<vmem>>, %arg7: memref<1x32xf32, #tpu.memory_space<vmem>>, %arg8: memref<1x32xf32, #tpu.memory_space<vmem>>, %arg9: memref<1x32xf32, #tpu.memory_space<vmem>>, %arg10: memref<1x32xf32, #tpu.memory_space<vmem>>, %arg11: memref<32x32xf32, #tpu.memory_space<vmem>>, %arg12: memref<32x32xf32, #tpu.memory_space<vmem>>, %arg13: memref<32x32xf32, #tpu.memory_space<vmem>>, %arg14: memref<32x32xf32, #tpu.memory_space<vmem>>, %arg15: memref<32x32xf32, #tpu.memory_space<vmem>>, %arg16: memref<32x32xf32, #tpu.memory_space<vmem>>, %arg17: memref<1x32xf32, #tpu.memory_space<vmem>>, %arg18: memref<1x32xf32, #tpu.memory_space<vmem>>, %arg19: memref<1x32xf32, #tpu.memory_space<vmem>>, %arg20: memref<1x32xf32, #tpu.memory_space<vmem>>, %arg21: memref<32x1xf32, #tpu.memory_space<vmem>>, %arg22: memref<1x1xf32, #tpu.memory_space<vmem>>, %arg23: memref<2x1xf32, #tpu.memory_space<vmem>>, %arg24: memref<2x32xf32, #tpu.memory_space<vmem>>, %arg25: memref<16x32xf32, #tpu.memory_space<vmem>>) attributes {dimension_semantics = [], scalar_prefetch = 0 : i64, scratch_operands = 1 : i64, tpu.core_type = #tpu.core_type<tc>} {
    %c0 = arith.constant 0 : index
    %c0_0 = arith.constant 0 : index
    %0 = vector.load %arg0[%c0, %c0_0] : memref<16x5xf32, #tpu.memory_space<vmem>>, vector<16x5xf32>
    %c0_1 = arith.constant 0 : index
    %c0_2 = arith.constant 0 : index
    %1 = vector.load %arg4[%c0_1, %c0_2] : memref<32x32xf32, #tpu.memory_space<vmem>>, vector<32x32xf32>
    %c0_3 = arith.constant 0 : index
    %c0_4 = arith.constant 0 : index
    %2 = vector.load %arg5[%c0_3, %c0_4] : memref<32x32xf32, #tpu.memory_space<vmem>>, vector<32x32xf32>
    %c0_5 = arith.constant 0 : index
    %c0_6 = arith.constant 0 : index
    %3 = vector.load %arg6[%c0_5, %c0_6] : memref<32x32xf32, #tpu.memory_space<vmem>>, vector<32x32xf32>
    %c0_7 = arith.constant 0 : index
    %c0_8 = arith.constant 0 : index
    %4 = vector.load %arg10[%c0_7, %c0_8] : memref<1x32xf32, #tpu.memory_space<vmem>>, vector<1x32xf32>
    %c0_9 = arith.constant 0 : index
    %c0_10 = arith.constant 0 : index
    %5 = vector.load %arg1[%c0_9, %c0_10] : memref<5x32xf32, #tpu.memory_space<vmem>>, vector<5x32xf32>
    %cst = arith.constant dense<0.000000e+00> : vector<16x32xf32>
    %6 = tpu.matmul %0, %5, %cst {dimension_numbers = #tpu.dot_dimension_numbers<[1], [0], [0], [1], [0, 0, 1, 1], [], []>} : vector<16x5xf32>, vector<5x32xf32>, vector<16x32xf32> -> vector<16x32xf32>
    %c0_11 = arith.constant 0 : index
    %c0_12 = arith.constant 0 : index
    %7 = vector.load %arg7[%c0_11, %c0_12] : memref<1x32xf32, #tpu.memory_space<vmem>>, vector<1x32xf32>
    %8 = vector.broadcast %7 : vector<1x32xf32> to vector<16x32xf32>
    %9 = arith.addf %6, %8 : vector<16x32xf32>
    %c0_13 = arith.constant 0 : index
    %c0_14 = arith.constant 0 : index
    %10 = vector.load %arg2[%c0_13, %c0_14] : memref<5x32xf32, #tpu.memory_space<vmem>>, vector<5x32xf32>
    %cst_15 = arith.constant dense<0.000000e+00> : vector<16x32xf32>
    %11 = tpu.matmul %0, %10, %cst_15 {dimension_numbers = #tpu.dot_dimension_numbers<[1], [0], [0], [1], [0, 0, 1, 1], [], []>} : vector<16x5xf32>, vector<5x32xf32>, vector<16x32xf32> -> vector<16x32xf32>
    %c0_16 = arith.constant 0 : index
    %c0_17 = arith.constant 0 : index
    %12 = vector.load %arg8[%c0_16, %c0_17] : memref<1x32xf32, #tpu.memory_space<vmem>>, vector<1x32xf32>
    %13 = vector.broadcast %12 : vector<1x32xf32> to vector<16x32xf32>
    %14 = arith.addf %11, %13 : vector<16x32xf32>
    %c0_18 = arith.constant 0 : index
    %c0_19 = arith.constant 0 : index
    %15 = vector.load %arg3[%c0_18, %c0_19] : memref<5x32xf32, #tpu.memory_space<vmem>>, vector<5x32xf32>
    %cst_20 = arith.constant dense<0.000000e+00> : vector<16x32xf32>
    %16 = tpu.matmul %0, %15, %cst_20 {dimension_numbers = #tpu.dot_dimension_numbers<[1], [0], [0], [1], [0, 0, 1, 1], [], []>} : vector<16x5xf32>, vector<5x32xf32>, vector<16x32xf32> -> vector<16x32xf32>
    %c0_21 = arith.constant 0 : index
    %c0_22 = arith.constant 0 : index
    %17 = vector.load %arg9[%c0_21, %c0_22] : memref<1x32xf32, #tpu.memory_space<vmem>>, vector<1x32xf32>
    %18 = vector.broadcast %17 : vector<1x32xf32> to vector<16x32xf32>
    %19 = arith.addf %16, %18 : vector<16x32xf32>
    %cst_23 = arith.constant 0.000000e+00 : f32
    %20 = vector.broadcast %cst_23 : f32 to vector<2x32xf32>
    %cst_24 = arith.constant dense<0.000000e+00> : vector<2x32xf32>
    %21 = tpu.matmul %20, %1, %cst_24 {dimension_numbers = #tpu.dot_dimension_numbers<[1], [0], [0], [1], [0, 0, 1, 1], [], []>} : vector<2x32xf32>, vector<32x32xf32>, vector<2x32xf32> -> vector<2x32xf32>
    %cst_25 = arith.constant dense<0.000000e+00> : vector<2x32xf32>
    %22 = tpu.matmul %20, %2, %cst_25 {dimension_numbers = #tpu.dot_dimension_numbers<[1], [0], [0], [1], [0, 0, 1, 1], [], []>} : vector<2x32xf32>, vector<32x32xf32>, vector<2x32xf32> -> vector<2x32xf32>
    %cst_26 = arith.constant dense<0.000000e+00> : vector<2x32xf32>
    %23 = tpu.matmul %20, %3, %cst_26 {dimension_numbers = #tpu.dot_dimension_numbers<[1], [0], [0], [1], [0, 0, 1, 1], [], []>} : vector<2x32xf32>, vector<32x32xf32>, vector<2x32xf32> -> vector<2x32xf32>
    %24 = vector.broadcast %4 : vector<1x32xf32> to vector<2x32xf32>
    %25 = arith.addf %23, %24 : vector<2x32xf32>
    %26 = vector.extract_strided_slice %9 {offsets = [0, 0], sizes = [2, 32], strides = [1, 1]} : vector<16x32xf32> to vector<2x32xf32>
    %27 = arith.addf %26, %21 : vector<2x32xf32>
    %28 = arith.negf %27 : vector<2x32xf32>
    %29 = math.exp %28 : vector<2x32xf32>
    %cst_27 = arith.constant 1.000000e+00 : f32
    %30 = vector.broadcast %cst_27 : f32 to vector<2x32xf32>
    %31 = arith.addf %30, %29 : vector<2x32xf32>
    %32 = arith.divf %30, %31 : vector<2x32xf32>
    %33 = vector.extract_strided_slice %14 {offsets = [0, 0], sizes = [2, 32], strides = [1, 1]} : vector<16x32xf32> to vector<2x32xf32>
    %34 = arith.addf %33, %22 : vector<2x32xf32>
    %35 = arith.negf %34 : vector<2x32xf32>
    %36 = math.exp %35 : vector<2x32xf32>
    %cst_28 = arith.constant 1.000000e+00 : f32
    %37 = vector.broadcast %cst_28 : f32 to vector<2x32xf32>
    %38 = arith.addf %37, %36 : vector<2x32xf32>
    %39 = arith.divf %37, %38 : vector<2x32xf32>
    %40 = vector.extract_strided_slice %19 {offsets = [0, 0], sizes = [2, 32], strides = [1, 1]} : vector<16x32xf32> to vector<2x32xf32>
    %41 = arith.mulf %32, %25 : vector<2x32xf32>
    %42 = arith.addf %40, %41 : vector<2x32xf32>
    %43 = math.tanh %42 : vector<2x32xf32>
    %cst_29 = arith.constant 1.000000e+00 : f32
    %44 = vector.broadcast %cst_29 : f32 to vector<2x32xf32>
    %45 = arith.subf %44, %39 : vector<2x32xf32>
    %46 = arith.mulf %45, %43 : vector<2x32xf32>
    %47 = arith.mulf %39, %20 : vector<2x32xf32>
    %48 = arith.addf %46, %47 : vector<2x32xf32>
    %c0_30 = arith.constant 0 : index
    %c0_31 = arith.constant 0 : index
    %49 = vector.load %arg25[%c0_30, %c0_31] : memref<16x32xf32, #tpu.memory_space<vmem>>, vector<2x32xf32>
    tpu.vector_store %arg25[%c0_30, %c0_31], %48 {strides = array<i32>} : memref<16x32xf32, #tpu.memory_space<vmem>>, vector<2x32xf32>,
    %cst_32 = arith.constant dense<0.000000e+00> : vector<2x32xf32>
    %50 = tpu.matmul %48, %1, %cst_32 {dimension_numbers = #tpu.dot_dimension_numbers<[1], [0], [0], [1], [0, 0, 1, 1], [], []>} : vector<2x32xf32>, vector<32x32xf32>, vector<2x32xf32> -> vector<2x32xf32>
    %cst_33 = arith.constant dense<0.000000e+00> : vector<2x32xf32>
    %51 = tpu.matmul %48, %2, %cst_33 {dimension_numbers = #tpu.dot_dimension_numbers<[1], [0], [0], [1], [0, 0, 1, 1], [], []>} : vector<2x32xf32>, vector<32x32xf32>, vector<2x32xf32> -> vector<2x32xf32>
    %cst_34 = arith.constant dense<0.000000e+00> : vector<2x32xf32>
    %52 = tpu.matmul %48, %3, %cst_34 {dimension_numbers = #tpu.dot_dimension_numbers<[1], [0], [0], [1], [0, 0, 1, 1], [], []>} : vector<2x32xf32>, vector<32x32xf32>, vector<2x32xf32> -> vector<2x32xf32>
    %53 = vector.broadcast %4 : vector<1x32xf32> to vector<2x32xf32>
    %54 = arith.addf %52, %53 : vector<2x32xf32>
    %55 = vector.extract_strided_slice %9 {offsets = [2, 0], sizes = [2, 32], strides = [1, 1]} : vector<16x32xf32> to vector<2x32xf32>
    %56 = arith.addf %55, %50 : vector<2x32xf32>
    %57 = arith.negf %56 : vector<2x32xf32>
    %58 = math.exp %57 : vector<2x32xf32>
    %cst_35 = arith.constant 1.000000e+00 : f32
    %59 = vector.broadcast %cst_35 : f32 to vector<2x32xf32>
    %60 = arith.addf %59, %58 : vector<2x32xf32>
    %61 = arith.divf %59, %60 : vector<2x32xf32>
    %62 = vector.extract_strided_slice %14 {offsets = [2, 0], sizes = [2, 32], strides = [1, 1]} : vector<16x32xf32> to vector<2x32xf32>
    %63 = arith.addf %62, %51 : vector<2x32xf32>
    %64 = arith.negf %63 : vector<2x32xf32>
    %65 = math.exp %64 : vector<2x32xf32>
    %cst_36 = arith.constant 1.000000e+00 : f32
    %66 = vector.broadcast %cst_36 : f32 to vector<2x32xf32>
    %67 = arith.addf %66, %65 : vector<2x32xf32>
    %68 = arith.divf %66, %67 : vector<2x32xf32>
    %69 = vector.extract_strided_slice %19 {offsets = [2, 0], sizes = [2, 32], strides = [1, 1]} : vector<16x32xf32> to vector<2x32xf32>
    %70 = arith.mulf %61, %54 : vector<2x32xf32>
    %71 = arith.addf %69, %70 : vector<2x32xf32>
    %72 = math.tanh %71 : vector<2x32xf32>
    %cst_37 = arith.constant 1.000000e+00 : f32
    %73 = vector.broadcast %cst_37 : f32 to vector<2x32xf32>
    %74 = arith.subf %73, %68 : vector<2x32xf32>
    %75 = arith.mulf %74, %72 : vector<2x32xf32>
    %76 = arith.mulf %68, %48 : vector<2x32xf32>
    %77 = arith.addf %75, %76 : vector<2x32xf32>
    %c2 = arith.constant 2 : index
    %c0_38 = arith.constant 0 : index
    %78 = vector.load %arg25[%c2, %c0_38] : memref<16x32xf32, #tpu.memory_space<vmem>>, vector<2x32xf32>
    tpu.vector_store %arg25[%c2, %c0_38], %77 {strides = array<i32>} : memref<16x32xf32, #tpu.memory_space<vmem>>, vector<2x32xf32>,
    %cst_39 = arith.constant dense<0.000000e+00> : vector<2x32xf32>
    %79 = tpu.matmul %77, %1, %cst_39 {dimension_numbers = #tpu.dot_dimension_numbers<[1], [0], [0], [1], [0, 0, 1, 1], [], []>} : vector<2x32xf32>, vector<32x32xf32>, vector<2x32xf32> -> vector<2x32xf32>
    %cst_40 = arith.constant dense<0.000000e+00> : vector<2x32xf32>
    %80 = tpu.matmul %77, %2, %cst_40 {dimension_numbers = #tpu.dot_dimension_numbers<[1], [0], [0], [1], [0, 0, 1, 1], [], []>} : vector<2x32xf32>, vector<32x32xf32>, vector<2x32xf32> -> vector<2x32xf32>
    %cst_41 = arith.constant dense<0.000000e+00> : vector<2x32xf32>
    %81 = tpu.matmul %77, %3, %cst_41 {dimension_numbers = #tpu.dot_dimension_numbers<[1], [0], [0], [1], [0, 0, 1, 1], [], []>} : vector<2x32xf32>, vector<32x32xf32>, vector<2x32xf32> -> vector<2x32xf32>
    %82 = vector.broadcast %4 : vector<1x32xf32> to vector<2x32xf32>
    %83 = arith.addf %81, %82 : vector<2x32xf32>
    %84 = vector.extract_strided_slice %9 {offsets = [4, 0], sizes = [2, 32], strides = [1, 1]} : vector<16x32xf32> to vector<2x32xf32>
    %85 = arith.addf %84, %79 : vector<2x32xf32>
    %86 = arith.negf %85 : vector<2x32xf32>
    %87 = math.exp %86 : vector<2x32xf32>
    %cst_42 = arith.constant 1.000000e+00 : f32
    %88 = vector.broadcast %cst_42 : f32 to vector<2x32xf32>
    %89 = arith.addf %88, %87 : vector<2x32xf32>
    %90 = arith.divf %88, %89 : vector<2x32xf32>
    %91 = vector.extract_strided_slice %14 {offsets = [4, 0], sizes = [2, 32], strides = [1, 1]} : vector<16x32xf32> to vector<2x32xf32>
    %92 = arith.addf %91, %80 : vector<2x32xf32>
    %93 = arith.negf %92 : vector<2x32xf32>
    %94 = math.exp %93 : vector<2x32xf32>
    %cst_43 = arith.constant 1.000000e+00 : f32
    %95 = vector.broadcast %cst_43 : f32 to vector<2x32xf32>
    %96 = arith.addf %95, %94 : vector<2x32xf32>
    %97 = arith.divf %95, %96 : vector<2x32xf32>
    %98 = vector.extract_strided_slice %19 {offsets = [4, 0], sizes = [2, 32], strides = [1, 1]} : vector<16x32xf32> to vector<2x32xf32>
    %99 = arith.mulf %90, %83 : vector<2x32xf32>
    %100 = arith.addf %98, %99 : vector<2x32xf32>
    %101 = math.tanh %100 : vector<2x32xf32>
    %cst_44 = arith.constant 1.000000e+00 : f32
    %102 = vector.broadcast %cst_44 : f32 to vector<2x32xf32>
    %103 = arith.subf %102, %97 : vector<2x32xf32>
    %104 = arith.mulf %103, %101 : vector<2x32xf32>
    %105 = arith.mulf %97, %77 : vector<2x32xf32>
    %106 = arith.addf %104, %105 : vector<2x32xf32>
    %c4 = arith.constant 4 : index
    %c0_45 = arith.constant 0 : index
    %107 = vector.load %arg25[%c4, %c0_45] : memref<16x32xf32, #tpu.memory_space<vmem>>, vector<2x32xf32>
    tpu.vector_store %arg25[%c4, %c0_45], %106 {strides = array<i32>} : memref<16x32xf32, #tpu.memory_space<vmem>>, vector<2x32xf32>,
    %cst_46 = arith.constant dense<0.000000e+00> : vector<2x32xf32>
    %108 = tpu.matmul %106, %1, %cst_46 {dimension_numbers = #tpu.dot_dimension_numbers<[1], [0], [0], [1], [0, 0, 1, 1], [], []>} : vector<2x32xf32>, vector<32x32xf32>, vector<2x32xf32> -> vector<2x32xf32>
    %cst_47 = arith.constant dense<0.000000e+00> : vector<2x32xf32>
    %109 = tpu.matmul %106, %2, %cst_47 {dimension_numbers = #tpu.dot_dimension_numbers<[1], [0], [0], [1], [0, 0, 1, 1], [], []>} : vector<2x32xf32>, vector<32x32xf32>, vector<2x32xf32> -> vector<2x32xf32>
    %cst_48 = arith.constant dense<0.000000e+00> : vector<2x32xf32>
    %110 = tpu.matmul %106, %3, %cst_48 {dimension_numbers = #tpu.dot_dimension_numbers<[1], [0], [0], [1], [0, 0, 1, 1], [], []>} : vector<2x32xf32>, vector<32x32xf32>, vector<2x32xf32> -> vector<2x32xf32>
    %111 = vector.broadcast %4 : vector<1x32xf32> to vector<2x32xf32>
    %112 = arith.addf %110, %111 : vector<2x32xf32>
    %113 = vector.extract_strided_slice %9 {offsets = [6, 0], sizes = [2, 32], strides = [1, 1]} : vector<16x32xf32> to vector<2x32xf32>
    %114 = arith.addf %113, %108 : vector<2x32xf32>
    %115 = arith.negf %114 : vector<2x32xf32>
    %116 = math.exp %115 : vector<2x32xf32>
    %cst_49 = arith.constant 1.000000e+00 : f32
    %117 = vector.broadcast %cst_49 : f32 to vector<2x32xf32>
    %118 = arith.addf %117, %116 : vector<2x32xf32>
    %119 = arith.divf %117, %118 : vector<2x32xf32>
    %120 = vector.extract_strided_slice %14 {offsets = [6, 0], sizes = [2, 32], strides = [1, 1]} : vector<16x32xf32> to vector<2x32xf32>
    %121 = arith.addf %120, %109 : vector<2x32xf32>
    %122 = arith.negf %121 : vector<2x32xf32>
    %123 = math.exp %122 : vector<2x32xf32>
    %cst_50 = arith.constant 1.000000e+00 : f32
    %124 = vector.broadcast %cst_50 : f32 to vector<2x32xf32>
    %125 = arith.addf %124, %123 : vector<2x32xf32>
    %126 = arith.divf %124, %125 : vector<2x32xf32>
    %127 = vector.extract_strided_slice %19 {offsets = [6, 0], sizes = [2, 32], strides = [1, 1]} : vector<16x32xf32> to vector<2x32xf32>
    %128 = arith.mulf %119, %112 : vector<2x32xf32>
    %129 = arith.addf %127, %128 : vector<2x32xf32>
    %130 = math.tanh %129 : vector<2x32xf32>
    %cst_51 = arith.constant 1.000000e+00 : f32
    %131 = vector.broadcast %cst_51 : f32 to vector<2x32xf32>
    %132 = arith.subf %131, %126 : vector<2x32xf32>
    %133 = arith.mulf %132, %130 : vector<2x32xf32>
    %134 = arith.mulf %126, %106 : vector<2x32xf32>
    %135 = arith.addf %133, %134 : vector<2x32xf32>
    %c6 = arith.constant 6 : index
    %c0_52 = arith.constant 0 : index
    %136 = vector.load %arg25[%c6, %c0_52] : memref<16x32xf32, #tpu.memory_space<vmem>>, vector<2x32xf32>
    tpu.vector_store %arg25[%c6, %c0_52], %135 {strides = array<i32>} : memref<16x32xf32, #tpu.memory_space<vmem>>, vector<2x32xf32>,
    %cst_53 = arith.constant dense<0.000000e+00> : vector<2x32xf32>
    %137 = tpu.matmul %135, %1, %cst_53 {dimension_numbers = #tpu.dot_dimension_numbers<[1], [0], [0], [1], [0, 0, 1, 1], [], []>} : vector<2x32xf32>, vector<32x32xf32>, vector<2x32xf32> -> vector<2x32xf32>
    %cst_54 = arith.constant dense<0.000000e+00> : vector<2x32xf32>
    %138 = tpu.matmul %135, %2, %cst_54 {dimension_numbers = #tpu.dot_dimension_numbers<[1], [0], [0], [1], [0, 0, 1, 1], [], []>} : vector<2x32xf32>, vector<32x32xf32>, vector<2x32xf32> -> vector<2x32xf32>
    %cst_55 = arith.constant dense<0.000000e+00> : vector<2x32xf32>
    %139 = tpu.matmul %135, %3, %cst_55 {dimension_numbers = #tpu.dot_dimension_numbers<[1], [0], [0], [1], [0, 0, 1, 1], [], []>} : vector<2x32xf32>, vector<32x32xf32>, vector<2x32xf32> -> vector<2x32xf32>
    %140 = vector.broadcast %4 : vector<1x32xf32> to vector<2x32xf32>
    %141 = arith.addf %139, %140 : vector<2x32xf32>
    %142 = vector.extract_strided_slice %9 {offsets = [8, 0], sizes = [2, 32], strides = [1, 1]} : vector<16x32xf32> to vector<2x32xf32>
    %143 = arith.addf %142, %137 : vector<2x32xf32>
    %144 = arith.negf %143 : vector<2x32xf32>
    %145 = math.exp %144 : vector<2x32xf32>
    %cst_56 = arith.constant 1.000000e+00 : f32
    %146 = vector.broadcast %cst_56 : f32 to vector<2x32xf32>
    %147 = arith.addf %146, %145 : vector<2x32xf32>
    %148 = arith.divf %146, %147 : vector<2x32xf32>
    %149 = vector.extract_strided_slice %14 {offsets = [8, 0], sizes = [2, 32], strides = [1, 1]} : vector<16x32xf32> to vector<2x32xf32>
    %150 = arith.addf %149, %138 : vector<2x32xf32>
    %151 = arith.negf %150 : vector<2x32xf32>
    %152 = math.exp %151 : vector<2x32xf32>
    %cst_57 = arith.constant 1.000000e+00 : f32
    %153 = vector.broadcast %cst_57 : f32 to vector<2x32xf32>
    %154 = arith.addf %153, %152 : vector<2x32xf32>
    %155 = arith.divf %153, %154 : vector<2x32xf32>
    %156 = vector.extract_strided_slice %19 {offsets = [8, 0], sizes = [2, 32], strides = [1, 1]} : vector<16x32xf32> to vector<2x32xf32>
    %157 = arith.mulf %148, %141 : vector<2x32xf32>
    %158 = arith.addf %156, %157 : vector<2x32xf32>
    %159 = math.tanh %158 : vector<2x32xf32>
    %cst_58 = arith.constant 1.000000e+00 : f32
    %160 = vector.broadcast %cst_58 : f32 to vector<2x32xf32>
    %161 = arith.subf %160, %155 : vector<2x32xf32>
    %162 = arith.mulf %161, %159 : vector<2x32xf32>
    %163 = arith.mulf %155, %135 : vector<2x32xf32>
    %164 = arith.addf %162, %163 : vector<2x32xf32>
    %c8 = arith.constant 8 : index
    %c0_59 = arith.constant 0 : index
    %165 = vector.load %arg25[%c8, %c0_59] : memref<16x32xf32, #tpu.memory_space<vmem>>, vector<2x32xf32>
    tpu.vector_store %arg25[%c8, %c0_59], %164 {strides = array<i32>} : memref<16x32xf32, #tpu.memory_space<vmem>>, vector<2x32xf32>,
    %cst_60 = arith.constant dense<0.000000e+00> : vector<2x32xf32>
    %166 = tpu.matmul %164, %1, %cst_60 {dimension_numbers = #tpu.dot_dimension_numbers<[1], [0], [0], [1], [0, 0, 1, 1], [], []>} : vector<2x32xf32>, vector<32x32xf32>, vector<2x32xf32> -> vector<2x32xf32>
    %cst_61 = arith.constant dense<0.000000e+00> : vector<2x32xf32>
    %167 = tpu.matmul %164, %2, %cst_61 {dimension_numbers = #tpu.dot_dimension_numbers<[1], [0], [0], [1], [0, 0, 1, 1], [], []>} : vector<2x32xf32>, vector<32x32xf32>, vector<2x32xf32> -> vector<2x32xf32>
    %cst_62 = arith.constant dense<0.000000e+00> : vector<2x32xf32>
    %168 = tpu.matmul %164, %3, %cst_62 {dimension_numbers = #tpu.dot_dimension_numbers<[1], [0], [0], [1], [0, 0, 1, 1], [], []>} : vector<2x32xf32>, vector<32x32xf32>, vector<2x32xf32> -> vector<2x32xf32>
    %169 = vector.broadcast %4 : vector<1x32xf32> to vector<2x32xf32>
    %170 = arith.addf %168, %169 : vector<2x32xf32>
    %171 = vector.extract_strided_slice %9 {offsets = [10, 0], sizes = [2, 32], strides = [1, 1]} : vector<16x32xf32> to vector<2x32xf32>
    %172 = arith.addf %171, %166 : vector<2x32xf32>
    %173 = arith.negf %172 : vector<2x32xf32>
    %174 = math.exp %173 : vector<2x32xf32>
    %cst_63 = arith.constant 1.000000e+00 : f32
    %175 = vector.broadcast %cst_63 : f32 to vector<2x32xf32>
    %176 = arith.addf %175, %174 : vector<2x32xf32>
    %177 = arith.divf %175, %176 : vector<2x32xf32>
    %178 = vector.extract_strided_slice %14 {offsets = [10, 0], sizes = [2, 32], strides = [1, 1]} : vector<16x32xf32> to vector<2x32xf32>
    %179 = arith.addf %178, %167 : vector<2x32xf32>
    %180 = arith.negf %179 : vector<2x32xf32>
    %181 = math.exp %180 : vector<2x32xf32>
    %cst_64 = arith.constant 1.000000e+00 : f32
    %182 = vector.broadcast %cst_64 : f32 to vector<2x32xf32>
    %183 = arith.addf %182, %181 : vector<2x32xf32>
    %184 = arith.divf %182, %183 : vector<2x32xf32>
    %185 = vector.extract_strided_slice %19 {offsets = [10, 0], sizes = [2, 32], strides = [1, 1]} : vector<16x32xf32> to vector<2x32xf32>
    %186 = arith.mulf %177, %170 : vector<2x32xf32>
    %187 = arith.addf %185, %186 : vector<2x32xf32>
    %188 = math.tanh %187 : vector<2x32xf32>
    %cst_65 = arith.constant 1.000000e+00 : f32
    %189 = vector.broadcast %cst_65 : f32 to vector<2x32xf32>
    %190 = arith.subf %189, %184 : vector<2x32xf32>
    %191 = arith.mulf %190, %188 : vector<2x32xf32>
    %192 = arith.mulf %184, %164 : vector<2x32xf32>
    %193 = arith.addf %191, %192 : vector<2x32xf32>
    %c10 = arith.constant 10 : index
    %c0_66 = arith.constant 0 : index
    %194 = vector.load %arg25[%c10, %c0_66] : memref<16x32xf32, #tpu.memory_space<vmem>>, vector<2x32xf32>
    tpu.vector_store %arg25[%c10, %c0_66], %193 {strides = array<i32>} : memref<16x32xf32, #tpu.memory_space<vmem>>, vector<2x32xf32>,
    %cst_67 = arith.constant dense<0.000000e+00> : vector<2x32xf32>
    %195 = tpu.matmul %193, %1, %cst_67 {dimension_numbers = #tpu.dot_dimension_numbers<[1], [0], [0], [1], [0, 0, 1, 1], [], []>} : vector<2x32xf32>, vector<32x32xf32>, vector<2x32xf32> -> vector<2x32xf32>
    %cst_68 = arith.constant dense<0.000000e+00> : vector<2x32xf32>
    %196 = tpu.matmul %193, %2, %cst_68 {dimension_numbers = #tpu.dot_dimension_numbers<[1], [0], [0], [1], [0, 0, 1, 1], [], []>} : vector<2x32xf32>, vector<32x32xf32>, vector<2x32xf32> -> vector<2x32xf32>
    %cst_69 = arith.constant dense<0.000000e+00> : vector<2x32xf32>
    %197 = tpu.matmul %193, %3, %cst_69 {dimension_numbers = #tpu.dot_dimension_numbers<[1], [0], [0], [1], [0, 0, 1, 1], [], []>} : vector<2x32xf32>, vector<32x32xf32>, vector<2x32xf32> -> vector<2x32xf32>
    %198 = vector.broadcast %4 : vector<1x32xf32> to vector<2x32xf32>
    %199 = arith.addf %197, %198 : vector<2x32xf32>
    %200 = vector.extract_strided_slice %9 {offsets = [12, 0], sizes = [2, 32], strides = [1, 1]} : vector<16x32xf32> to vector<2x32xf32>
    %201 = arith.addf %200, %195 : vector<2x32xf32>
    %202 = arith.negf %201 : vector<2x32xf32>
    %203 = math.exp %202 : vector<2x32xf32>
    %cst_70 = arith.constant 1.000000e+00 : f32
    %204 = vector.broadcast %cst_70 : f32 to vector<2x32xf32>
    %205 = arith.addf %204, %203 : vector<2x32xf32>
    %206 = arith.divf %204, %205 : vector<2x32xf32>
    %207 = vector.extract_strided_slice %14 {offsets = [12, 0], sizes = [2, 32], strides = [1, 1]} : vector<16x32xf32> to vector<2x32xf32>
    %208 = arith.addf %207, %196 : vector<2x32xf32>
    %209 = arith.negf %208 : vector<2x32xf32>
    %210 = math.exp %209 : vector<2x32xf32>
    %cst_71 = arith.constant 1.000000e+00 : f32
    %211 = vector.broadcast %cst_71 : f32 to vector<2x32xf32>
    %212 = arith.addf %211, %210 : vector<2x32xf32>
    %213 = arith.divf %211, %212 : vector<2x32xf32>
    %214 = vector.extract_strided_slice %19 {offsets = [12, 0], sizes = [2, 32], strides = [1, 1]} : vector<16x32xf32> to vector<2x32xf32>
    %215 = arith.mulf %206, %199 : vector<2x32xf32>
    %216 = arith.addf %214, %215 : vector<2x32xf32>
    %217 = math.tanh %216 : vector<2x32xf32>
    %cst_72 = arith.constant 1.000000e+00 : f32
    %218 = vector.broadcast %cst_72 : f32 to vector<2x32xf32>
    %219 = arith.subf %218, %213 : vector<2x32xf32>
    %220 = arith.mulf %219, %217 : vector<2x32xf32>
    %221 = arith.mulf %213, %193 : vector<2x32xf32>
    %222 = arith.addf %220, %221 : vector<2x32xf32>
    %c12 = arith.constant 12 : index
    %c0_73 = arith.constant 0 : index
    %223 = vector.load %arg25[%c12, %c0_73] : memref<16x32xf32, #tpu.memory_space<vmem>>, vector<2x32xf32>
    tpu.vector_store %arg25[%c12, %c0_73], %222 {strides = array<i32>} : memref<16x32xf32, #tpu.memory_space<vmem>>, vector<2x32xf32>,
    %cst_74 = arith.constant dense<0.000000e+00> : vector<2x32xf32>
    %224 = tpu.matmul %222, %1, %cst_74 {dimension_numbers = #tpu.dot_dimension_numbers<[1], [0], [0], [1], [0, 0, 1, 1], [], []>} : vector<2x32xf32>, vector<32x32xf32>, vector<2x32xf32> -> vector<2x32xf32>
    %cst_75 = arith.constant dense<0.000000e+00> : vector<2x32xf32>
    %225 = tpu.matmul %222, %2, %cst_75 {dimension_numbers = #tpu.dot_dimension_numbers<[1], [0], [0], [1], [0, 0, 1, 1], [], []>} : vector<2x32xf32>, vector<32x32xf32>, vector<2x32xf32> -> vector<2x32xf32>
    %cst_76 = arith.constant dense<0.000000e+00> : vector<2x32xf32>
    %226 = tpu.matmul %222, %3, %cst_76 {dimension_numbers = #tpu.dot_dimension_numbers<[1], [0], [0], [1], [0, 0, 1, 1], [], []>} : vector<2x32xf32>, vector<32x32xf32>, vector<2x32xf32> -> vector<2x32xf32>
    %227 = vector.broadcast %4 : vector<1x32xf32> to vector<2x32xf32>
    %228 = arith.addf %226, %227 : vector<2x32xf32>
    %229 = vector.extract_strided_slice %9 {offsets = [14, 0], sizes = [2, 32], strides = [1, 1]} : vector<16x32xf32> to vector<2x32xf32>
    %230 = arith.addf %229, %224 : vector<2x32xf32>
    %231 = arith.negf %230 : vector<2x32xf32>
    %232 = math.exp %231 : vector<2x32xf32>
    %cst_77 = arith.constant 1.000000e+00 : f32
    %233 = vector.broadcast %cst_77 : f32 to vector<2x32xf32>
    %234 = arith.addf %233, %232 : vector<2x32xf32>
    %235 = arith.divf %233, %234 : vector<2x32xf32>
    %236 = vector.extract_strided_slice %14 {offsets = [14, 0], sizes = [2, 32], strides = [1, 1]} : vector<16x32xf32> to vector<2x32xf32>
    %237 = arith.addf %236, %225 : vector<2x32xf32>
    %238 = arith.negf %237 : vector<2x32xf32>
    %239 = math.exp %238 : vector<2x32xf32>
    %cst_78 = arith.constant 1.000000e+00 : f32
    %240 = vector.broadcast %cst_78 : f32 to vector<2x32xf32>
    %241 = arith.addf %240, %239 : vector<2x32xf32>
    %242 = arith.divf %240, %241 : vector<2x32xf32>
    %243 = vector.extract_strided_slice %19 {offsets = [14, 0], sizes = [2, 32], strides = [1, 1]} : vector<16x32xf32> to vector<2x32xf32>
    %244 = arith.mulf %235, %228 : vector<2x32xf32>
    %245 = arith.addf %243, %244 : vector<2x32xf32>
    %246 = math.tanh %245 : vector<2x32xf32>
    %cst_79 = arith.constant 1.000000e+00 : f32
    %247 = vector.broadcast %cst_79 : f32 to vector<2x32xf32>
    %248 = arith.subf %247, %242 : vector<2x32xf32>
    %249 = arith.mulf %248, %246 : vector<2x32xf32>
    %250 = arith.mulf %242, %222 : vector<2x32xf32>
    %251 = arith.addf %249, %250 : vector<2x32xf32>
    %c14 = arith.constant 14 : index
    %c0_80 = arith.constant 0 : index
    %252 = vector.load %arg25[%c14, %c0_80] : memref<16x32xf32, #tpu.memory_space<vmem>>, vector<2x32xf32>
    tpu.vector_store %arg25[%c14, %c0_80], %251 {strides = array<i32>} : memref<16x32xf32, #tpu.memory_space<vmem>>, vector<2x32xf32>,
    %c0_81 = arith.constant 0 : index
    %c0_82 = arith.constant 0 : index
    %253 = vector.load %arg25[%c0_81, %c0_82] : memref<16x32xf32, #tpu.memory_space<vmem>>, vector<16x32xf32>
    %c0_83 = arith.constant 0 : index
    %c0_84 = arith.constant 0 : index
    %254 = vector.load %arg14[%c0_83, %c0_84] : memref<32x32xf32, #tpu.memory_space<vmem>>, vector<32x32xf32>
    %c0_85 = arith.constant 0 : index
    %c0_86 = arith.constant 0 : index
    %255 = vector.load %arg15[%c0_85, %c0_86] : memref<32x32xf32, #tpu.memory_space<vmem>>, vector<32x32xf32>
    %c0_87 = arith.constant 0 : index
    %c0_88 = arith.constant 0 : index
    %256 = vector.load %arg16[%c0_87, %c0_88] : memref<32x32xf32, #tpu.memory_space<vmem>>, vector<32x32xf32>
    %c0_89 = arith.constant 0 : index
    %c0_90 = arith.constant 0 : index
    %257 = vector.load %arg20[%c0_89, %c0_90] : memref<1x32xf32, #tpu.memory_space<vmem>>, vector<1x32xf32>
    %c0_91 = arith.constant 0 : index
    %c0_92 = arith.constant 0 : index
    %258 = vector.load %arg11[%c0_91, %c0_92] : memref<32x32xf32, #tpu.memory_space<vmem>>, vector<32x32xf32>
    %cst_93 = arith.constant dense<0.000000e+00> : vector<16x32xf32>
    %259 = tpu.matmul %253, %258, %cst_93 {dimension_numbers = #tpu.dot_dimension_numbers<[1], [0], [0], [1], [0, 0, 1, 1], [], []>} : vector<16x32xf32>, vector<32x32xf32>, vector<16x32xf32> -> vector<16x32xf32>
    %c0_94 = arith.constant 0 : index
    %c0_95 = arith.constant 0 : index
    %260 = vector.load %arg17[%c0_94, %c0_95] : memref<1x32xf32, #tpu.memory_space<vmem>>, vector<1x32xf32>
    %261 = vector.broadcast %260 : vector<1x32xf32> to vector<16x32xf32>
    %262 = arith.addf %259, %261 : vector<16x32xf32>
    %c0_96 = arith.constant 0 : index
    %c0_97 = arith.constant 0 : index
    %263 = vector.load %arg12[%c0_96, %c0_97] : memref<32x32xf32, #tpu.memory_space<vmem>>, vector<32x32xf32>
    %cst_98 = arith.constant dense<0.000000e+00> : vector<16x32xf32>
    %264 = tpu.matmul %253, %263, %cst_98 {dimension_numbers = #tpu.dot_dimension_numbers<[1], [0], [0], [1], [0, 0, 1, 1], [], []>} : vector<16x32xf32>, vector<32x32xf32>, vector<16x32xf32> -> vector<16x32xf32>
    %c0_99 = arith.constant 0 : index
    %c0_100 = arith.constant 0 : index
    %265 = vector.load %arg18[%c0_99, %c0_100] : memref<1x32xf32, #tpu.memory_space<vmem>>, vector<1x32xf32>
    %266 = vector.broadcast %265 : vector<1x32xf32> to vector<16x32xf32>
    %267 = arith.addf %264, %266 : vector<16x32xf32>
    %c0_101 = arith.constant 0 : index
    %c0_102 = arith.constant 0 : index
    %268 = vector.load %arg13[%c0_101, %c0_102] : memref<32x32xf32, #tpu.memory_space<vmem>>, vector<32x32xf32>
    %cst_103 = arith.constant dense<0.000000e+00> : vector<16x32xf32>
    %269 = tpu.matmul %253, %268, %cst_103 {dimension_numbers = #tpu.dot_dimension_numbers<[1], [0], [0], [1], [0, 0, 1, 1], [], []>} : vector<16x32xf32>, vector<32x32xf32>, vector<16x32xf32> -> vector<16x32xf32>
    %c0_104 = arith.constant 0 : index
    %c0_105 = arith.constant 0 : index
    %270 = vector.load %arg19[%c0_104, %c0_105] : memref<1x32xf32, #tpu.memory_space<vmem>>, vector<1x32xf32>
    %271 = vector.broadcast %270 : vector<1x32xf32> to vector<16x32xf32>
    %272 = arith.addf %269, %271 : vector<16x32xf32>
    %cst_106 = arith.constant 0.000000e+00 : f32
    %273 = vector.broadcast %cst_106 : f32 to vector<2x32xf32>
    %cst_107 = arith.constant dense<0.000000e+00> : vector<2x32xf32>
    %274 = tpu.matmul %273, %254, %cst_107 {dimension_numbers = #tpu.dot_dimension_numbers<[1], [0], [0], [1], [0, 0, 1, 1], [], []>} : vector<2x32xf32>, vector<32x32xf32>, vector<2x32xf32> -> vector<2x32xf32>
    %cst_108 = arith.constant dense<0.000000e+00> : vector<2x32xf32>
    %275 = tpu.matmul %273, %255, %cst_108 {dimension_numbers = #tpu.dot_dimension_numbers<[1], [0], [0], [1], [0, 0, 1, 1], [], []>} : vector<2x32xf32>, vector<32x32xf32>, vector<2x32xf32> -> vector<2x32xf32>
    %cst_109 = arith.constant dense<0.000000e+00> : vector<2x32xf32>
    %276 = tpu.matmul %273, %256, %cst_109 {dimension_numbers = #tpu.dot_dimension_numbers<[1], [0], [0], [1], [0, 0, 1, 1], [], []>} : vector<2x32xf32>, vector<32x32xf32>, vector<2x32xf32> -> vector<2x32xf32>
    %277 = vector.broadcast %257 : vector<1x32xf32> to vector<2x32xf32>
    %278 = arith.addf %276, %277 : vector<2x32xf32>
    %279 = vector.extract_strided_slice %262 {offsets = [0, 0], sizes = [2, 32], strides = [1, 1]} : vector<16x32xf32> to vector<2x32xf32>
    %280 = arith.addf %279, %274 : vector<2x32xf32>
    %281 = arith.negf %280 : vector<2x32xf32>
    %282 = math.exp %281 : vector<2x32xf32>
    %cst_110 = arith.constant 1.000000e+00 : f32
    %283 = vector.broadcast %cst_110 : f32 to vector<2x32xf32>
    %284 = arith.addf %283, %282 : vector<2x32xf32>
    %285 = arith.divf %283, %284 : vector<2x32xf32>
    %286 = vector.extract_strided_slice %267 {offsets = [0, 0], sizes = [2, 32], strides = [1, 1]} : vector<16x32xf32> to vector<2x32xf32>
    %287 = arith.addf %286, %275 : vector<2x32xf32>
    %288 = arith.negf %287 : vector<2x32xf32>
    %289 = math.exp %288 : vector<2x32xf32>
    %cst_111 = arith.constant 1.000000e+00 : f32
    %290 = vector.broadcast %cst_111 : f32 to vector<2x32xf32>
    %291 = arith.addf %290, %289 : vector<2x32xf32>
    %292 = arith.divf %290, %291 : vector<2x32xf32>
    %293 = vector.extract_strided_slice %272 {offsets = [0, 0], sizes = [2, 32], strides = [1, 1]} : vector<16x32xf32> to vector<2x32xf32>
    %294 = arith.mulf %285, %278 : vector<2x32xf32>
    %295 = arith.addf %293, %294 : vector<2x32xf32>
    %296 = math.tanh %295 : vector<2x32xf32>
    %cst_112 = arith.constant 1.000000e+00 : f32
    %297 = vector.broadcast %cst_112 : f32 to vector<2x32xf32>
    %298 = arith.subf %297, %292 : vector<2x32xf32>
    %299 = arith.mulf %298, %296 : vector<2x32xf32>
    %300 = arith.mulf %292, %273 : vector<2x32xf32>
    %301 = arith.addf %299, %300 : vector<2x32xf32>
    %cst_113 = arith.constant dense<0.000000e+00> : vector<2x32xf32>
    %302 = tpu.matmul %301, %254, %cst_113 {dimension_numbers = #tpu.dot_dimension_numbers<[1], [0], [0], [1], [0, 0, 1, 1], [], []>} : vector<2x32xf32>, vector<32x32xf32>, vector<2x32xf32> -> vector<2x32xf32>
    %cst_114 = arith.constant dense<0.000000e+00> : vector<2x32xf32>
    %303 = tpu.matmul %301, %255, %cst_114 {dimension_numbers = #tpu.dot_dimension_numbers<[1], [0], [0], [1], [0, 0, 1, 1], [], []>} : vector<2x32xf32>, vector<32x32xf32>, vector<2x32xf32> -> vector<2x32xf32>
    %cst_115 = arith.constant dense<0.000000e+00> : vector<2x32xf32>
    %304 = tpu.matmul %301, %256, %cst_115 {dimension_numbers = #tpu.dot_dimension_numbers<[1], [0], [0], [1], [0, 0, 1, 1], [], []>} : vector<2x32xf32>, vector<32x32xf32>, vector<2x32xf32> -> vector<2x32xf32>
    %305 = vector.broadcast %257 : vector<1x32xf32> to vector<2x32xf32>
    %306 = arith.addf %304, %305 : vector<2x32xf32>
    %307 = vector.extract_strided_slice %262 {offsets = [2, 0], sizes = [2, 32], strides = [1, 1]} : vector<16x32xf32> to vector<2x32xf32>
    %308 = arith.addf %307, %302 : vector<2x32xf32>
    %309 = arith.negf %308 : vector<2x32xf32>
    %310 = math.exp %309 : vector<2x32xf32>
    %cst_116 = arith.constant 1.000000e+00 : f32
    %311 = vector.broadcast %cst_116 : f32 to vector<2x32xf32>
    %312 = arith.addf %311, %310 : vector<2x32xf32>
    %313 = arith.divf %311, %312 : vector<2x32xf32>
    %314 = vector.extract_strided_slice %267 {offsets = [2, 0], sizes = [2, 32], strides = [1, 1]} : vector<16x32xf32> to vector<2x32xf32>
    %315 = arith.addf %314, %303 : vector<2x32xf32>
    %316 = arith.negf %315 : vector<2x32xf32>
    %317 = math.exp %316 : vector<2x32xf32>
    %cst_117 = arith.constant 1.000000e+00 : f32
    %318 = vector.broadcast %cst_117 : f32 to vector<2x32xf32>
    %319 = arith.addf %318, %317 : vector<2x32xf32>
    %320 = arith.divf %318, %319 : vector<2x32xf32>
    %321 = vector.extract_strided_slice %272 {offsets = [2, 0], sizes = [2, 32], strides = [1, 1]} : vector<16x32xf32> to vector<2x32xf32>
    %322 = arith.mulf %313, %306 : vector<2x32xf32>
    %323 = arith.addf %321, %322 : vector<2x32xf32>
    %324 = math.tanh %323 : vector<2x32xf32>
    %cst_118 = arith.constant 1.000000e+00 : f32
    %325 = vector.broadcast %cst_118 : f32 to vector<2x32xf32>
    %326 = arith.subf %325, %320 : vector<2x32xf32>
    %327 = arith.mulf %326, %324 : vector<2x32xf32>
    %328 = arith.mulf %320, %301 : vector<2x32xf32>
    %329 = arith.addf %327, %328 : vector<2x32xf32>
    %cst_119 = arith.constant dense<0.000000e+00> : vector<2x32xf32>
    %330 = tpu.matmul %329, %254, %cst_119 {dimension_numbers = #tpu.dot_dimension_numbers<[1], [0], [0], [1], [0, 0, 1, 1], [], []>} : vector<2x32xf32>, vector<32x32xf32>, vector<2x32xf32> -> vector<2x32xf32>
    %cst_120 = arith.constant dense<0.000000e+00> : vector<2x32xf32>
    %331 = tpu.matmul %329, %255, %cst_120 {dimension_numbers = #tpu.dot_dimension_numbers<[1], [0], [0], [1], [0, 0, 1, 1], [], []>} : vector<2x32xf32>, vector<32x32xf32>, vector<2x32xf32> -> vector<2x32xf32>
    %cst_121 = arith.constant dense<0.000000e+00> : vector<2x32xf32>
    %332 = tpu.matmul %329, %256, %cst_121 {dimension_numbers = #tpu.dot_dimension_numbers<[1], [0], [0], [1], [0, 0, 1, 1], [], []>} : vector<2x32xf32>, vector<32x32xf32>, vector<2x32xf32> -> vector<2x32xf32>
    %333 = vector.broadcast %257 : vector<1x32xf32> to vector<2x32xf32>
    %334 = arith.addf %332, %333 : vector<2x32xf32>
    %335 = vector.extract_strided_slice %262 {offsets = [4, 0], sizes = [2, 32], strides = [1, 1]} : vector<16x32xf32> to vector<2x32xf32>
    %336 = arith.addf %335, %330 : vector<2x32xf32>
    %337 = arith.negf %336 : vector<2x32xf32>
    %338 = math.exp %337 : vector<2x32xf32>
    %cst_122 = arith.constant 1.000000e+00 : f32
    %339 = vector.broadcast %cst_122 : f32 to vector<2x32xf32>
    %340 = arith.addf %339, %338 : vector<2x32xf32>
    %341 = arith.divf %339, %340 : vector<2x32xf32>
    %342 = vector.extract_strided_slice %267 {offsets = [4, 0], sizes = [2, 32], strides = [1, 1]} : vector<16x32xf32> to vector<2x32xf32>
    %343 = arith.addf %342, %331 : vector<2x32xf32>
    %344 = arith.negf %343 : vector<2x32xf32>
    %345 = math.exp %344 : vector<2x32xf32>
    %cst_123 = arith.constant 1.000000e+00 : f32
    %346 = vector.broadcast %cst_123 : f32 to vector<2x32xf32>
    %347 = arith.addf %346, %345 : vector<2x32xf32>
    %348 = arith.divf %346, %347 : vector<2x32xf32>
    %349 = vector.extract_strided_slice %272 {offsets = [4, 0], sizes = [2, 32], strides = [1, 1]} : vector<16x32xf32> to vector<2x32xf32>
    %350 = arith.mulf %341, %334 : vector<2x32xf32>
    %351 = arith.addf %349, %350 : vector<2x32xf32>
    %352 = math.tanh %351 : vector<2x32xf32>
    %cst_124 = arith.constant 1.000000e+00 : f32
    %353 = vector.broadcast %cst_124 : f32 to vector<2x32xf32>
    %354 = arith.subf %353, %348 : vector<2x32xf32>
    %355 = arith.mulf %354, %352 : vector<2x32xf32>
    %356 = arith.mulf %348, %329 : vector<2x32xf32>
    %357 = arith.addf %355, %356 : vector<2x32xf32>
    %cst_125 = arith.constant dense<0.000000e+00> : vector<2x32xf32>
    %358 = tpu.matmul %357, %254, %cst_125 {dimension_numbers = #tpu.dot_dimension_numbers<[1], [0], [0], [1], [0, 0, 1, 1], [], []>} : vector<2x32xf32>, vector<32x32xf32>, vector<2x32xf32> -> vector<2x32xf32>
    %cst_126 = arith.constant dense<0.000000e+00> : vector<2x32xf32>
    %359 = tpu.matmul %357, %255, %cst_126 {dimension_numbers = #tpu.dot_dimension_numbers<[1], [0], [0], [1], [0, 0, 1, 1], [], []>} : vector<2x32xf32>, vector<32x32xf32>, vector<2x32xf32> -> vector<2x32xf32>
    %cst_127 = arith.constant dense<0.000000e+00> : vector<2x32xf32>
    %360 = tpu.matmul %357, %256, %cst_127 {dimension_numbers = #tpu.dot_dimension_numbers<[1], [0], [0], [1], [0, 0, 1, 1], [], []>} : vector<2x32xf32>, vector<32x32xf32>, vector<2x32xf32> -> vector<2x32xf32>
    %361 = vector.broadcast %257 : vector<1x32xf32> to vector<2x32xf32>
    %362 = arith.addf %360, %361 : vector<2x32xf32>
    %363 = vector.extract_strided_slice %262 {offsets = [6, 0], sizes = [2, 32], strides = [1, 1]} : vector<16x32xf32> to vector<2x32xf32>
    %364 = arith.addf %363, %358 : vector<2x32xf32>
    %365 = arith.negf %364 : vector<2x32xf32>
    %366 = math.exp %365 : vector<2x32xf32>
    %cst_128 = arith.constant 1.000000e+00 : f32
    %367 = vector.broadcast %cst_128 : f32 to vector<2x32xf32>
    %368 = arith.addf %367, %366 : vector<2x32xf32>
    %369 = arith.divf %367, %368 : vector<2x32xf32>
    %370 = vector.extract_strided_slice %267 {offsets = [6, 0], sizes = [2, 32], strides = [1, 1]} : vector<16x32xf32> to vector<2x32xf32>
    %371 = arith.addf %370, %359 : vector<2x32xf32>
    %372 = arith.negf %371 : vector<2x32xf32>
    %373 = math.exp %372 : vector<2x32xf32>
    %cst_129 = arith.constant 1.000000e+00 : f32
    %374 = vector.broadcast %cst_129 : f32 to vector<2x32xf32>
    %375 = arith.addf %374, %373 : vector<2x32xf32>
    %376 = arith.divf %374, %375 : vector<2x32xf32>
    %377 = vector.extract_strided_slice %272 {offsets = [6, 0], sizes = [2, 32], strides = [1, 1]} : vector<16x32xf32> to vector<2x32xf32>
    %378 = arith.mulf %369, %362 : vector<2x32xf32>
    %379 = arith.addf %377, %378 : vector<2x32xf32>
    %380 = math.tanh %379 : vector<2x32xf32>
    %cst_130 = arith.constant 1.000000e+00 : f32
    %381 = vector.broadcast %cst_130 : f32 to vector<2x32xf32>
    %382 = arith.subf %381, %376 : vector<2x32xf32>
    %383 = arith.mulf %382, %380 : vector<2x32xf32>
    %384 = arith.mulf %376, %357 : vector<2x32xf32>
    %385 = arith.addf %383, %384 : vector<2x32xf32>
    %cst_131 = arith.constant dense<0.000000e+00> : vector<2x32xf32>
    %386 = tpu.matmul %385, %254, %cst_131 {dimension_numbers = #tpu.dot_dimension_numbers<[1], [0], [0], [1], [0, 0, 1, 1], [], []>} : vector<2x32xf32>, vector<32x32xf32>, vector<2x32xf32> -> vector<2x32xf32>
    %cst_132 = arith.constant dense<0.000000e+00> : vector<2x32xf32>
    %387 = tpu.matmul %385, %255, %cst_132 {dimension_numbers = #tpu.dot_dimension_numbers<[1], [0], [0], [1], [0, 0, 1, 1], [], []>} : vector<2x32xf32>, vector<32x32xf32>, vector<2x32xf32> -> vector<2x32xf32>
    %cst_133 = arith.constant dense<0.000000e+00> : vector<2x32xf32>
    %388 = tpu.matmul %385, %256, %cst_133 {dimension_numbers = #tpu.dot_dimension_numbers<[1], [0], [0], [1], [0, 0, 1, 1], [], []>} : vector<2x32xf32>, vector<32x32xf32>, vector<2x32xf32> -> vector<2x32xf32>
    %389 = vector.broadcast %257 : vector<1x32xf32> to vector<2x32xf32>
    %390 = arith.addf %388, %389 : vector<2x32xf32>
    %391 = vector.extract_strided_slice %262 {offsets = [8, 0], sizes = [2, 32], strides = [1, 1]} : vector<16x32xf32> to vector<2x32xf32>
    %392 = arith.addf %391, %386 : vector<2x32xf32>
    %393 = arith.negf %392 : vector<2x32xf32>
    %394 = math.exp %393 : vector<2x32xf32>
    %cst_134 = arith.constant 1.000000e+00 : f32
    %395 = vector.broadcast %cst_134 : f32 to vector<2x32xf32>
    %396 = arith.addf %395, %394 : vector<2x32xf32>
    %397 = arith.divf %395, %396 : vector<2x32xf32>
    %398 = vector.extract_strided_slice %267 {offsets = [8, 0], sizes = [2, 32], strides = [1, 1]} : vector<16x32xf32> to vector<2x32xf32>
    %399 = arith.addf %398, %387 : vector<2x32xf32>
    %400 = arith.negf %399 : vector<2x32xf32>
    %401 = math.exp %400 : vector<2x32xf32>
    %cst_135 = arith.constant 1.000000e+00 : f32
    %402 = vector.broadcast %cst_135 : f32 to vector<2x32xf32>
    %403 = arith.addf %402, %401 : vector<2x32xf32>
    %404 = arith.divf %402, %403 : vector<2x32xf32>
    %405 = vector.extract_strided_slice %272 {offsets = [8, 0], sizes = [2, 32], strides = [1, 1]} : vector<16x32xf32> to vector<2x32xf32>
    %406 = arith.mulf %397, %390 : vector<2x32xf32>
    %407 = arith.addf %405, %406 : vector<2x32xf32>
    %408 = math.tanh %407 : vector<2x32xf32>
    %cst_136 = arith.constant 1.000000e+00 : f32
    %409 = vector.broadcast %cst_136 : f32 to vector<2x32xf32>
    %410 = arith.subf %409, %404 : vector<2x32xf32>
    %411 = arith.mulf %410, %408 : vector<2x32xf32>
    %412 = arith.mulf %404, %385 : vector<2x32xf32>
    %413 = arith.addf %411, %412 : vector<2x32xf32>
    %cst_137 = arith.constant dense<0.000000e+00> : vector<2x32xf32>
    %414 = tpu.matmul %413, %254, %cst_137 {dimension_numbers = #tpu.dot_dimension_numbers<[1], [0], [0], [1], [0, 0, 1, 1], [], []>} : vector<2x32xf32>, vector<32x32xf32>, vector<2x32xf32> -> vector<2x32xf32>
    %cst_138 = arith.constant dense<0.000000e+00> : vector<2x32xf32>
    %415 = tpu.matmul %413, %255, %cst_138 {dimension_numbers = #tpu.dot_dimension_numbers<[1], [0], [0], [1], [0, 0, 1, 1], [], []>} : vector<2x32xf32>, vector<32x32xf32>, vector<2x32xf32> -> vector<2x32xf32>
    %cst_139 = arith.constant dense<0.000000e+00> : vector<2x32xf32>
    %416 = tpu.matmul %413, %256, %cst_139 {dimension_numbers = #tpu.dot_dimension_numbers<[1], [0], [0], [1], [0, 0, 1, 1], [], []>} : vector<2x32xf32>, vector<32x32xf32>, vector<2x32xf32> -> vector<2x32xf32>
    %417 = vector.broadcast %257 : vector<1x32xf32> to vector<2x32xf32>
    %418 = arith.addf %416, %417 : vector<2x32xf32>
    %419 = vector.extract_strided_slice %262 {offsets = [10, 0], sizes = [2, 32], strides = [1, 1]} : vector<16x32xf32> to vector<2x32xf32>
    %420 = arith.addf %419, %414 : vector<2x32xf32>
    %421 = arith.negf %420 : vector<2x32xf32>
    %422 = math.exp %421 : vector<2x32xf32>
    %cst_140 = arith.constant 1.000000e+00 : f32
    %423 = vector.broadcast %cst_140 : f32 to vector<2x32xf32>
    %424 = arith.addf %423, %422 : vector<2x32xf32>
    %425 = arith.divf %423, %424 : vector<2x32xf32>
    %426 = vector.extract_strided_slice %267 {offsets = [10, 0], sizes = [2, 32], strides = [1, 1]} : vector<16x32xf32> to vector<2x32xf32>
    %427 = arith.addf %426, %415 : vector<2x32xf32>
    %428 = arith.negf %427 : vector<2x32xf32>
    %429 = math.exp %428 : vector<2x32xf32>
    %cst_141 = arith.constant 1.000000e+00 : f32
    %430 = vector.broadcast %cst_141 : f32 to vector<2x32xf32>
    %431 = arith.addf %430, %429 : vector<2x32xf32>
    %432 = arith.divf %430, %431 : vector<2x32xf32>
    %433 = vector.extract_strided_slice %272 {offsets = [10, 0], sizes = [2, 32], strides = [1, 1]} : vector<16x32xf32> to vector<2x32xf32>
    %434 = arith.mulf %425, %418 : vector<2x32xf32>
    %435 = arith.addf %433, %434 : vector<2x32xf32>
    %436 = math.tanh %435 : vector<2x32xf32>
    %cst_142 = arith.constant 1.000000e+00 : f32
    %437 = vector.broadcast %cst_142 : f32 to vector<2x32xf32>
    %438 = arith.subf %437, %432 : vector<2x32xf32>
    %439 = arith.mulf %438, %436 : vector<2x32xf32>
    %440 = arith.mulf %432, %413 : vector<2x32xf32>
    %441 = arith.addf %439, %440 : vector<2x32xf32>
    %cst_143 = arith.constant dense<0.000000e+00> : vector<2x32xf32>
    %442 = tpu.matmul %441, %254, %cst_143 {dimension_numbers = #tpu.dot_dimension_numbers<[1], [0], [0], [1], [0, 0, 1, 1], [], []>} : vector<2x32xf32>, vector<32x32xf32>, vector<2x32xf32> -> vector<2x32xf32>
    %cst_144 = arith.constant dense<0.000000e+00> : vector<2x32xf32>
    %443 = tpu.matmul %441, %255, %cst_144 {dimension_numbers = #tpu.dot_dimension_numbers<[1], [0], [0], [1], [0, 0, 1, 1], [], []>} : vector<2x32xf32>, vector<32x32xf32>, vector<2x32xf32> -> vector<2x32xf32>
    %cst_145 = arith.constant dense<0.000000e+00> : vector<2x32xf32>
    %444 = tpu.matmul %441, %256, %cst_145 {dimension_numbers = #tpu.dot_dimension_numbers<[1], [0], [0], [1], [0, 0, 1, 1], [], []>} : vector<2x32xf32>, vector<32x32xf32>, vector<2x32xf32> -> vector<2x32xf32>
    %445 = vector.broadcast %257 : vector<1x32xf32> to vector<2x32xf32>
    %446 = arith.addf %444, %445 : vector<2x32xf32>
    %447 = vector.extract_strided_slice %262 {offsets = [12, 0], sizes = [2, 32], strides = [1, 1]} : vector<16x32xf32> to vector<2x32xf32>
    %448 = arith.addf %447, %442 : vector<2x32xf32>
    %449 = arith.negf %448 : vector<2x32xf32>
    %450 = math.exp %449 : vector<2x32xf32>
    %cst_146 = arith.constant 1.000000e+00 : f32
    %451 = vector.broadcast %cst_146 : f32 to vector<2x32xf32>
    %452 = arith.addf %451, %450 : vector<2x32xf32>
    %453 = arith.divf %451, %452 : vector<2x32xf32>
    %454 = vector.extract_strided_slice %267 {offsets = [12, 0], sizes = [2, 32], strides = [1, 1]} : vector<16x32xf32> to vector<2x32xf32>
    %455 = arith.addf %454, %443 : vector<2x32xf32>
    %456 = arith.negf %455 : vector<2x32xf32>
    %457 = math.exp %456 : vector<2x32xf32>
    %cst_147 = arith.constant 1.000000e+00 : f32
    %458 = vector.broadcast %cst_147 : f32 to vector<2x32xf32>
    %459 = arith.addf %458, %457 : vector<2x32xf32>
    %460 = arith.divf %458, %459 : vector<2x32xf32>
    %461 = vector.extract_strided_slice %272 {offsets = [12, 0], sizes = [2, 32], strides = [1, 1]} : vector<16x32xf32> to vector<2x32xf32>
    %462 = arith.mulf %453, %446 : vector<2x32xf32>
    %463 = arith.addf %461, %462 : vector<2x32xf32>
    %464 = math.tanh %463 : vector<2x32xf32>
    %cst_148 = arith.constant 1.000000e+00 : f32
    %465 = vector.broadcast %cst_148 : f32 to vector<2x32xf32>
    %466 = arith.subf %465, %460 : vector<2x32xf32>
    %467 = arith.mulf %466, %464 : vector<2x32xf32>
    %468 = arith.mulf %460, %441 : vector<2x32xf32>
    %469 = arith.addf %467, %468 : vector<2x32xf32>
    %cst_149 = arith.constant dense<0.000000e+00> : vector<2x32xf32>
    %470 = tpu.matmul %469, %254, %cst_149 {dimension_numbers = #tpu.dot_dimension_numbers<[1], [0], [0], [1], [0, 0, 1, 1], [], []>} : vector<2x32xf32>, vector<32x32xf32>, vector<2x32xf32> -> vector<2x32xf32>
    %cst_150 = arith.constant dense<0.000000e+00> : vector<2x32xf32>
    %471 = tpu.matmul %469, %255, %cst_150 {dimension_numbers = #tpu.dot_dimension_numbers<[1], [0], [0], [1], [0, 0, 1, 1], [], []>} : vector<2x32xf32>, vector<32x32xf32>, vector<2x32xf32> -> vector<2x32xf32>
    %cst_151 = arith.constant dense<0.000000e+00> : vector<2x32xf32>
    %472 = tpu.matmul %469, %256, %cst_151 {dimension_numbers = #tpu.dot_dimension_numbers<[1], [0], [0], [1], [0, 0, 1, 1], [], []>} : vector<2x32xf32>, vector<32x32xf32>, vector<2x32xf32> -> vector<2x32xf32>
    %473 = vector.broadcast %257 : vector<1x32xf32> to vector<2x32xf32>
    %474 = arith.addf %472, %473 : vector<2x32xf32>
    %475 = vector.extract_strided_slice %262 {offsets = [14, 0], sizes = [2, 32], strides = [1, 1]} : vector<16x32xf32> to vector<2x32xf32>
    %476 = arith.addf %475, %470 : vector<2x32xf32>
    %477 = arith.negf %476 : vector<2x32xf32>
    %478 = math.exp %477 : vector<2x32xf32>
    %cst_152 = arith.constant 1.000000e+00 : f32
    %479 = vector.broadcast %cst_152 : f32 to vector<2x32xf32>
    %480 = arith.addf %479, %478 : vector<2x32xf32>
    %481 = arith.divf %479, %480 : vector<2x32xf32>
    %482 = vector.extract_strided_slice %267 {offsets = [14, 0], sizes = [2, 32], strides = [1, 1]} : vector<16x32xf32> to vector<2x32xf32>
    %483 = arith.addf %482, %471 : vector<2x32xf32>
    %484 = arith.negf %483 : vector<2x32xf32>
    %485 = math.exp %484 : vector<2x32xf32>
    %cst_153 = arith.constant 1.000000e+00 : f32
    %486 = vector.broadcast %cst_153 : f32 to vector<2x32xf32>
    %487 = arith.addf %486, %485 : vector<2x32xf32>
    %488 = arith.divf %486, %487 : vector<2x32xf32>
    %489 = vector.extract_strided_slice %272 {offsets = [14, 0], sizes = [2, 32], strides = [1, 1]} : vector<16x32xf32> to vector<2x32xf32>
    %490 = arith.mulf %481, %474 : vector<2x32xf32>
    %491 = arith.addf %489, %490 : vector<2x32xf32>
    %492 = math.tanh %491 : vector<2x32xf32>
    %cst_154 = arith.constant 1.000000e+00 : f32
    %493 = vector.broadcast %cst_154 : f32 to vector<2x32xf32>
    %494 = arith.subf %493, %488 : vector<2x32xf32>
    %495 = arith.mulf %494, %492 : vector<2x32xf32>
    %496 = arith.mulf %488, %469 : vector<2x32xf32>
    %497 = arith.addf %495, %496 : vector<2x32xf32>
    %c0_155 = arith.constant 0 : index
    %c0_156 = arith.constant 0 : index
    %498 = vector.load %arg24[%c0_155, %c0_156] : memref<2x32xf32, #tpu.memory_space<vmem>>, vector<2x32xf32>
    tpu.vector_store %arg24[%c0_155, %c0_156], %497 {strides = array<i32>} : memref<2x32xf32, #tpu.memory_space<vmem>>, vector<2x32xf32>,
    %c0_157 = arith.constant 0 : index
    %c0_158 = arith.constant 0 : index
    %499 = vector.load %arg21[%c0_157, %c0_158] : memref<32x1xf32, #tpu.memory_space<vmem>>, vector<32x1xf32>
    %cst_159 = arith.constant dense<0.000000e+00> : vector<2x1xf32>
    %500 = tpu.matmul %497, %499, %cst_159 {dimension_numbers = #tpu.dot_dimension_numbers<[1], [0], [0], [1], [0, 0, 1, 1], [], []>} : vector<2x32xf32>, vector<32x1xf32>, vector<2x1xf32> -> vector<2x1xf32>
    %c0_160 = arith.constant 0 : index
    %c0_161 = arith.constant 0 : index
    %501 = vector.load %arg22[%c0_160, %c0_161] : memref<1x1xf32, #tpu.memory_space<vmem>>, vector<1x1xf32>
    %502 = vector.broadcast %501 : vector<1x1xf32> to vector<2x1xf32>
    %503 = arith.addf %500, %502 : vector<2x1xf32>
    %c0_162 = arith.constant 0 : index
    %c0_163 = arith.constant 0 : index
    %504 = vector.load %arg23[%c0_162, %c0_163] : memref<2x1xf32, #tpu.memory_space<vmem>>, vector<2x1xf32>
    tpu.vector_store %arg23[%c0_162, %c0_163], %503 {strides = array<i32>} : memref<2x1xf32, #tpu.memory_space<vmem>>, vector<2x1xf32>,
    return
  }
}

</mosaic_0001>

<llo_original>
// kernel: tpu_custom_call.1
$region0: #{tpu_custom_call.1}
  #allocation0 [shape = 'u32[]', space=smem, size = 0x4, offset = 0x4, fixed_abs, tag = 'smem constant byte address 0x4 - core index']
  #allocation1 [shape = 'u32[144,128]{1,0:T(1,128)}', space=vmem, size = 0x12000, scoped, tag = 'internal scratch']
  #allocation2 [shape = 'f32[16,32]{1,0:T(8,128)}', space=vmem, size = 0x2000, scoped, tag = 'scratch operand']
  #allocation3 [shape = 'f32[1,1]{1,0:T(1,128)S(1)}', space=vmem, size = 0x200, scoped, tag = 'scoped memory for tpu_custom_call.1']
  %s0 = inlined_call_operand.hbm [shape: f32[16,5], index: 0, kind: input, shape index: {}]
  %s1 = inlined_call_operand.hbm [shape: f32[5,32], index: 1, kind: input, shape index: {}]
  %s2 = inlined_call_operand.hbm [shape: f32[5,32], index: 2, kind: input, shape index: {}]
  %s3 = inlined_call_operand.hbm [shape: f32[5,32], index: 3, kind: input, shape index: {}]
  %s4 = inlined_call_operand.hbm [shape: f32[32,32], index: 4, kind: input, shape index: {}]
  %s5 = inlined_call_operand.hbm [shape: f32[32,32], index: 5, kind: input, shape index: {}]
  %s6 = inlined_call_operand.hbm [shape: f32[32,32], index: 6, kind: input, shape index: {}]
  %s7 = inlined_call_operand.hbm [shape: f32[1,32], index: 7, kind: input, shape index: {}]
  %s8 = inlined_call_operand.hbm [shape: f32[1,32], index: 8, kind: input, shape index: {}]
  %s9 = inlined_call_operand.hbm [shape: f32[1,32], index: 9, kind: input, shape index: {}]
  %s10 = inlined_call_operand.hbm [shape: f32[1,32], index: 10, kind: input, shape index: {}]
  %s11 = inlined_call_operand.hbm [shape: f32[32,32], index: 11, kind: input, shape index: {}]
  %s12 = inlined_call_operand.hbm [shape: f32[32,32], index: 12, kind: input, shape index: {}]
  %s13 = inlined_call_operand.hbm [shape: f32[32,32], index: 13, kind: input, shape index: {}]
  %s14 = inlined_call_operand.hbm [shape: f32[32,32], index: 14, kind: input, shape index: {}]
  %s15 = inlined_call_operand.hbm [shape: f32[32,32], index: 15, kind: input, shape index: {}]
  %s16 = inlined_call_operand.hbm [shape: f32[32,32], index: 16, kind: input, shape index: {}]
  %s17 = inlined_call_operand.hbm [shape: f32[1,32], index: 17, kind: input, shape index: {}]
  %s18 = inlined_call_operand.hbm [shape: f32[1,32], index: 18, kind: input, shape index: {}]
  %s19 = inlined_call_operand.hbm [shape: f32[1,32], index: 19, kind: input, shape index: {}]
  %s20 = inlined_call_operand.hbm [shape: f32[1,32], index: 20, kind: input, shape index: {}]
  %s21 = inlined_call_operand.hbm [shape: f32[32,1], index: 21, kind: input, shape index: {}]
  %s22 = inlined_call_operand.<no memory space> [shape: f32[1,1], index: 22, kind: input, shape index: {}]
  %s23 = inlined_call_operand.hbm [shape: f32[2,1], index: 23, kind: output, shape index: {0}]
  %s24 = inlined_call_operand.hbm [shape: f32[2,32], index: 24, kind: output, shape index: {1}]
  %25 = xla_tuple %s23, %s24
  %s26 = sld [smem:[#allocation0]]
  $region198: #{tpu_custom_call.1} parent=0
    _
  %s28 = ssub.s32 1, %s26
  %s29 = scalar_select 0, %s28, %s26
  %v30 = vstv %s22
  %31 = vst [vmem:[#allocation3] sm:$0x1] %v30
  $region1: #{tpu_custom_call.1} parent=0
    #allocation4 [shape = 'u8[8192]{0}', space=vmem, size = 0x2000, scoped, tag = 'input window, operand 0, single buffered']
    #allocation5 [shape = 's32[1]{0}', space=sflag, size = 0x4, scoped, tag = 'scoped memory for tpu_custom_call.1']
    #allocation6 [shape = 's32[1]{0}', space=sflag, size = 0x4, scoped, tag = 'scoped memory for tpu_custom_call.1']
    #allocation7 [shape = 'u8[4096]{0}', space=vmem, size = 0x1000, scoped, tag = 'input window, operand 1, single buffered']
    #allocation8 [shape = 's32[1]{0}', space=sflag, size = 0x4, scoped, tag = 'scoped memory for tpu_custom_call.1']
    #allocation9 [shape = 'u8[4096]{0}', space=vmem, size = 0x1000, scoped, tag = 'input window, operand 2, single buffered']
    #allocation10 [shape = 'u8[4096]{0}', space=vmem, size = 0x1000, scoped, tag = 'input window, operand 3, single buffered']
    #allocation11 [shape = 's32[1]{0}', space=sflag, size = 0x4, scoped, tag = 'scoped memory for tpu_custom_call.1']
    #allocation12 [shape = 'u8[16384]{0}', space=vmem, size = 0x4000, scoped, tag = 'input window, operand 4, single buffered']
    #allocation13 [shape = 'u8[16384]{0}', space=vmem, size = 0x4000, scoped, tag = 'input window, operand 5, single buffered']
    #allocation14 [shape = 's32[1]{0}', space=sflag, size = 0x4, scoped, tag = 'scoped memory for tpu_custom_call.1']
    #allocation15 [shape = 'u8[16384]{0}', space=vmem, size = 0x4000, scoped, tag = 'input window, operand 6, single buffered']
    #allocation16 [shape = 'u8[512]{0}', space=vmem, size = 0x400, scoped, tag = 'input window, operand 7, single buffered']
    #allocation17 [shape = 's32[1]{0}', space=sflag, size = 0x4, scoped, tag = 'scoped memory for tpu_custom_call.1']
    #allocation18 [shape = 'u8[512]{0}', space=vmem, size = 0x400, scoped, tag = 'input window, operand 8, single buffered']
    #allocation19 [shape = 'u8[512]{0}', space=vmem, size = 0x400, scoped, tag = 'input window, operand 9, single buffered']
    #allocation20 [shape = 's32[1]{0}', space=sflag, size = 0x4, scoped, tag = 'scoped memory for tpu_custom_call.1']
    #allocation21 [shape = 'u8[512]{0}', space=vmem, size = 0x400, scoped, tag = 'input window, operand 10, single buffered']
    #allocation22 [shape = 'u8[16384]{0}', space=vmem, size = 0x4000, scoped, tag = 'input window, operand 11, single buffered']
    #allocation23 [shape = 's32[1]{0}', space=sflag, size = 0x4, scoped, tag = 'scoped memory for tpu_custom_call.1']
    #allocation24 [shape = 'u8[16384]{0}', space=vmem, size = 0x4000, scoped, tag = 'input window, operand 12, single buffered']
    #allocation25 [shape = 'u8[16384]{0}', space=vmem, size = 0x4000, scoped, tag = 'input window, operand 13, single buffered']
    #allocation26 [shape = 's32[1]{0}', space=sflag, size = 0x4, scoped, tag = 'scoped memory for tpu_custom_call.1']
    #allocation27 [shape = 'u8[16384]{0}', space=vmem, size = 0x4000, scoped, tag = 'input window, operand 14, single buffered']
    #allocation28 [shape = 'u8[16384]{0}', space=vmem, size = 0x4000, scoped, tag = 'input window, operand 15, single buffered']
    #allocation29 [shape = 's32[1]{0}', space=sflag, size = 0x4, scoped, tag = 'scoped memory for tpu_custom_call.1']
    #allocation30 [shape = 'u8[16384]{0}', space=vmem, size = 0x4000, scoped, tag = 'input window, operand 16, single buffered']
    #allocation31 [shape = 'u8[512]{0}', space=vmem, size = 0x400, scoped, tag = 'input window, operand 17, single buffered']
    #allocation32 [shape = 's32[1]{0}', space=sflag, size = 0x4, scoped, tag = 'scoped memory for tpu_custom_call.1']
    #allocation33 [shape = 'u8[512]{0}', space=vmem, size = 0x400, scoped, tag = 'input window, operand 18, single buffered']
    #allocation34 [shape = 'u8[512]{0}', space=vmem, size = 0x400, scoped, tag = 'input window, operand 19, single buffered']
    #allocation35 [shape = 's32[1]{0}', space=sflag, size = 0x4, scoped, tag = 'scoped memory for tpu_custom_call.1']
    #allocation36 [shape = 'u8[512]{0}', space=vmem, size = 0x400, scoped, tag = 'input window, operand 20, single buffered']
    #allocation37 [shape = 'u8[16384]{0}', space=vmem, size = 0x4000, scoped, tag = 'input window, operand 21, single buffered']
    #allocation38 [shape = 's32[1]{0}', space=sflag, size = 0x4, scoped, tag = 'scoped memory for tpu_custom_call.1']
    #allocation39 [shape = 'u8[1024]{0}', space=vmem, size = 0x400, scoped, tag = 'output window, operand 0, single buffered']
    #allocation40 [shape = 'u8[1024]{0}', space=vmem, size = 0x400, scoped, tag = 'output window, operand 1, single buffered']
    #allocation41 [shape = 's32[1]{0}', space=sflag, size = 0x4, scoped, tag = 'scoped memory for tpu_custom_call.1']
    %32 = vsyncpa [#allocation5], 0
    %33 = vsyncpa [#allocation8], 0
    %34 = vsyncpa [#allocation11], 0
    %35 = vsyncpa [#allocation14], 0
    %36 = vsyncpa [#allocation17], 0
    %37 = vsyncpa [#allocation20], 0
    %38 = vsyncpa [#allocation23], 0
    %39 = vsyncpa [#allocation26], 0
    %40 = vsyncpa [#allocation29], 0
    %41 = vsyncpa [#allocation32], 0
    %42 = vsyncpa [#allocation35], 0
    %43 = vsyncpa [#allocation38], 0
    %44 = vsyncpa [#allocation6], 0
    %45 = vsyncpa [#allocation41], 0
    // Predicated region
    $region2: #{tpu_custom_call.1} parent=1 // pred_check
      _
    $region3: #{tpu_custom_call.1} parent=1 // pred_check_branch
      %47 = sbr.rel (0) target = $region5
    $region4: #{tpu_custom_call.1} parent=1 // pred_region
      %s49 = ssub.s32 256, 256
      %50 = vsyncadd [#allocation5], %s49
      %s51 = sshll.u32 [#allocation4], 4
      %s52 = int_to_ptr.vmem [resolvable:$true] %s51
      %57 = dma.hbm_to_vmem [thread:$0]  %s0, 256, %s52, [#allocation5], 128, 128, 8
    $region5: #{tpu_custom_call.1} parent=1 // pred_fallthru
      _
    // Predicated region
    $region6: #{tpu_custom_call.1} parent=1 // pred_check
      _
    $region7: #{tpu_custom_call.1} parent=1 // pred_check_branch
      %59 = sbr.rel (0) target = $region9
    $region8: #{tpu_custom_call.1} parent=1 // pred_region
      %s61 = ssub.s32 128, 128
      %62 = vsyncadd [#allocation8], %s61
      %s64 = sshll.u32 [#allocation7], 4
      %s65 = int_to_ptr.vmem [resolvable:$true] %s64
      %67 = dma.hbm_to_vmem [thread:$0]  %s1, 128, %s65, [#allocation8]
    $region9: #{tpu_custom_call.1} parent=1 // pred_fallthru
      _
    // Predicated region
    $region10: #{tpu_custom_call.1} parent=1 // pred_check
      _
    $region11: #{tpu_custom_call.1} parent=1 // pred_check_branch
      %69 = sbr.rel (0) target = $region13
    $region12: #{tpu_custom_call.1} parent=1 // pred_region
      %s71 = ssub.s32 128, 128
      %72 = vsyncadd [#allocation8], %s71
      %s74 = sshll.u32 [#allocation9], 4
      %s75 = int_to_ptr.vmem [resolvable:$true] %s74
      %77 = dma.hbm_to_vmem [thread:$0]  %s2, 128, %s75, [#allocation8]
    $region13: #{tpu_custom_call.1} parent=1 // pred_fallthru
      _
    // Predicated region
    $region14: #{tpu_custom_call.1} parent=1 // pred_check
      _
    $region15: #{tpu_custom_call.1} parent=1 // pred_check_branch
      %79 = sbr.rel (0) target = $region17
    $region16: #{tpu_custom_call.1} parent=1 // pred_region
      %s81 = ssub.s32 128, 128
      %82 = vsyncadd [#allocation11], %s81
      %s84 = sshll.u32 [#allocation10], 4
      %s85 = int_to_ptr.vmem [resolvable:$true] %s84
      %87 = dma.hbm_to_vmem [thread:$0]  %s3, 128, %s85, [#allocation11]
    $region17: #{tpu_custom_call.1} parent=1 // pred_fallthru
      _
    // Predicated region
    $region18: #{tpu_custom_call.1} parent=1 // pred_check
      _
    $region19: #{tpu_custom_call.1} parent=1 // pred_check_branch
      %89 = sbr.rel (0) target = $region21
    $region20: #{tpu_custom_call.1} parent=1 // pred_region
      %s91 = ssub.s32 512, 512
      %92 = vsyncadd [#allocation11], %s91
      %s93 = sshll.u32 [#allocation12], 4
      %s94 = int_to_ptr.vmem [resolvable:$true] %s93
      %99 = dma.hbm_to_vmem [thread:$0]  %s4, 512, %s94, [#allocation11], 128, 128, 8
    $region21: #{tpu_custom_call.1} parent=1 // pred_fallthru
      _
    // Predicated region
    $region22: #{tpu_custom_call.1} parent=1 // pred_check
      _
    $region23: #{tpu_custom_call.1} parent=1 // pred_check_branch
      %101 = sbr.rel (0) target = $region25
    $region24: #{tpu_custom_call.1} parent=1 // pred_region
      %s103 = ssub.s32 512, 512
      %104 = vsyncadd [#allocation14], %s103
      %s105 = sshll.u32 [#allocation13], 4
      %s106 = int_to_ptr.vmem [resolvable:$true] %s105
      %111 = dma.hbm_to_vmem [thread:$0]  %s5, 512, %s106, [#allocation14], 128, 128, 8
    $region25: #{tpu_custom_call.1} parent=1 // pred_fallthru
      _
    // Predicated region
    $region26: #{tpu_custom_call.1} parent=1 // pred_check
      _
    $region27: #{tpu_custom_call.1} parent=1 // pred_check_branch
      %113 = sbr.rel (0) target = $region29
    $region28: #{tpu_custom_call.1} parent=1 // pred_region
      %s115 = ssub.s32 512, 512
      %116 = vsyncadd [#allocation14], %s115
      %s117 = sshll.u32 [#allocation15], 4
      %s118 = int_to_ptr.vmem [resolvable:$true] %s117
      %123 = dma.hbm_to_vmem [thread:$0]  %s6, 512, %s118, [#allocation14], 128, 128, 8
    $region29: #{tpu_custom_call.1} parent=1 // pred_fallthru
      _
    // Predicated region
    $region30: #{tpu_custom_call.1} parent=1 // pred_check
      _
    $region31: #{tpu_custom_call.1} parent=1 // pred_check_branch
      %125 = sbr.rel (0) target = $region33
    $region32: #{tpu_custom_call.1} parent=1 // pred_region
      %s127 = ssub.s32 16, 16
      %128 = vsyncadd [#allocation17], %s127
      %s130 = sshll.u32 [#allocation16], 4
      %s131 = int_to_ptr.vmem [resolvable:$true] %s130
      %133 = dma.hbm_to_vmem [thread:$0]  %s7, 16, %s131, [#allocation17]
    $region33: #{tpu_custom_call.1} parent=1 // pred_fallthru
      _
    // Predicated region
    $region34: #{tpu_custom_call.1} parent=1 // pred_check
      _
    $region35: #{tpu_custom_call.1} parent=1 // pred_check_branch
      %135 = sbr.rel (0) target = $region37
    $region36: #{tpu_custom_call.1} parent=1 // pred_region
      %s137 = ssub.s32 16, 16
      %138 = vsyncadd [#allocation17], %s137
      %s140 = sshll.u32 [#allocation18], 4
      %s141 = int_to_ptr.vmem [resolvable:$true] %s140
      %143 = dma.hbm_to_vmem [thread:$0]  %s8, 16, %s141, [#allocation17]
    $region37: #{tpu_custom_call.1} parent=1 // pred_fallthru
      _
    // Predicated region
    $region38: #{tpu_custom_call.1} parent=1 // pred_check
      _
    $region39: #{tpu_custom_call.1} parent=1 // pred_check_branch
      %145 = sbr.rel (0) target = $region41
    $region40: #{tpu_custom_call.1} parent=1 // pred_region
      %s147 = ssub.s32 16, 16
      %148 = vsyncadd [#allocation20], %s147
      %s150 = sshll.u32 [#allocation19], 4
      %s151 = int_to_ptr.vmem [resolvable:$true] %s150
      %153 = dma.hbm_to_vmem [thread:$0]  %s9, 16, %s151, [#allocation20]
    $region41: #{tpu_custom_call.1} parent=1 // pred_fallthru
      _
    // Predicated region
    $region42: #{tpu_custom_call.1} parent=1 // pred_check
      _
    $region43: #{tpu_custom_call.1} parent=1 // pred_check_branch
      %155 = sbr.rel (0) target = $region45
    $region44: #{tpu_custom_call.1} parent=1 // pred_region
      %s157 = ssub.s32 16, 16
      %158 = vsyncadd [#allocation20], %s157
      %s160 = sshll.u32 [#allocation21], 4
      %s161 = int_to_ptr.vmem [resolvable:$true] %s160
      %163 = dma.hbm_to_vmem [thread:$0]  %s10, 16, %s161, [#allocation20]
    $region45: #{tpu_custom_call.1} parent=1 // pred_fallthru
      _
    // Predicated region
    $region46: #{tpu_custom_call.1} parent=1 // pred_check
      _
    $region47: #{tpu_custom_call.1} parent=1 // pred_check_branch
      %165 = sbr.rel (0) target = $region49
    $region48: #{tpu_custom_call.1} parent=1 // pred_region
      %s167 = ssub.s32 512, 512
      %168 = vsyncadd [#allocation23], %s167
      %s169 = sshll.u32 [#allocation22], 4
      %s170 = int_to_ptr.vmem [resolvable:$true] %s169
      %175 = dma.hbm_to_vmem [thread:$0]  %s11, 512, %s170, [#allocation23], 128, 128, 8
    $region49: #{tpu_custom_call.1} parent=1 // pred_fallthru
      _
    // Predicated region
    $region50: #{tpu_custom_call.1} parent=1 // pred_check
      _
    $region51: #{tpu_custom_call.1} parent=1 // pred_check_branch
      %177 = sbr.rel (0) target = $region53
    $region52: #{tpu_custom_call.1} parent=1 // pred_region
      %s179 = ssub.s32 512, 512
      %180 = vsyncadd [#allocation23], %s179
      %s181 = sshll.u32 [#allocation24], 4
      %s182 = int_to_ptr.vmem [resolvable:$true] %s181
      %187 = dma.hbm_to_vmem [thread:$0]  %s12, 512, %s182, [#allocation23], 128, 128, 8
    $region53: #{tpu_custom_call.1} parent=1 // pred_fallthru
      _
    // Predicated region
    $region54: #{tpu_custom_call.1} parent=1 // pred_check
      _
    $region55: #{tpu_custom_call.1} parent=1 // pred_check_branch
      %189 = sbr.rel (0) target = $region57
    $region56: #{tpu_custom_call.1} parent=1 // pred_region
      %s191 = ssub.s32 512, 512
      %192 = vsyncadd [#allocation26], %s191
      %s193 = sshll.u32 [#allocation25], 4
      %s194 = int_to_ptr.vmem [resolvable:$true] %s193
      %199 = dma.hbm_to_vmem [thread:$0]  %s13, 512, %s194, [#allocation26], 128, 128, 8
    $region57: #{tpu_custom_call.1} parent=1 // pred_fallthru
      _
    // Predicated region
    $region58: #{tpu_custom_call.1} parent=1 // pred_check
      _
    $region59: #{tpu_custom_call.1} parent=1 // pred_check_branch
      %201 = sbr.rel (0) target = $region61
    $region60: #{tpu_custom_call.1} parent=1 // pred_region
      %s203 = ssub.s32 512, 512
      %204 = vsyncadd [#allocation26], %s203
      %s205 = sshll.u32 [#allocation27], 4
      %s206 = int_to_ptr.vmem [resolvable:$true] %s205
      %211 = dma.hbm_to_vmem [thread:$0]  %s14, 512, %s206, [#allocation26], 128, 128, 8
    $region61: #{tpu_custom_call.1} parent=1 // pred_fallthru
      _
    // Predicated region
    $region62: #{tpu_custom_call.1} parent=1 // pred_check
      _
    $region63: #{tpu_custom_call.1} parent=1 // pred_check_branch
      %213 = sbr.rel (0) target = $region65
    $region64: #{tpu_custom_call.1} parent=1 // pred_region
      %s215 = ssub.s32 512, 512
      %216 = vsyncadd [#allocation29], %s215
      %s217 = sshll.u32 [#allocation28], 4
      %s218 = int_to_ptr.vmem [resolvable:$true] %s217
      %223 = dma.hbm_to_vmem [thread:$0]  %s15, 512, %s218, [#allocation29], 128, 128, 8
    $region65: #{tpu_custom_call.1} parent=1 // pred_fallthru
      _
    // Predicated region
    $region66: #{tpu_custom_call.1} parent=1 // pred_check
      _
    $region67: #{tpu_custom_call.1} parent=1 // pred_check_branch
      %225 = sbr.rel (0) target = $region69
    $region68: #{tpu_custom_call.1} parent=1 // pred_region
      %s227 = ssub.s32 512, 512
      %228 = vsyncadd [#allocation29], %s227
      %s229 = sshll.u32 [#allocation30], 4
      %s230 = int_to_ptr.vmem [resolvable:$true] %s229
      %235 = dma.hbm_to_vmem [thread:$0]  %s16, 512, %s230, [#allocation29], 128, 128, 8
    $region69: #{tpu_custom_call.1} parent=1 // pred_fallthru
      _
    // Predicated region
    $region70: #{tpu_custom_call.1} parent=1 // pred_check
      _
    $region71: #{tpu_custom_call.1} parent=1 // pred_check_branch
      %237 = sbr.rel (0) target = $region73
    $region72: #{tpu_custom_call.1} parent=1 // pred_region
      %s239 = ssub.s32 16, 16
      %240 = vsyncadd [#allocation32], %s239
      %s242 = sshll.u32 [#allocation31], 4
      %s243 = int_to_ptr.vmem [resolvable:$true] %s242
      %245 = dma.hbm_to_vmem [thread:$0]  %s17, 16, %s243, [#allocation32]
    $region73: #{tpu_custom_call.1} parent=1 // pred_fallthru
      _
    // Predicated region
    $region74: #{tpu_custom_call.1} parent=1 // pred_check
      _
    $region75: #{tpu_custom_call.1} parent=1 // pred_check_branch
      %247 = sbr.rel (0) target = $region77
    $region76: #{tpu_custom_call.1} parent=1 // pred_region
      %s249 = ssub.s32 16, 16
      %250 = vsyncadd [#allocation32], %s249
      %s252 = sshll.u32 [#allocation33], 4
      %s253 = int_to_ptr.vmem [resolvable:$true] %s252
      %255 = dma.hbm_to_vmem [thread:$0]  %s18, 16, %s253, [#allocation32]
    $region77: #{tpu_custom_call.1} parent=1 // pred_fallthru
      _
    // Predicated region
    $region78: #{tpu_custom_call.1} parent=1 // pred_check
      _
    $region79: #{tpu_custom_call.1} parent=1 // pred_check_branch
      %257 = sbr.rel (0) target = $region81
    $region80: #{tpu_custom_call.1} parent=1 // pred_region
      %s259 = ssub.s32 16, 16
      %260 = vsyncadd [#allocation35], %s259
      %s262 = sshll.u32 [#allocation34], 4
      %s263 = int_to_ptr.vmem [resolvable:$true] %s262
      %265 = dma.hbm_to_vmem [thread:$0]  %s19, 16, %s263, [#allocation35]
    $region81: #{tpu_custom_call.1} parent=1 // pred_fallthru
      _
    // Predicated region
    $region82: #{tpu_custom_call.1} parent=1 // pred_check
      _
    $region83: #{tpu_custom_call.1} parent=1 // pred_check_branch
      %267 = sbr.rel (0) target = $region85
    $region84: #{tpu_custom_call.1} parent=1 // pred_region
      %s269 = ssub.s32 16, 16
      %270 = vsyncadd [#allocation35], %s269
      %s272 = sshll.u32 [#allocation36], 4
      %s273 = int_to_ptr.vmem [resolvable:$true] %s272
      %275 = dma.hbm_to_vmem [thread:$0]  %s20, 16, %s273, [#allocation35]
    $region85: #{tpu_custom_call.1} parent=1 // pred_fallthru
      _
    // Predicated region
    $region86: #{tpu_custom_call.1} parent=1 // pred_check
      _
    $region87: #{tpu_custom_call.1} parent=1 // pred_check_branch
      %277 = sbr.rel (0) target = $region89
    $region88: #{tpu_custom_call.1} parent=1 // pred_region
      %s279 = ssub.s32 512, 512
      %280 = vsyncadd [#allocation38], %s279
      %s281 = sshll.u32 [#allocation37], 4
      %s282 = int_to_ptr.vmem [resolvable:$true] %s281
      %287 = dma.hbm_to_vmem [thread:$0]  %s21, 512, %s282, [#allocation38], 128, 128, 8
    $region89: #{tpu_custom_call.1} parent=1 // pred_fallthru
      _
    // Predicated region
    $region90: #{tpu_custom_call.1} parent=1 // pred_check
      _
    $region91: #{tpu_custom_call.1} parent=1 // pred_check_branch
      %289 = sbr.rel (0) target = $region93
    $region92: #{tpu_custom_call.1} parent=1 // pred_region
      _
    $region93: #{tpu_custom_call.1} parent=1 // pred_fallthru
      _
    // Predicated region
    $region94: #{tpu_custom_call.1} parent=1 // pred_check
      _
    $region95: #{tpu_custom_call.1} parent=1 // pred_check_branch
      %291 = sbr.rel (0) target = $region97
    $region96: #{tpu_custom_call.1} parent=1 // pred_region
      %292 = dma.done [#allocation5], 256
    $region97: #{tpu_custom_call.1} parent=1 // pred_fallthru
      _
    // Predicated region
    $region98: #{tpu_custom_call.1} parent=1 // pred_check
      _
    $region99: #{tpu_custom_call.1} parent=1 // pred_check_branch
      %294 = sbr.rel (0) target = $region101
    $region100: #{tpu_custom_call.1} parent=1 // pred_region
      %295 = dma.done [#allocation8], 128
    $region101: #{tpu_custom_call.1} parent=1 // pred_fallthru
      _
    // Predicated region
    $region102: #{tpu_custom_call.1} parent=1 // pred_check
      _
    $region103: #{tpu_custom_call.1} parent=1 // pred_check_branch
      %297 = sbr.rel (0) target = $region105
    $region104: #{tpu_custom_call.1} parent=1 // pred_region
      %298 = dma.done [#allocation8], 128
    $region105: #{tpu_custom_call.1} parent=1 // pred_fallthru
      _
    // Predicated region
    $region106: #{tpu_custom_call.1} parent=1 // pred_check
      _
    $region107: #{tpu_custom_call.1} parent=1 // pred_check_branch
      %300 = sbr.rel (0) target = $region109
    $region108: #{tpu_custom_call.1} parent=1 // pred_region
      %301 = dma.done [#allocation11], 128
    $region109: #{tpu_custom_call.1} parent=1 // pred_fallthru
      _
    // Predicated region
    $region110: #{tpu_custom_call.1} parent=1 // pred_check
      _
    $region111: #{tpu_custom_call.1} parent=1 // pred_check_branch
      %303 = sbr.rel (0) target = $region113
    $region112: #{tpu_custom_call.1} parent=1 // pred_region
      %304 = dma.done [#allocation11], 512
    $region113: #{tpu_custom_call.1} parent=1 // pred_fallthru
      _
    // Predicated region
    $region114: #{tpu_custom_call.1} parent=1 // pred_check
      _
    $region115: #{tpu_custom_call.1} parent=1 // pred_check_branch
      %306 = sbr.rel (0) target = $region117
    $region116: #{tpu_custom_call.1} parent=1 // pred_region
      %307 = dma.done [#allocation14], 512
    $region117: #{tpu_custom_call.1} parent=1 // pred_fallthru
      _
    // Predicated region
    $region118: #{tpu_custom_call.1} parent=1 // pred_check
      _
    $region119: #{tpu_custom_call.1} parent=1 // pred_check_branch
      %309 = sbr.rel (0) target = $region121
    $region120: #{tpu_custom_call.1} parent=1 // pred_region
      %310 = dma.done [#allocation14], 512
    $region121: #{tpu_custom_call.1} parent=1 // pred_fallthru
      _
    // Predicated region
    $region122: #{tpu_custom_call.1} parent=1 // pred_check
      _
    $region123: #{tpu_custom_call.1} parent=1 // pred_check_branch
      %312 = sbr.rel (0) target = $region125
    $region124: #{tpu_custom_call.1} parent=1 // pred_region
      %313 = dma.done [#allocation17], 16
    $region125: #{tpu_custom_call.1} parent=1 // pred_fallthru
      _
    // Predicated region
    $region126: #{tpu_custom_call.1} parent=1 // pred_check
      _
    $region127: #{tpu_custom_call.1} parent=1 // pred_check_branch
      %315 = sbr.rel (0) target = $region129
    $region128: #{tpu_custom_call.1} parent=1 // pred_region
      %316 = dma.done [#allocation17], 16
    $region129: #{tpu_custom_call.1} parent=1 // pred_fallthru
      _
    // Predicated region
    $region130: #{tpu_custom_call.1} parent=1 // pred_check
      _
    $region131: #{tpu_custom_call.1} parent=1 // pred_check_branch
      %318 = sbr.rel (0) target = $region133
    $region132: #{tpu_custom_call.1} parent=1 // pred_region
      %319 = dma.done [#allocation20], 16
    $region133: #{tpu_custom_call.1} parent=1 // pred_fallthru
      _
    // Predicated region
    $region134: #{tpu_custom_call.1} parent=1 // pred_check
      _
    $region135: #{tpu_custom_call.1} parent=1 // pred_check_branch
      %321 = sbr.rel (0) target = $region137
    $region136: #{tpu_custom_call.1} parent=1 // pred_region
      %322 = dma.done [#allocation20], 16
    $region137: #{tpu_custom_call.1} parent=1 // pred_fallthru
      _
    // Predicated region
    $region138: #{tpu_custom_call.1} parent=1 // pred_check
      _
    $region139: #{tpu_custom_call.1} parent=1 // pred_check_branch
      %324 = sbr.rel (0) target = $region141
    $region140: #{tpu_custom_call.1} parent=1 // pred_region
      %325 = dma.done [#allocation23], 512
    $region141: #{tpu_custom_call.1} parent=1 // pred_fallthru
      _
    // Predicated region
    $region142: #{tpu_custom_call.1} parent=1 // pred_check
      _
    $region143: #{tpu_custom_call.1} parent=1 // pred_check_branch
      %327 = sbr.rel (0) target = $region145
    $region144: #{tpu_custom_call.1} parent=1 // pred_region
      %328 = dma.done [#allocation23], 512
    $region145: #{tpu_custom_call.1} parent=1 // pred_fallthru
      _
    // Predicated region
    $region146: #{tpu_custom_call.1} parent=1 // pred_check
      _
    $region147: #{tpu_custom_call.1} parent=1 // pred_check_branch
      %330 = sbr.rel (0) target = $region149
    $region148: #{tpu_custom_call.1} parent=1 // pred_region
      %331 = dma.done [#allocation26], 512
    $region149: #{tpu_custom_call.1} parent=1 // pred_fallthru
      _
    // Predicated region
    $region150: #{tpu_custom_call.1} parent=1 // pred_check
      _
    $region151: #{tpu_custom_call.1} parent=1 // pred_check_branch
      %333 = sbr.rel (0) target = $region153
    $region152: #{tpu_custom_call.1} parent=1 // pred_region
      %334 = dma.done [#allocation26], 512
    $region153: #{tpu_custom_call.1} parent=1 // pred_fallthru
      _
    // Predicated region
    $region154: #{tpu_custom_call.1} parent=1 // pred_check
      _
    $region155: #{tpu_custom_call.1} parent=1 // pred_check_branch
      %336 = sbr.rel (0) target = $region157
    $region156: #{tpu_custom_call.1} parent=1 // pred_region
      %337 = dma.done [#allocation29], 512
    $region157: #{tpu_custom_call.1} parent=1 // pred_fallthru
      _
    // Predicated region
    $region158: #{tpu_custom_call.1} parent=1 // pred_check
      _
    $region159: #{tpu_custom_call.1} parent=1 // pred_check_branch
      %339 = sbr.rel (0) target = $region161
    $region160: #{tpu_custom_call.1} parent=1 // pred_region
      %340 = dma.done [#allocation29], 512
    $region161: #{tpu_custom_call.1} parent=1 // pred_fallthru
      _
    // Predicated region
    $region162: #{tpu_custom_call.1} parent=1 // pred_check
      _
    $region163: #{tpu_custom_call.1} parent=1 // pred_check_branch
      %342 = sbr.rel (0) target = $region165
    $region164: #{tpu_custom_call.1} parent=1 // pred_region
      %343 = dma.done [#allocation32], 16
    $region165: #{tpu_custom_call.1} parent=1 // pred_fallthru
      _
    // Predicated region
    $region166: #{tpu_custom_call.1} parent=1 // pred_check
      _
    $region167: #{tpu_custom_call.1} parent=1 // pred_check_branch
      %345 = sbr.rel (0) target = $region169
    $region168: #{tpu_custom_call.1} parent=1 // pred_region
      %346 = dma.done [#allocation32], 16
    $region169: #{tpu_custom_call.1} parent=1 // pred_fallthru
      _
    // Predicated region
    $region170: #{tpu_custom_call.1} parent=1 // pred_check
      _
    $region171: #{tpu_custom_call.1} parent=1 // pred_check_branch
      %348 = sbr.rel (0) target = $region173
    $region172: #{tpu_custom_call.1} parent=1 // pred_region
      %349 = dma.done [#allocation35], 16
    $region173: #{tpu_custom_call.1} parent=1 // pred_fallthru
      _
    // Predicated region
    $region174: #{tpu_custom_call.1} parent=1 // pred_check
      _
    $region175: #{tpu_custom_call.1} parent=1 // pred_check_branch
      %351 = sbr.rel (0) target = $region177
    $region176: #{tpu_custom_call.1} parent=1 // pred_region
      %352 = dma.done [#allocation35], 16
    $region177: #{tpu_custom_call.1} parent=1 // pred_fallthru
      _
    // Predicated region
    $region178: #{tpu_custom_call.1} parent=1 // pred_check
      _
    $region179: #{tpu_custom_call.1} parent=1 // pred_check_branch
      %354 = sbr.rel (0) target = $region181
    $region180: #{tpu_custom_call.1} parent=1 // pred_region
      %355 = dma.done [#allocation38], 512
    $region181: #{tpu_custom_call.1} parent=1 // pred_fallthru
      _
    %v356 = vld [vmem:[#allocation4] sm:$0xff]
    %v357 = vld [vmem:[#allocation4 + $0x8] sm:$0xff]
    %v358 = vld [vmem:[#allocation12] sm:$0xff]
    %v359 = vld [vmem:[#allocation12 + $0x8] sm:$0xff]
    %v360 = vld [vmem:[#allocation12 + $0x10] sm:$0xff]
    %v361 = vld [vmem:[#allocation12 + $0x18] sm:$0xff]
    %v362 = vld [vmem:[#allocation13] sm:$0xff]
    %v363 = vld [vmem:[#allocation13 + $0x8] sm:$0xff]
    %v364 = vld [vmem:[#allocation13 + $0x10] sm:$0xff]
    %v365 = vld [vmem:[#allocation13 + $0x18] sm:$0xff]
    %v366 = vld [vmem:[#allocation15] sm:$0xff]
    %v367 = vld [vmem:[#allocation15 + $0x8] sm:$0xff]
    %v368 = vld [vmem:[#allocation15 + $0x10] sm:$0xff]
    %v369 = vld [vmem:[#allocation15 + $0x18] sm:$0xff]
    %v370 = vld [vmem:[#allocation21] sm:$0x1]
    %v371 = vld [vmem:[#allocation7] sm:$0x1f]
    %v372 = vld [vmem:[#allocation16] sm:$0x1]
    %v374 = vlaneseq
    %v375 = vshrl.u32 %v374, 7
    %v376 = vsub.s32 0, %v375
    %v377 = vrot.slane %v372, %v376
    %vm379 = vcmask 39936
    %v381 = vsel %vm379, %v356, 0
    %v384 = vsel %vm379, %v357, 0
    %vm386 = vcmask 1044480
    %v388 = vsel %vm386, %v371, 0
    %390 = vmatprep.subr.mxu0 0.0
    %391 = vmatpush1.msra.mxu0 %v388
    %392 = vmatprep.subr.mxu0 0.0
    %393 = vmatpush1.msra.mxu0 0.0
    %394 = vmatprep.subr.mxu0 0.0
    %395 = vmatpush1.msra.mxu0 0.0
    %396 = vmatprep.subr.mxu0 0.0
    %397 = vmatpush1.msra.mxu0 0.0
    %398 = vmatprep.subr.mxu0 0.0
    %399 = vmatpush1.msra.mxu0 0.0
    %400 = vmatprep.subr.mxu0 0.0
    %401 = vmatpush1.msra.mxu0 0.0
    %402 = vmatprep.subr.mxu0 0.0
    %403 = vmatpush1.msra.mxu0 0.0
    %404 = vmatprep.subr.mxu0 0.0
    %405 = vmatpush1.msra.mxu0 0.0
    %406 = vmatprep.subr.mxu0 0.0
    %407 = vmatpush1.msra.mxu0 0.0
    %408 = vmatprep.subr.mxu0 0.0
    %409 = vmatpush1.msra.mxu0 0.0
    %410 = vmatprep.subr.mxu0 0.0
    %411 = vmatpush1.msra.mxu0 0.0
    %412 = vmatprep.subr.mxu0 0.0
    %413 = vmatpush1.msra.mxu0 0.0
    %414 = vmatprep.subr.mxu0 0.0
    %415 = vmatpush1.msra.mxu0 0.0
    %416 = vmatprep.subr.mxu0 0.0
    %417 = vmatpush1.msra.mxu0 0.0
    %418 = vmatprep.subr.mxu0 0.0
    %419 = vmatpush1.msra.mxu0 0.0
    %420 = vmatprep.subr.mxu0 0.0
    %421 = vmatpush1.msra.mxu0 0.0
    %422 = vmatprep.subr.mxu0 0.0
    %423 = vmatpush1.msra.mxu0 0.0
    %424 = vmatprep.subr.mxu0 0.0
    %425 = vmatpush1.msra.mxu0 0.0
    %426 = vmatprep.subr.mxu0 0.0
    %427 = vmatpush1.msra.mxu0 0.0
    %428 = vmatprep.subr.mxu0 0.0
    %429 = vmatpush1.msra.mxu0 0.0
    %430 = vmatprep.subr.mxu0 0.0
    %431 = vmatpush1.msra.mxu0 0.0
    %432 = vmatprep.subr.mxu0 0.0
    %433 = vmatpush1.msra.mxu0 0.0
    %434 = vmatprep.subr.mxu0 0.0
    %435 = vmatpush1.msra.mxu0 0.0
    %436 = vmatprep.subr.mxu0 0.0
    %437 = vmatpush1.msra.mxu0 0.0
    %438 = vmatprep.subr.mxu0 0.0
    %439 = vmatpush1.msra.mxu0 0.0
    %440 = vmatprep.subr.mxu0 0.0
    %441 = vmatpush1.msra.mxu0 0.0
    %442 = vmatprep.subr.mxu0 0.0
    %443 = vmatpush1.msra.mxu0 0.0
    %444 = vmatprep.subr.mxu0 0.0
    %445 = vmatpush1.msra.mxu0 0.0
    %446 = vmatprep.subr.mxu0 0.0
    %447 = vmatpush1.msra.mxu0 0.0
    %448 = vmatprep.subr.mxu0 0.0
    %449 = vmatpush1.msra.mxu0 0.0
    %450 = vmatprep.subr.mxu0 0.0
    %451 = vmatpush1.msra.mxu0 0.0
    %452 = vmatprep.subr.mxu0 0.0
    %453 = vmatpush1.msra.mxu0 0.0
    %454 = vmatprep.mubr.f32.mxu0 0.0
    %455 = vmatmul.mubr.f32.gmra.mrb[0].mxu0 %v381
    %v456 = vpop.f32.mrb[0].mxu0
    %v457 = vadd.f32 %v377, %v456
    %v458 = vpop.f32.mrb[0].mxu0
    %459 = vmatprep.mubr.f32.mxu0 0.0
    %460 = vmatmul.mubr.f32.gmra.mrb[0].mxu0 %v384
    %v461 = vpop.f32.mrb[0].mxu0
    %v462 = vadd.f32 %v377, %v461
    %v463 = vpop.f32.mrb[0].mxu0
    %464 = vdwg.mxu0
    %v465 = vld [vmem:[#allocation9] sm:$0x1f]
    %v466 = vld [vmem:[#allocation18] sm:$0x1]
    %v468 = vlaneseq
    %v469 = vshrl.u32 %v468, 7
    %v470 = vsub.s32 0, %v469
    %v471 = vrot.slane %v466, %v470
    %v474 = vsel %vm386, %v465, 0
    %476 = vmatprep.subr.mxu0 0.0
    %477 = vmatpush1.msra.mxu0 %v474
    %478 = vmatprep.subr.mxu0 0.0
    %479 = vmatpush1.msra.mxu0 0.0
    %480 = vmatprep.subr.mxu0 0.0
    %481 = vmatpush1.msra.mxu0 0.0
    %482 = vmatprep.subr.mxu0 0.0
    %483 = vmatpush1.msra.mxu0 0.0
    %484 = vmatprep.subr.mxu0 0.0
    %485 = vmatpush1.msra.mxu0 0.0
    %486 = vmatprep.subr.mxu0 0.0
    %487 = vmatpush1.msra.mxu0 0.0
    %488 = vmatprep.subr.mxu0 0.0
    %489 = vmatpush1.msra.mxu0 0.0
    %490 = vmatprep.subr.mxu0 0.0
    %491 = vmatpush1.msra.mxu0 0.0
    %492 = vmatprep.subr.mxu0 0.0
    %493 = vmatpush1.msra.mxu0 0.0
    %494 = vmatprep.subr.mxu0 0.0
    %495 = vmatpush1.msra.mxu0 0.0
    %496 = vmatprep.subr.mxu0 0.0
    %497 = vmatpush1.msra.mxu0 0.0
    %498 = vmatprep.subr.mxu0 0.0
    %499 = vmatpush1.msra.mxu0 0.0
    %500 = vmatprep.subr.mxu0 0.0
    %501 = vmatpush1.msra.mxu0 0.0
    %502 = vmatprep.subr.mxu0 0.0
    %503 = vmatpush1.msra.mxu0 0.0
    %504 = vmatprep.subr.mxu0 0.0
    %505 = vmatpush1.msra.mxu0 0.0
    %506 = vmatprep.subr.mxu0 0.0
    %507 = vmatpush1.msra.mxu0 0.0
    %508 = vmatprep.subr.mxu0 0.0
    %509 = vmatpush1.msra.mxu0 0.0
    %510 = vmatprep.subr.mxu0 0.0
    %511 = vmatpush1.msra.mxu0 0.0
    %512 = vmatprep.subr.mxu0 0.0
    %513 = vmatpush1.msra.mxu0 0.0
    %514 = vmatprep.subr.mxu0 0.0
    %515 = vmatpush1.msra.mxu0 0.0
    %516 = vmatprep.subr.mxu0 0.0
    %517 = vmatpush1.msra.mxu0 0.0
    %518 = vmatprep.subr.mxu0 0.0
    %519 = vmatpush1.msra.mxu0 0.0
    %520 = vmatprep.subr.mxu0 0.0
    %521 = vmatpush1.msra.mxu0 0.0
    %522 = vmatprep.subr.mxu0 0.0
    %523 = vmatpush1.msra.mxu0 0.0
    %524 = vmatprep.subr.mxu0 0.0
    %525 = vmatpush1.msra.mxu0 0.0
    %526 = vmatprep.subr.mxu0 0.0
    %527 = vmatpush1.msra.mxu0 0.0
    %528 = vmatprep.subr.mxu0 0.0
    %529 = vmatpush1.msra.mxu0 0.0
    %530 = vmatprep.subr.mxu0 0.0
    %531 = vmatpush1.msra.mxu0 0.0
    %532 = vmatprep.subr.mxu0 0.0
    %533 = vmatpush1.msra.mxu0 0.0
    %534 = vmatprep.subr.mxu0 0.0
    %535 = vmatpush1.msra.mxu0 0.0
    %536 = vmatprep.subr.mxu0 0.0
    %537 = vmatpush1.msra.mxu0 0.0
    %538 = vmatprep.subr.mxu0 0.0
    %539 = vmatpush1.msra.mxu0 0.0
    %540 = vmatprep.mubr.f32.mxu0 0.0
    %541 = vmatmul.mubr.f32.gmra.mrb[0].mxu0 %v381
    %v542 = vpop.f32.mrb[0].mxu0
    %v543 = vadd.f32 %v471, %v542
    %v544 = vpop.f32.mrb[0].mxu0
    %545 = vmatprep.mubr.f32.mxu0 0.0
    %546 = vmatmul.mubr.f32.gmra.mrb[0].mxu0 %v384
    %v547 = vpop.f32.mrb[0].mxu0
    %v548 = vadd.f32 %v471, %v547
    %v549 = vpop.f32.mrb[0].mxu0
    %550 = vdwg.mxu0
    %v551 = vld [vmem:[#allocation10] sm:$0x1f]
    %v552 = vld [vmem:[#allocation19] sm:$0x1]
    %v554 = vlaneseq
    %v555 = vshrl.u32 %v554, 7
    %v556 = vsub.s32 0, %v555
    %v557 = vrot.slane %v552, %v556
    %v560 = vsel %vm386, %v551, 0
    %562 = vmatprep.subr.mxu0 0.0
    %563 = vmatpush1.msra.mxu0 %v560
    %564 = vmatprep.subr.mxu0 0.0
    %565 = vmatpush1.msra.mxu0 0.0
    %566 = vmatprep.subr.mxu0 0.0
    %567 = vmatpush1.msra.mxu0 0.0
    %568 = vmatprep.subr.mxu0 0.0
    %569 = vmatpush1.msra.mxu0 0.0
    %570 = vmatprep.subr.mxu0 0.0
    %571 = vmatpush1.msra.mxu0 0.0
    %572 = vmatprep.subr.mxu0 0.0
    %573 = vmatpush1.msra.mxu0 0.0
    %574 = vmatprep.subr.mxu0 0.0
    %575 = vmatpush1.msra.mxu0 0.0
    %576 = vmatprep.subr.mxu0 0.0
    %577 = vmatpush1.msra.mxu0 0.0
    %578 = vmatprep.subr.mxu0 0.0
    %579 = vmatpush1.msra.mxu0 0.0
    %580 = vmatprep.subr.mxu0 0.0
    %581 = vmatpush1.msra.mxu0 0.0
    %582 = vmatprep.subr.mxu0 0.0
    %583 = vmatpush1.msra.mxu0 0.0
    %584 = vmatprep.subr.mxu0 0.0
    %585 = vmatpush1.msra.mxu0 0.0
    %586 = vmatprep.subr.mxu0 0.0
    %587 = vmatpush1.msra.mxu0 0.0
    %588 = vmatprep.subr.mxu0 0.0
    %589 = vmatpush1.msra.mxu0 0.0
    %590 = vmatprep.subr.mxu0 0.0
    %591 = vmatpush1.msra.mxu0 0.0
    %592 = vmatprep.subr.mxu0 0.0
    %593 = vmatpush1.msra.mxu0 0.0
    %594 = vmatprep.subr.mxu0 0.0
    %595 = vmatpush1.msra.mxu0 0.0
    %596 = vmatprep.subr.mxu0 0.0
    %597 = vmatpush1.msra.mxu0 0.0
    %598 = vmatprep.subr.mxu0 0.0
    %599 = vmatpush1.msra.mxu0 0.0
    %600 = vmatprep.subr.mxu0 0.0
    %601 = vmatpush1.msra.mxu0 0.0
    %602 = vmatprep.subr.mxu0 0.0
    %603 = vmatpush1.msra.mxu0 0.0
    %604 = vmatprep.subr.mxu0 0.0
    %605 = vmatpush1.msra.mxu0 0.0
    %606 = vmatprep.subr.mxu0 0.0
    %607 = vmatpush1.msra.mxu0 0.0
    %608 = vmatprep.subr.mxu0 0.0
    %609 = vmatpush1.msra.mxu0 0.0
    %610 = vmatprep.subr.mxu0 0.0
    %611 = vmatpush1.msra.mxu0 0.0
    %612 = vmatprep.subr.mxu0 0.0
    %613 = vmatpush1.msra.mxu0 0.0
    %614 = vmatprep.subr.mxu0 0.0
    %615 = vmatpush1.msra.mxu0 0.0
    %616 = vmatprep.subr.mxu0 0.0
    %617 = vmatpush1.msra.mxu0 0.0
    %618 = vmatprep.subr.mxu0 0.0
    %619 = vmatpush1.msra.mxu0 0.0
    %620 = vmatprep.subr.mxu0 0.0
    %621 = vmatpush1.msra.mxu0 0.0
    %622 = vmatprep.subr.mxu0 0.0
    %623 = vmatpush1.msra.mxu0 0.0
    %624 = vmatprep.subr.mxu0 0.0
    %625 = vmatpush1.msra.mxu0 0.0
    %626 = vmatprep.mubr.f32.mxu0 0.0
    %627 = vmatmul.mubr.f32.gmra.mrb[0].mxu0 %v381
    %v628 = vpop.f32.mrb[0].mxu0
    %v629 = vadd.f32 %v557, %v628
    %v630 = vpop.f32.mrb[0].mxu0
    %631 = vmatprep.mubr.f32.mxu0 0.0
    %632 = vmatmul.mubr.f32.gmra.mrb[0].mxu0 %v384
    %v633 = vpop.f32.mrb[0].mxu0
    %v634 = vadd.f32 %v557, %v633
    %v635 = vpop.f32.mrb[0].mxu0
    %636 = vdwg.mxu0
    %vm637 = vcmask 261120
    %v639 = vsel %vm637, 0.0, 0
    %641 = vmatprep.subr.mxu0 0.0
    %642 = vmatpush1.msra.mxu0 %v358
    %643 = vmatprep.subr.mxu0 0.0
    %644 = vmatpush1.msra.mxu0 %v359
    %645 = vmatprep.subr.mxu0 0.0
    %646 = vmatpush1.msra.mxu0 %v360
    %647 = vmatprep.subr.mxu0 0.0
    %648 = vmatpush1.msra.mxu0 %v361
    %649 = vmatprep.subr.mxu0 0.0
    %650 = vmatpush1.msra.mxu0 0.0
    %651 = vmatprep.subr.mxu0 0.0
    %652 = vmatpush1.msra.mxu0 0.0
    %653 = vmatprep.subr.mxu0 0.0
    %654 = vmatpush1.msra.mxu0 0.0
    %655 = vmatprep.subr.mxu0 0.0
    %656 = vmatpush1.msra.mxu0 0.0
    %657 = vmatprep.subr.mxu0 0.0
    %658 = vmatpush1.msra.mxu0 0.0
    %659 = vmatprep.subr.mxu0 0.0
    %660 = vmatpush1.msra.mxu0 0.0
    %661 = vmatprep.subr.mxu0 0.0
    %662 = vmatpush1.msra.mxu0 0.0
    %663 = vmatprep.subr.mxu0 0.0
    %664 = vmatpush1.msra.mxu0 0.0
    %665 = vmatprep.subr.mxu0 0.0
    %666 = vmatpush1.msra.mxu0 0.0
    %667 = vmatprep.subr.mxu0 0.0
    %668 = vmatpush1.msra.mxu0 0.0
    %669 = vmatprep.subr.mxu0 0.0
    %670 = vmatpush1.msra.mxu0 0.0
    %671 = vmatprep.subr.mxu0 0.0
    %672 = vmatpush1.msra.mxu0 0.0
    %673 = vmatprep.subr.mxu0 0.0
    %674 = vmatpush1.msra.mxu0 0.0
    %675 = vmatprep.subr.mxu0 0.0
    %676 = vmatpush1.msra.mxu0 0.0
    %677 = vmatprep.subr.mxu0 0.0
    %678 = vmatpush1.msra.mxu0 0.0
    %679 = vmatprep.subr.mxu0 0.0
    %680 = vmatpush1.msra.mxu0 0.0
    %681 = vmatprep.subr.mxu0 0.0
    %682 = vmatpush1.msra.mxu0 0.0
    %683 = vmatprep.subr.mxu0 0.0
    %684 = vmatpush1.msra.mxu0 0.0
    %685 = vmatprep.subr.mxu0 0.0
    %686 = vmatpush1.msra.mxu0 0.0
    %687 = vmatprep.subr.mxu0 0.0
    %688 = vmatpush1.msra.mxu0 0.0
    %689 = vmatprep.subr.mxu0 0.0
    %690 = vmatpush1.msra.mxu0 0.0
    %691 = vmatprep.subr.mxu0 0.0
    %692 = vmatpush1.msra.mxu0 0.0
    %693 = vmatprep.subr.mxu0 0.0
    %694 = vmatpush1.msra.mxu0 0.0
    %695 = vmatprep.subr.mxu0 0.0
    %696 = vmatpush1.msra.mxu0 0.0
    %697 = vmatprep.subr.mxu0 0.0
    %698 = vmatpush1.msra.mxu0 0.0
    %699 = vmatprep.subr.mxu0 0.0
    %700 = vmatpush1.msra.mxu0 0.0
    %701 = vmatprep.subr.mxu0 0.0
    %702 = vmatpush1.msra.mxu0 0.0
    %703 = vmatprep.subr.mxu0 0.0
    %704 = vmatpush1.msra.mxu0 0.0
    %705 = vmatprep.mubr.f32.mxu0 0.0
    %706 = vmatmul.mubr.f32.gmra.mrb[0].mxu0 %v639
    %v707 = vpop.f32.mrb[0].mxu0
    %v708 = vadd.f32 0.0, %v707
    %v709 = vpop.f32.mrb[0].mxu0
    %710 = vdwg.mxu0
    %711 = vmatprep.subr.mxu0 0.0
    %712 = vmatpush1.msra.mxu0 %v362
    %713 = vmatprep.subr.mxu0 0.0
    %714 = vmatpush1.msra.mxu0 %v363
    %715 = vmatprep.subr.mxu0 0.0
    %716 = vmatpush1.msra.mxu0 %v364
    %717 = vmatprep.subr.mxu0 0.0
    %718 = vmatpush1.msra.mxu0 %v365
    %719 = vmatprep.subr.mxu0 0.0
    %720 = vmatpush1.msra.mxu0 0.0
    %721 = vmatprep.subr.mxu0 0.0
    %722 = vmatpush1.msra.mxu0 0.0
    %723 = vmatprep.subr.mxu0 0.0
    %724 = vmatpush1.msra.mxu0 0.0
    %725 = vmatprep.subr.mxu0 0.0
    %726 = vmatpush1.msra.mxu0 0.0
    %727 = vmatprep.subr.mxu0 0.0
    %728 = vmatpush1.msra.mxu0 0.0
    %729 = vmatprep.subr.mxu0 0.0
    %730 = vmatpush1.msra.mxu0 0.0
    %731 = vmatprep.subr.mxu0 0.0
    %732 = vmatpush1.msra.mxu0 0.0
    %733 = vmatprep.subr.mxu0 0.0
    %734 = vmatpush1.msra.mxu0 0.0
    %735 = vmatprep.subr.mxu0 0.0
    %736 = vmatpush1.msra.mxu0 0.0
    %737 = vmatprep.subr.mxu0 0.0
    %738 = vmatpush1.msra.mxu0 0.0
    %739 = vmatprep.subr.mxu0 0.0
    %740 = vmatpush1.msra.mxu0 0.0
    %741 = vmatprep.subr.mxu0 0.0
    %742 = vmatpush1.msra.mxu0 0.0
    %743 = vmatprep.subr.mxu0 0.0
    %744 = vmatpush1.msra.mxu0 0.0
    %745 = vmatprep.subr.mxu0 0.0
    %746 = vmatpush1.msra.mxu0 0.0
    %747 = vmatprep.subr.mxu0 0.0
    %748 = vmatpush1.msra.mxu0 0.0
    %749 = vmatprep.subr.mxu0 0.0
    %750 = vmatpush1.msra.mxu0 0.0
    %751 = vmatprep.subr.mxu0 0.0
    %752 = vmatpush1.msra.mxu0 0.0
    %753 = vmatprep.subr.mxu0 0.0
    %754 = vmatpush1.msra.mxu0 0.0
    %755 = vmatprep.subr.mxu0 0.0
    %756 = vmatpush1.msra.mxu0 0.0
    %757 = vmatprep.subr.mxu0 0.0
    %758 = vmatpush1.msra.mxu0 0.0
    %759 = vmatprep.subr.mxu0 0.0
    %760 = vmatpush1.msra.mxu0 0.0
    %761 = vmatprep.subr.mxu0 0.0
    %762 = vmatpush1.msra.mxu0 0.0
    %763 = vmatprep.subr.mxu0 0.0
    %764 = vmatpush1.msra.mxu0 0.0
    %765 = vmatprep.subr.mxu0 0.0
    %766 = vmatpush1.msra.mxu0 0.0
    %767 = vmatprep.subr.mxu0 0.0
    %768 = vmatpush1.msra.mxu0 0.0
    %769 = vmatprep.subr.mxu0 0.0
    %770 = vmatpush1.msra.mxu0 0.0
    %771 = vmatprep.subr.mxu0 0.0
    %772 = vmatpush1.msra.mxu0 0.0
    %773 = vmatprep.subr.mxu0 0.0
    %774 = vmatpush1.msra.mxu0 0.0
    %775 = vmatprep.mubr.f32.mxu0 0.0
    %776 = vmatmul.mubr.f32.gmra.mrb[0].mxu0 %v639
    %v777 = vpop.f32.mrb[0].mxu0
    %v778 = vadd.f32 0.0, %v777
    %v779 = vpop.f32.mrb[0].mxu0
    %780 = vdwg.mxu0
    %v782 = vlaneseq
    %v783 = vshrl.u32 %v782, 7
    %v784 = vsub.s32 0, %v783
    %v785 = vrot.slane %v370, %v784
    %787 = vmatprep.subr.mxu0 0.0
    %788 = vmatpush1.msra.mxu0 %v366
    %789 = vmatprep.subr.mxu0 0.0
    %790 = vmatpush1.msra.mxu0 %v367
    %791 = vmatprep.subr.mxu0 0.0
    %792 = vmatpush1.msra.mxu0 %v368
    %793 = vmatprep.subr.mxu0 0.0
    %794 = vmatpush1.msra.mxu0 %v369
    %795 = vmatprep.subr.mxu0 0.0
    %796 = vmatpush1.msra.mxu0 0.0
    %797 = vmatprep.subr.mxu0 0.0
    %798 = vmatpush1.msra.mxu0 0.0
    %799 = vmatprep.subr.mxu0 0.0
    %800 = vmatpush1.msra.mxu0 0.0
    %801 = vmatprep.subr.mxu0 0.0
    %802 = vmatpush1.msra.mxu0 0.0
    %803 = vmatprep.subr.mxu0 0.0
    %804 = vmatpush1.msra.mxu0 0.0
    %805 = vmatprep.subr.mxu0 0.0
    %806 = vmatpush1.msra.mxu0 0.0
    %807 = vmatprep.subr.mxu0 0.0
    %808 = vmatpush1.msra.mxu0 0.0
    %809 = vmatprep.subr.mxu0 0.0
    %810 = vmatpush1.msra.mxu0 0.0
    %811 = vmatprep.subr.mxu0 0.0
    %812 = vmatpush1.msra.mxu0 0.0
    %813 = vmatprep.subr.mxu0 0.0
    %814 = vmatpush1.msra.mxu0 0.0
    %815 = vmatprep.subr.mxu0 0.0
    %816 = vmatpush1.msra.mxu0 0.0
    %817 = vmatprep.subr.mxu0 0.0
    %818 = vmatpush1.msra.mxu0 0.0
    %819 = vmatprep.subr.mxu0 0.0
    %820 = vmatpush1.msra.mxu0 0.0
    %821 = vmatprep.subr.mxu0 0.0
    %822 = vmatpush1.msra.mxu0 0.0
    %823 = vmatprep.subr.mxu0 0.0
    %824 = vmatpush1.msra.mxu0 0.0
    %825 = vmatprep.subr.mxu0 0.0
    %826 = vmatpush1.msra.mxu0 0.0
    %827 = vmatprep.subr.mxu0 0.0
    %828 = vmatpush1.msra.mxu0 0.0
    %829 = vmatprep.subr.mxu0 0.0
    %830 = vmatpush1.msra.mxu0 0.0
    %831 = vmatprep.subr.mxu0 0.0
    %832 = vmatpush1.msra.mxu0 0.0
    %833 = vmatprep.subr.mxu0 0.0
    %834 = vmatpush1.msra.mxu0 0.0
    %835 = vmatprep.subr.mxu0 0.0
    %836 = vmatpush1.msra.mxu0 0.0
    %837 = vmatprep.subr.mxu0 0.0
    %838 = vmatpush1.msra.mxu0 0.0
    %839 = vmatprep.subr.mxu0 0.0
    %840 = vmatpush1.msra.mxu0 0.0
    %841 = vmatprep.subr.mxu0 0.0
    %842 = vmatpush1.msra.mxu0 0.0
    %843 = vmatprep.subr.mxu0 0.0
    %844 = vmatpush1.msra.mxu0 0.0
    %845 = vmatprep.subr.mxu0 0.0
    %846 = vmatpush1.msra.mxu0 0.0
    %847 = vmatprep.subr.mxu0 0.0
    %848 = vmatpush1.msra.mxu0 0.0
    %849 = vmatprep.subr.mxu0 0.0
    %850 = vmatpush1.msra.mxu0 0.0
    %851 = vmatprep.mubr.f32.mxu0 0.0
    %852 = vmatmul.mubr.f32.gmra.mrb[0].mxu0 %v639
    %v853 = vpop.f32.mrb[0].mxu0
    %v854 = vadd.f32 %v785, %v853
    %v855 = vpop.f32.mrb[0].mxu0
    %856 = vdwg.mxu0
    %v857 = vadd.f32 %v457, %v708
    %v858 = vxor.u32 %v857, 2147483648
    %v859 = vmul.f32 %v858, 1.442695
    %v860 = vpow.pop %v859
    %v861 = vadd.f32 %v860, 1.0
    %v862 = vrcp.pop %v861
    %v863 = vmul.f32 1.0, %v862
    %v864 = vadd.f32 %v543, %v778
    %v865 = vxor.u32 %v864, 2147483648
    %v866 = vmul.f32 %v865, 1.442695
    %v867 = vpow.pop %v866
    %v868 = vadd.f32 %v867, 1.0
    %v869 = vrcp.pop %v868
    %v870 = vmul.f32 1.0, %v869
    %v871 = vmul.f32 %v863, %v854
    %v872 = vadd.f32 %v629, %v871
    %v873 = vtanh.pop %v872
    %v874 = vsub.f32 1.0, %v870
    %v875 = vmul.f32 %v874, %v873
    %v876 = vmul.f32 %v870, 0.0
    %v877 = vadd.f32 %v875, %v876
    %vm878 = vcmask 254976
    %879 = vst.msk [vmem:[#allocation2] sm:$0x3] %vm878, %v877
    %v881 = vsel %vm637, %v877, 0
    %883 = vmatprep.subr.mxu0 0.0
    %884 = vmatpush1.msra.mxu0 %v358
    %885 = vmatprep.subr.mxu0 0.0
    %886 = vmatpush1.msra.mxu0 %v359
    %887 = vmatprep.subr.mxu0 0.0
    %888 = vmatpush1.msra.mxu0 %v360
    %889 = vmatprep.subr.mxu0 0.0
    %890 = vmatpush1.msra.mxu0 %v361
    %891 = vmatprep.subr.mxu0 0.0
    %892 = vmatpush1.msra.mxu0 0.0
    %893 = vmatprep.subr.mxu0 0.0
    %894 = vmatpush1.msra.mxu0 0.0
    %895 = vmatprep.subr.mxu0 0.0
    %896 = vmatpush1.msra.mxu0 0.0
    %897 = vmatprep.subr.mxu0 0.0
    %898 = vmatpush1.msra.mxu0 0.0
    %899 = vmatprep.subr.mxu0 0.0
    %900 = vmatpush1.msra.mxu0 0.0
    %901 = vmatprep.subr.mxu0 0.0
    %902 = vmatpush1.msra.mxu0 0.0
    %903 = vmatprep.subr.mxu0 0.0
    %904 = vmatpush1.msra.mxu0 0.0
    %905 = vmatprep.subr.mxu0 0.0
    %906 = vmatpush1.msra.mxu0 0.0
    %907 = vmatprep.subr.mxu0 0.0
    %908 = vmatpush1.msra.mxu0 0.0
    %909 = vmatprep.subr.mxu0 0.0
    %910 = vmatpush1.msra.mxu0 0.0
    %911 = vmatprep.subr.mxu0 0.0
    %912 = vmatpush1.msra.mxu0 0.0
    %913 = vmatprep.subr.mxu0 0.0
    %914 = vmatpush1.msra.mxu0 0.0
    %915 = vmatprep.subr.mxu0 0.0
    %916 = vmatpush1.msra.mxu0 0.0
    %917 = vmatprep.subr.mxu0 0.0
    %918 = vmatpush1.msra.mxu0 0.0
    %919 = vmatprep.subr.mxu0 0.0
    %920 = vmatpush1.msra.mxu0 0.0
    %921 = vmatprep.subr.mxu0 0.0
    %922 = vmatpush1.msra.mxu0 0.0
    %923 = vmatprep.subr.mxu0 0.0
    %924 = vmatpush1.msra.mxu0 0.0
    %925 = vmatprep.subr.mxu0 0.0
    %926 = vmatpush1.msra.mxu0 0.0
    %927 = vmatprep.subr.mxu0 0.0
    %928 = vmatpush1.msra.mxu0 0.0
    %929 = vmatprep.subr.mxu0 0.0
    %930 = vmatpush1.msra.mxu0 0.0
    %931 = vmatprep.subr.mxu0 0.0
    %932 = vmatpush1.msra.mxu0 0.0
    %933 = vmatprep.subr.mxu0 0.0
    %934 = vmatpush1.msra.mxu0 0.0
    %935 = vmatprep.subr.mxu0 0.0
    %936 = vmatpush1.msra.mxu0 0.0
    %937 = vmatprep.subr.mxu0 0.0
    %938 = vmatpush1.msra.mxu0 0.0
    %939 = vmatprep.subr.mxu0 0.0
    %940 = vmatpush1.msra.mxu0 0.0
    %941 = vmatprep.subr.mxu0 0.0
    %942 = vmatpush1.msra.mxu0 0.0
    %943 = vmatprep.subr.mxu0 0.0
    %944 = vmatpush1.msra.mxu0 0.0
    %945 = vmatprep.subr.mxu0 0.0
    %946 = vmatpush1.msra.mxu0 0.0
    %947 = vmatprep.mubr.f32.mxu0 0.0
    %948 = vmatmul.mubr.f32.gmra.mrb[0].mxu0 %v881
    %v949 = vpop.f32.mrb[0].mxu0
    %v950 = vadd.f32 0.0, %v949
    %v951 = vpop.f32.mrb[0].mxu0
    %952 = vdwg.mxu0
    %953 = vmatprep.subr.mxu0 0.0
    %954 = vmatpush1.msra.mxu0 %v362
    %955 = vmatprep.subr.mxu0 0.0
    %956 = vmatpush1.msra.mxu0 %v363
    %957 = vmatprep.subr.mxu0 0.0
    %958 = vmatpush1.msra.mxu0 %v364
    %959 = vmatprep.subr.mxu0 0.0
    %960 = vmatpush1.msra.mxu0 %v365
    %961 = vmatprep.subr.mxu0 0.0
    %962 = vmatpush1.msra.mxu0 0.0
    %963 = vmatprep.subr.mxu0 0.0
    %964 = vmatpush1.msra.mxu0 0.0
    %965 = vmatprep.subr.mxu0 0.0
    %966 = vmatpush1.msra.mxu0 0.0
    %967 = vmatprep.subr.mxu0 0.0
    %968 = vmatpush1.msra.mxu0 0.0
    %969 = vmatprep.subr.mxu0 0.0
    %970 = vmatpush1.msra.mxu0 0.0
    %971 = vmatprep.subr.mxu0 0.0
    %972 = vmatpush1.msra.mxu0 0.0
    %973 = vmatprep.subr.mxu0 0.0
    %974 = vmatpush1.msra.mxu0 0.0
    %975 = vmatprep.subr.mxu0 0.0
    %976 = vmatpush1.msra.mxu0 0.0
    %977 = vmatprep.subr.mxu0 0.0
    %978 = vmatpush1.msra.mxu0 0.0
    %979 = vmatprep.subr.mxu0 0.0
    %980 = vmatpush1.msra.mxu0 0.0
    %981 = vmatprep.subr.mxu0 0.0
    %982 = vmatpush1.msra.mxu0 0.0
    %983 = vmatprep.subr.mxu0 0.0
    %984 = vmatpush1.msra.mxu0 0.0
    %985 = vmatprep.subr.mxu0 0.0
    %986 = vmatpush1.msra.mxu0 0.0
    %987 = vmatprep.subr.mxu0 0.0
    %988 = vmatpush1.msra.mxu0 0.0
    %989 = vmatprep.subr.mxu0 0.0
    %990 = vmatpush1.msra.mxu0 0.0
    %991 = vmatprep.subr.mxu0 0.0
    %992 = vmatpush1.msra.mxu0 0.0
    %993 = vmatprep.subr.mxu0 0.0
    %994 = vmatpush1.msra.mxu0 0.0
    %995 = vmatprep.subr.mxu0 0.0
    %996 = vmatpush1.msra.mxu0 0.0
    %997 = vmatprep.subr.mxu0 0.0
    %998 = vmatpush1.msra.mxu0 0.0
    %999 = vmatprep.subr.mxu0 0.0
    %1000 = vmatpush1.msra.mxu0 0.0
    %1001 = vmatprep.subr.mxu0 0.0
    %1002 = vmatpush1.msra.mxu0 0.0
    %1003 = vmatprep.subr.mxu0 0.0
    %1004 = vmatpush1.msra.mxu0 0.0
    %1005 = vmatprep.subr.mxu0 0.0
    %1006 = vmatpush1.msra.mxu0 0.0
    %1007 = vmatprep.subr.mxu0 0.0
    %1008 = vmatpush1.msra.mxu0 0.0
    %1009 = vmatprep.subr.mxu0 0.0
    %1010 = vmatpush1.msra.mxu0 0.0
    %1011 = vmatprep.subr.mxu0 0.0
    %1012 = vmatpush1.msra.mxu0 0.0
    %1013 = vmatprep.subr.mxu0 0.0
    %1014 = vmatpush1.msra.mxu0 0.0
    %1015 = vmatprep.subr.mxu0 0.0
    %1016 = vmatpush1.msra.mxu0 0.0
    %1017 = vmatprep.mubr.f32.mxu0 0.0
    %1018 = vmatmul.mubr.f32.gmra.mrb[0].mxu0 %v881
    %v1019 = vpop.f32.mrb[0].mxu0
    %v1020 = vadd.f32 0.0, %v1019
    %v1021 = vpop.f32.mrb[0].mxu0
    %1022 = vdwg.mxu0
    %1023 = vmatprep.subr.mxu0 0.0
    %1024 = vmatpush1.msra.mxu0 %v366
    %1025 = vmatprep.subr.mxu0 0.0
    %1026 = vmatpush1.msra.mxu0 %v367
    %1027 = vmatprep.subr.mxu0 0.0
    %1028 = vmatpush1.msra.mxu0 %v368
    %1029 = vmatprep.subr.mxu0 0.0
    %1030 = vmatpush1.msra.mxu0 %v369
    %1031 = vmatprep.subr.mxu0 0.0
    %1032 = vmatpush1.msra.mxu0 0.0
    %1033 = vmatprep.subr.mxu0 0.0
    %1034 = vmatpush1.msra.mxu0 0.0
    %1035 = vmatprep.subr.mxu0 0.0
    %1036 = vmatpush1.msra.mxu0 0.0
    %1037 = vmatprep.subr.mxu0 0.0
    %1038 = vmatpush1.msra.mxu0 0.0
    %1039 = vmatprep.subr.mxu0 0.0
    %1040 = vmatpush1.msra.mxu0 0.0
    %1041 = vmatprep.subr.mxu0 0.0
    %1042 = vmatpush1.msra.mxu0 0.0
    %1043 = vmatprep.subr.mxu0 0.0
    %1044 = vmatpush1.msra.mxu0 0.0
    %1045 = vmatprep.subr.mxu0 0.0
    %1046 = vmatpush1.msra.mxu0 0.0
    %1047 = vmatprep.subr.mxu0 0.0
    %1048 = vmatpush1.msra.mxu0 0.0
    %1049 = vmatprep.subr.mxu0 0.0
    %1050 = vmatpush1.msra.mxu0 0.0
    %1051 = vmatprep.subr.mxu0 0.0
    %1052 = vmatpush1.msra.mxu0 0.0
    %1053 = vmatprep.subr.mxu0 0.0
    %1054 = vmatpush1.msra.mxu0 0.0
    %1055 = vmatprep.subr.mxu0 0.0
    %1056 = vmatpush1.msra.mxu0 0.0
    %1057 = vmatprep.subr.mxu0 0.0
    %1058 = vmatpush1.msra.mxu0 0.0
    %1059 = vmatprep.subr.mxu0 0.0
    %1060 = vmatpush1.msra.mxu0 0.0
    %1061 = vmatprep.subr.mxu0 0.0
    %1062 = vmatpush1.msra.mxu0 0.0
    %1063 = vmatprep.subr.mxu0 0.0
    %1064 = vmatpush1.msra.mxu0 0.0
    %1065 = vmatprep.subr.mxu0 0.0
    %1066 = vmatpush1.msra.mxu0 0.0
    %1067 = vmatprep.subr.mxu0 0.0
    %1068 = vmatpush1.msra.mxu0 0.0
    %1069 = vmatprep.subr.mxu0 0.0
    %1070 = vmatpush1.msra.mxu0 0.0
    %1071 = vmatprep.subr.mxu0 0.0
    %1072 = vmatpush1.msra.mxu0 0.0
    %1073 = vmatprep.subr.mxu0 0.0
    %1074 = vmatpush1.msra.mxu0 0.0
    %1075 = vmatprep.subr.mxu0 0.0
    %1076 = vmatpush1.msra.mxu0 0.0
    %1077 = vmatprep.subr.mxu0 0.0
    %1078 = vmatpush1.msra.mxu0 0.0
    %1079 = vmatprep.subr.mxu0 0.0
    %1080 = vmatpush1.msra.mxu0 0.0
    %1081 = vmatprep.subr.mxu0 0.0
    %1082 = vmatpush1.msra.mxu0 0.0
    %1083 = vmatprep.subr.mxu0 0.0
    %1084 = vmatpush1.msra.mxu0 0.0
    %1085 = vmatprep.subr.mxu0 0.0
    %1086 = vmatpush1.msra.mxu0 0.0
    %1087 = vmatprep.mubr.f32.mxu0 0.0
    %1088 = vmatmul.mubr.f32.gmra.mrb[0].mxu0 %v881
    %v1089 = vpop.f32.mrb[0].mxu0
    %v1090 = vadd.f32 %v785, %v1089
    %v1091 = vpop.f32.mrb[0].mxu0
    %1092 = vdwg.mxu0
    %v1094 = vrot.slane %v950, 6
    %v1096 = vadd.f32 %v457, %v1094
    %v1097 = vxor.u32 %v1096, 2147483648
    %v1098 = vmul.f32 %v1097, 1.442695
    %v1099 = vpow.pop %v1098
    %v1100 = vadd.f32 %v1099, 1.0
    %v1101 = vrcp.pop %v1100
    %v1102 = vmul.f32 1.0, %v1101
    %v1104 = vrot.slane %v1020, 6
    %v1106 = vadd.f32 %v543, %v1104
    %v1107 = vxor.u32 %v1106, 2147483648
    %v1108 = vmul.f32 %v1107, 1.442695
    %v1109 = vpow.pop %v1108
    %v1110 = vadd.f32 %v1109, 1.0
    %v1111 = vrcp.pop %v1110
    %v1112 = vmul.f32 1.0, %v1111
    %v1114 = vrot.slane %v1090, 6
    %v1116 = vmul.f32 %v1102, %v1114
    %v1117 = vadd.f32 %v629, %v1116
    %v1118 = vtanh.pop %v1117
    %v1119 = vsub.f32 1.0, %v1112
    %v1120 = vmul.f32 %v1119, %v1118
    %v1121 = vrot.slane %v877, 6
    %v1123 = vmul.f32 %v1112, %v1121
    %v1124 = vadd.f32 %v1120, %v1123
    %vm1125 = vcmask 257026
    %1126 = vst.msk [vmem:[#allocation2] sm:$0xc] %vm1125, %v1124
    %v1128 = vrot.slane %v1124, 2
    %v1129 = vsel %vm637, %v1128, 0
    %1131 = vmatprep.subr.mxu0 0.0
    %1132 = vmatpush1.msra.mxu0 %v358
    %1133 = vmatprep.subr.mxu0 0.0
    %1134 = vmatpush1.msra.mxu0 %v359
    %1135 = vmatprep.subr.mxu0 0.0
    %1136 = vmatpush1.msra.mxu0 %v360
    %1137 = vmatprep.subr.mxu0 0.0
    %1138 = vmatpush1.msra.mxu0 %v361
    %1139 = vmatprep.subr.mxu0 0.0
    %1140 = vmatpush1.msra.mxu0 0.0
    %1141 = vmatprep.subr.mxu0 0.0
    %1142 = vmatpush1.msra.mxu0 0.0
    %1143 = vmatprep.subr.mxu0 0.0
    %1144 = vmatpush1.msra.mxu0 0.0
    %1145 = vmatprep.subr.mxu0 0.0
    %1146 = vmatpush1.msra.mxu0 0.0
    %1147 = vmatprep.subr.mxu0 0.0
    %1148 = vmatpush1.msra.mxu0 0.0
    %1149 = vmatprep.subr.mxu0 0.0
    %1150 = vmatpush1.msra.mxu0 0.0
    %1151 = vmatprep.subr.mxu0 0.0
    %1152 = vmatpush1.msra.mxu0 0.0
    %1153 = vmatprep.subr.mxu0 0.0
    %1154 = vmatpush1.msra.mxu0 0.0
    %1155 = vmatprep.subr.mxu0 0.0
    %1156 = vmatpush1.msra.mxu0 0.0
    %1157 = vmatprep.subr.mxu0 0.0
    %1158 = vmatpush1.msra.mxu0 0.0
    %1159 = vmatprep.subr.mxu0 0.0
    %1160 = vmatpush1.msra.mxu0 0.0
    %1161 = vmatprep.subr.mxu0 0.0
    %1162 = vmatpush1.msra.mxu0 0.0
    %1163 = vmatprep.subr.mxu0 0.0
    %1164 = vmatpush1.msra.mxu0 0.0
    %1165 = vmatprep.subr.mxu0 0.0
    %1166 = vmatpush1.msra.mxu0 0.0
    %1167 = vmatprep.subr.mxu0 0.0
    %1168 = vmatpush1.msra.mxu0 0.0
    %1169 = vmatprep.subr.mxu0 0.0
    %1170 = vmatpush1.msra.mxu0 0.0
    %1171 = vmatprep.subr.mxu0 0.0
    %1172 = vmatpush1.msra.mxu0 0.0
    %1173 = vmatprep.subr.mxu0 0.0
    %1174 = vmatpush1.msra.mxu0 0.0
    %1175 = vmatprep.subr.mxu0 0.0
    %1176 = vmatpush1.msra.mxu0 0.0
    %1177 = vmatprep.subr.mxu0 0.0
    %1178 = vmatpush1.msra.mxu0 0.0
    %1179 = vmatprep.subr.mxu0 0.0
    %1180 = vmatpush1.msra.mxu0 0.0
    %1181 = vmatprep.subr.mxu0 0.0
    %1182 = vmatpush1.msra.mxu0 0.0
    %1183 = vmatprep.subr.mxu0 0.0
    %1184 = vmatpush1.msra.mxu0 0.0
    %1185 = vmatprep.subr.mxu0 0.0
    %1186 = vmatpush1.msra.mxu0 0.0
    %1187 = vmatprep.subr.mxu0 0.0
    %1188 = vmatpush1.msra.mxu0 0.0
    %1189 = vmatprep.subr.mxu0 0.0
    %1190 = vmatpush1.msra.mxu0 0.0
    %1191 = vmatprep.subr.mxu0 0.0
    %1192 = vmatpush1.msra.mxu0 0.0
    %1193 = vmatprep.subr.mxu0 0.0
    %1194 = vmatpush1.msra.mxu0 0.0
    %1195 = vmatprep.mubr.f32.mxu0 0.0
    %1196 = vmatmul.mubr.f32.gmra.mrb[0].mxu0 %v1129
    %v1197 = vpop.f32.mrb[0].mxu0
    %v1198 = vadd.f32 0.0, %v1197
    %v1199 = vpop.f32.mrb[0].mxu0
    %1200 = vdwg.mxu0
    %1201 = vmatprep.subr.mxu0 0.0
    %1202 = vmatpush1.msra.mxu0 %v362
    %1203 = vmatprep.subr.mxu0 0.0
    %1204 = vmatpush1.msra.mxu0 %v363
    %1205 = vmatprep.subr.mxu0 0.0
    %1206 = vmatpush1.msra.mxu0 %v364
    %1207 = vmatprep.subr.mxu0 0.0
    %1208 = vmatpush1.msra.mxu0 %v365
    %1209 = vmatprep.subr.mxu0 0.0
    %1210 = vmatpush1.msra.mxu0 0.0
    %1211 = vmatprep.subr.mxu0 0.0
    %1212 = vmatpush1.msra.mxu0 0.0
    %1213 = vmatprep.subr.mxu0 0.0
    %1214 = vmatpush1.msra.mxu0 0.0
    %1215 = vmatprep.subr.mxu0 0.0
    %1216 = vmatpush1.msra.mxu0 0.0
    %1217 = vmatprep.subr.mxu0 0.0
    %1218 = vmatpush1.msra.mxu0 0.0
    %1219 = vmatprep.subr.mxu0 0.0
    %1220 = vmatpush1.msra.mxu0 0.0
    %1221 = vmatprep.subr.mxu0 0.0
    %1222 = vmatpush1.msra.mxu0 0.0
    %1223 = vmatprep.subr.mxu0 0.0
    %1224 = vmatpush1.msra.mxu0 0.0
    %1225 = vmatprep.subr.mxu0 0.0
    %1226 = vmatpush1.msra.mxu0 0.0
    %1227 = vmatprep.subr.mxu0 0.0
    %1228 = vmatpush1.msra.mxu0 0.0
    %1229 = vmatprep.subr.mxu0 0.0
    %1230 = vmatpush1.msra.mxu0 0.0
    %1231 = vmatprep.subr.mxu0 0.0
    %1232 = vmatpush1.msra.mxu0 0.0
    %1233 = vmatprep.subr.mxu0 0.0
    %1234 = vmatpush1.msra.mxu0 0.0
    %1235 = vmatprep.subr.mxu0 0.0
    %1236 = vmatpush1.msra.mxu0 0.0
    %1237 = vmatprep.subr.mxu0 0.0
    %1238 = vmatpush1.msra.mxu0 0.0
    %1239 = vmatprep.subr.mxu0 0.0
    %1240 = vmatpush1.msra.mxu0 0.0
    %1241 = vmatprep.subr.mxu0 0.0
    %1242 = vmatpush1.msra.mxu0 0.0
    %1243 = vmatprep.subr.mxu0 0.0
    %1244 = vmatpush1.msra.mxu0 0.0
    %1245 = vmatprep.subr.mxu0 0.0
    %1246 = vmatpush1.msra.mxu0 0.0
    %1247 = vmatprep.subr.mxu0 0.0
    %1248 = vmatpush1.msra.mxu0 0.0
    %1249 = vmatprep.subr.mxu0 0.0
    %1250 = vmatpush1.msra.mxu0 0.0
    %1251 = vmatprep.subr.mxu0 0.0
    %1252 = vmatpush1.msra.mxu0 0.0
    %1253 = vmatprep.subr.mxu0 0.0
    %1254 = vmatpush1.msra.mxu0 0.0
    %1255 = vmatprep.subr.mxu0 0.0
    %1256 = vmatpush1.msra.mxu0 0.0
    %1257 = vmatprep.subr.mxu0 0.0
    %1258 = vmatpush1.msra.mxu0 0.0
    %1259 = vmatprep.subr.mxu0 0.0
    %1260 = vmatpush1.msra.mxu0 0.0
    %1261 = vmatprep.subr.mxu0 0.0
    %1262 = vmatpush1.msra.mxu0 0.0
    %1263 = vmatprep.subr.mxu0 0.0
    %1264 = vmatpush1.msra.mxu0 0.0
    %1265 = vmatprep.mubr.f32.mxu0 0.0
    %1266 = vmatmul.mubr.f32.gmra.mrb[0].mxu0 %v1129
    %v1267 = vpop.f32.mrb[0].mxu0
    %v1268 = vadd.f32 0.0, %v1267
    %v1269 = vpop.f32.mrb[0].mxu0
    %1270 = vdwg.mxu0
    %1271 = vmatprep.subr.mxu0 0.0
    %1272 = vmatpush1.msra.mxu0 %v366
    %1273 = vmatprep.subr.mxu0 0.0
    %1274 = vmatpush1.msra.mxu0 %v367
    %1275 = vmatprep.subr.mxu0 0.0
    %1276 = vmatpush1.msra.mxu0 %v368
    %1277 = vmatprep.subr.mxu0 0.0
    %1278 = vmatpush1.msra.mxu0 %v369
    %1279 = vmatprep.subr.mxu0 0.0
    %1280 = vmatpush1.msra.mxu0 0.0
    %1281 = vmatprep.subr.mxu0 0.0
    %1282 = vmatpush1.msra.mxu0 0.0
    %1283 = vmatprep.subr.mxu0 0.0
    %1284 = vmatpush1.msra.mxu0 0.0
    %1285 = vmatprep.subr.mxu0 0.0
    %1286 = vmatpush1.msra.mxu0 0.0
    %1287 = vmatprep.subr.mxu0 0.0
    %1288 = vmatpush1.msra.mxu0 0.0
    %1289 = vmatprep.subr.mxu0 0.0
    %1290 = vmatpush1.msra.mxu0 0.0
    %1291 = vmatprep.subr.mxu0 0.0
    %1292 = vmatpush1.msra.mxu0 0.0
    %1293 = vmatprep.subr.mxu0 0.0
    %1294 = vmatpush1.msra.mxu0 0.0
    %1295 = vmatprep.subr.mxu0 0.0
    %1296 = vmatpush1.msra.mxu0 0.0
    %1297 = vmatprep.subr.mxu0 0.0
    %1298 = vmatpush1.msra.mxu0 0.0
    %1299 = vmatprep.subr.mxu0 0.0
    %1300 = vmatpush1.msra.mxu0 0.0
    %1301 = vmatprep.subr.mxu0 0.0
    %1302 = vmatpush1.msra.mxu0 0.0
    %1303 = vmatprep.subr.mxu0 0.0
    %1304 = vmatpush1.msra.mxu0 0.0
    %1305 = vmatprep.subr.mxu0 0.0
    %1306 = vmatpush1.msra.mxu0 0.0
    %1307 = vmatprep.subr.mxu0 0.0
    %1308 = vmatpush1.msra.mxu0 0.0
    %1309 = vmatprep.subr.mxu0 0.0
    %1310 = vmatpush1.msra.mxu0 0.0
    %1311 = vmatprep.subr.mxu0 0.0
    %1312 = vmatpush1.msra.mxu0 0.0
    %1313 = vmatprep.subr.mxu0 0.0
    %1314 = vmatpush1.msra.mxu0 0.0
    %1315 = vmatprep.subr.mxu0 0.0
    %1316 = vmatpush1.msra.mxu0 0.0
    %1317 = vmatprep.subr.mxu0 0.0
    %1318 = vmatpush1.msra.mxu0 0.0
    %1319 = vmatprep.subr.mxu0 0.0
    %1320 = vmatpush1.msra.mxu0 0.0
    %1321 = vmatprep.subr.mxu0 0.0
    %1322 = vmatpush1.msra.mxu0 0.0
    %1323 = vmatprep.subr.mxu0 0.0
    %1324 = vmatpush1.msra.mxu0 0.0
    %1325 = vmatprep.subr.mxu0 0.0
    %1326 = vmatpush1.msra.mxu0 0.0
    %1327 = vmatprep.subr.mxu0 0.0
    %1328 = vmatpush1.msra.mxu0 0.0
    %1329 = vmatprep.subr.mxu0 0.0
    %1330 = vmatpush1.msra.mxu0 0.0
    %1331 = vmatprep.subr.mxu0 0.0
    %1332 = vmatpush1.msra.mxu0 0.0
    %1333 = vmatprep.subr.mxu0 0.0
    %1334 = vmatpush1.msra.mxu0 0.0
    %1335 = vmatprep.mubr.f32.mxu0 0.0
    %1336 = vmatmul.mubr.f32.gmra.mrb[0].mxu0 %v1129
    %v1337 = vpop.f32.mrb[0].mxu0
    %v1338 = vadd.f32 %v785, %v1337
    %v1339 = vpop.f32.mrb[0].mxu0
    %1340 = vdwg.mxu0
    %v1342 = vrot.slane %v1198, 4
    %v1344 = vadd.f32 %v457, %v1342
    %v1345 = vxor.u32 %v1344, 2147483648
    %v1346 = vmul.f32 %v1345, 1.442695
    %v1347 = vpow.pop %v1346
    %v1348 = vadd.f32 %v1347, 1.0
    %v1349 = vrcp.pop %v1348
    %v1350 = vmul.f32 1.0, %v1349
    %v1352 = vrot.slane %v1268, 4
    %v1354 = vadd.f32 %v543, %v1352
    %v1355 = vxor.u32 %v1354, 2147483648
    %v1356 = vmul.f32 %v1355, 1.442695
    %v1357 = vpow.pop %v1356
    %v1358 = vadd.f32 %v1357, 1.0
    %v1359 = vrcp.pop %v1358
    %v1360 = vmul.f32 1.0, %v1359
    %v1362 = vrot.slane %v1338, 4
    %v1364 = vmul.f32 %v1350, %v1362
    %v1365 = vadd.f32 %v629, %v1364
    %v1366 = vtanh.pop %v1365
    %v1367 = vsub.f32 1.0, %v1360
    %v1368 = vmul.f32 %v1367, %v1366
    %v1369 = vrot.slane %v1124, 6
    %v1371 = vmul.f32 %v1360, %v1369
    %v1372 = vadd.f32 %v1368, %v1371
    %vm1373 = vcmask 259076
    %1374 = vst.msk [vmem:[#allocation2] sm:$0x30] %vm1373, %v1372
    %v1376 = vrot.slane %v1372, 4
    %v1377 = vsel %vm637, %v1376, 0
    %1379 = vmatprep.subr.mxu0 0.0
    %1380 = vmatpush1.msra.mxu0 %v358
    %1381 = vmatprep.subr.mxu0 0.0
    %1382 = vmatpush1.msra.mxu0 %v359
    %1383 = vmatprep.subr.mxu0 0.0
    %1384 = vmatpush1.msra.mxu0 %v360
    %1385 = vmatprep.subr.mxu0 0.0
    %1386 = vmatpush1.msra.mxu0 %v361
    %1387 = vmatprep.subr.mxu0 0.0
    %1388 = vmatpush1.msra.mxu0 0.0
    %1389 = vmatprep.subr.mxu0 0.0
    %1390 = vmatpush1.msra.mxu0 0.0
    %1391 = vmatprep.subr.mxu0 0.0
    %1392 = vmatpush1.msra.mxu0 0.0
    %1393 = vmatprep.subr.mxu0 0.0
    %1394 = vmatpush1.msra.mxu0 0.0
    %1395 = vmatprep.subr.mxu0 0.0
    %1396 = vmatpush1.msra.mxu0 0.0
    %1397 = vmatprep.subr.mxu0 0.0
    %1398 = vmatpush1.msra.mxu0 0.0
    %1399 = vmatprep.subr.mxu0 0.0
    %1400 = vmatpush1.msra.mxu0 0.0
    %1401 = vmatprep.subr.mxu0 0.0
    %1402 = vmatpush1.msra.mxu0 0.0
    %1403 = vmatprep.subr.mxu0 0.0
    %1404 = vmatpush1.msra.mxu0 0.0
    %1405 = vmatprep.subr.mxu0 0.0
    %1406 = vmatpush1.msra.mxu0 0.0
    %1407 = vmatprep.subr.mxu0 0.0
    %1408 = vmatpush1.msra.mxu0 0.0
    %1409 = vmatprep.subr.mxu0 0.0
    %1410 = vmatpush1.msra.mxu0 0.0
    %1411 = vmatprep.subr.mxu0 0.0
    %1412 = vmatpush1.msra.mxu0 0.0
    %1413 = vmatprep.subr.mxu0 0.0
    %1414 = vmatpush1.msra.mxu0 0.0
    %1415 = vmatprep.subr.mxu0 0.0
    %1416 = vmatpush1.msra.mxu0 0.0
    %1417 = vmatprep.subr.mxu0 0.0
    %1418 = vmatpush1.msra.mxu0 0.0
    %1419 = vmatprep.subr.mxu0 0.0
    %1420 = vmatpush1.msra.mxu0 0.0
    %1421 = vmatprep.subr.mxu0 0.0
    %1422 = vmatpush1.msra.mxu0 0.0
    %1423 = vmatprep.subr.mxu0 0.0
    %1424 = vmatpush1.msra.mxu0 0.0
    %1425 = vmatprep.subr.mxu0 0.0
    %1426 = vmatpush1.msra.mxu0 0.0
    %1427 = vmatprep.subr.mxu0 0.0
    %1428 = vmatpush1.msra.mxu0 0.0
    %1429 = vmatprep.subr.mxu0 0.0
    %1430 = vmatpush1.msra.mxu0 0.0
    %1431 = vmatprep.subr.mxu0 0.0
    %1432 = vmatpush1.msra.mxu0 0.0
    %1433 = vmatprep.subr.mxu0 0.0
    %1434 = vmatpush1.msra.mxu0 0.0
    %1435 = vmatprep.subr.mxu0 0.0
    %1436 = vmatpush1.msra.mxu0 0.0
    %1437 = vmatprep.subr.mxu0 0.0
    %1438 = vmatpush1.msra.mxu0 0.0
    %1439 = vmatprep.subr.mxu0 0.0
    %1440 = vmatpush1.msra.mxu0 0.0
    %1441 = vmatprep.subr.mxu0 0.0
    %1442 = vmatpush1.msra.mxu0 0.0
    %1443 = vmatprep.mubr.f32.mxu0 0.0
    %1444 = vmatmul.mubr.f32.gmra.mrb[0].mxu0 %v1377
    %v1445 = vpop.f32.mrb[0].mxu0
    %v1446 = vadd.f32 0.0, %v1445
    %v1447 = vpop.f32.mrb[0].mxu0
    %1448 = vdwg.mxu0
    %1449 = vmatprep.subr.mxu0 0.0
    %1450 = vmatpush1.msra.mxu0 %v362
    %1451 = vmatprep.subr.mxu0 0.0
    %1452 = vmatpush1.msra.mxu0 %v363
    %1453 = vmatprep.subr.mxu0 0.0
    %1454 = vmatpush1.msra.mxu0 %v364
    %1455 = vmatprep.subr.mxu0 0.0
    %1456 = vmatpush1.msra.mxu0 %v365
    %1457 = vmatprep.subr.mxu0 0.0
    %1458 = vmatpush1.msra.mxu0 0.0
    %1459 = vmatprep.subr.mxu0 0.0
    %1460 = vmatpush1.msra.mxu0 0.0
    %1461 = vmatprep.subr.mxu0 0.0
    %1462 = vmatpush1.msra.mxu0 0.0
    %1463 = vmatprep.subr.mxu0 0.0
    %1464 = vmatpush1.msra.mxu0 0.0
    %1465 = vmatprep.subr.mxu0 0.0
    %1466 = vmatpush1.msra.mxu0 0.0
    %1467 = vmatprep.subr.mxu0 0.0
    %1468 = vmatpush1.msra.mxu0 0.0
    %1469 = vmatprep.subr.mxu0 0.0
    %1470 = vmatpush1.msra.mxu0 0.0
    %1471 = vmatprep.subr.mxu0 0.0
    %1472 = vmatpush1.msra.mxu0 0.0
    %1473 = vmatprep.subr.mxu0 0.0
    %1474 = vmatpush1.msra.mxu0 0.0
    %1475 = vmatprep.subr.mxu0 0.0
    %1476 = vmatpush1.msra.mxu0 0.0
    %1477 = vmatprep.subr.mxu0 0.0
    %1478 = vmatpush1.msra.mxu0 0.0
    %1479 = vmatprep.subr.mxu0 0.0
    %1480 = vmatpush1.msra.mxu0 0.0
    %1481 = vmatprep.subr.mxu0 0.0
    %1482 = vmatpush1.msra.mxu0 0.0
    %1483 = vmatprep.subr.mxu0 0.0
    %1484 = vmatpush1.msra.mxu0 0.0
    %1485 = vmatprep.subr.mxu0 0.0
    %1486 = vmatpush1.msra.mxu0 0.0
    %1487 = vmatprep.subr.mxu0 0.0
    %1488 = vmatpush1.msra.mxu0 0.0
    %1489 = vmatprep.subr.mxu0 0.0
    %1490 = vmatpush1.msra.mxu0 0.0
    %1491 = vmatprep.subr.mxu0 0.0
    %1492 = vmatpush1.msra.mxu0 0.0
    %1493 = vmatprep.subr.mxu0 0.0
    %1494 = vmatpush1.msra.mxu0 0.0
    %1495 = vmatprep.subr.mxu0 0.0
    %1496 = vmatpush1.msra.mxu0 0.0
    %1497 = vmatprep.subr.mxu0 0.0
    %1498 = vmatpush1.msra.mxu0 0.0
    %1499 = vmatprep.subr.mxu0 0.0
    %1500 = vmatpush1.msra.mxu0 0.0
    %1501 = vmatprep.subr.mxu0 0.0
    %1502 = vmatpush1.msra.mxu0 0.0
    %1503 = vmatprep.subr.mxu0 0.0
    %1504 = vmatpush1.msra.mxu0 0.0
    %1505 = vmatprep.subr.mxu0 0.0
    %1506 = vmatpush1.msra.mxu0 0.0
    %1507 = vmatprep.subr.mxu0 0.0
    %1508 = vmatpush1.msra.mxu0 0.0
    %1509 = vmatprep.subr.mxu0 0.0
    %1510 = vmatpush1.msra.mxu0 0.0
    %1511 = vmatprep.subr.mxu0 0.0
    %1512 = vmatpush1.msra.mxu0 0.0
    %1513 = vmatprep.mubr.f32.mxu0 0.0
    %1514 = vmatmul.mubr.f32.gmra.mrb[0].mxu0 %v1377
    %v1515 = vpop.f32.mrb[0].mxu0
    %v1516 = vadd.f32 0.0, %v1515
    %v1517 = vpop.f32.mrb[0].mxu0
    %1518 = vdwg.mxu0
    %1519 = vmatprep.subr.mxu0 0.0
    %1520 = vmatpush1.msra.mxu0 %v366
    %1521 = vmatprep.subr.mxu0 0.0
    %1522 = vmatpush1.msra.mxu0 %v367
    %1523 = vmatprep.subr.mxu0 0.0
    %1524 = vmatpush1.msra.mxu0 %v368
    %1525 = vmatprep.subr.mxu0 0.0
    %1526 = vmatpush1.msra.mxu0 %v369
    %1527 = vmatprep.subr.mxu0 0.0
    %1528 = vmatpush1.msra.mxu0 0.0
    %1529 = vmatprep.subr.mxu0 0.0
    %1530 = vmatpush1.msra.mxu0 0.0
    %1531 = vmatprep.subr.mxu0 0.0
    %1532 = vmatpush1.msra.mxu0 0.0
    %1533 = vmatprep.subr.mxu0 0.0
    %1534 = vmatpush1.msra.mxu0 0.0
    %1535 = vmatprep.subr.mxu0 0.0
    %1536 = vmatpush1.msra.mxu0 0.0
    %1537 = vmatprep.subr.mxu0 0.0
    %1538 = vmatpush1.msra.mxu0 0.0
    %1539 = vmatprep.subr.mxu0 0.0
    %1540 = vmatpush1.msra.mxu0 0.0
    %1541 = vmatprep.subr.mxu0 0.0
    %1542 = vmatpush1.msra.mxu0 0.0
    %1543 = vmatprep.subr.mxu0 0.0
    %1544 = vmatpush1.msra.mxu0 0.0
    %1545 = vmatprep.subr.mxu0 0.0
    %1546 = vmatpush1.msra.mxu0 0.0
    %1547 = vmatprep.subr.mxu0 0.0
    %1548 = vmatpush1.msra.mxu0 0.0
    %1549 = vmatprep.subr.mxu0 0.0
    %1550 = vmatpush1.msra.mxu0 0.0
    %1551 = vmatprep.subr.mxu0 0.0
    %1552 = vmatpush1.msra.mxu0 0.0
    %1553 = vmatprep.subr.mxu0 0.0
    %1554 = vmatpush1.msra.mxu0 0.0
    %1555 = vmatprep.subr.mxu0 0.0
    %1556 = vmatpush1.msra.mxu0 0.0
    %1557 = vmatprep.subr.mxu0 0.0
    %1558 = vmatpush1.msra.mxu0 0.0
    %1559 = vmatprep.subr.mxu0 0.0
    %1560 = vmatpush1.msra.mxu0 0.0
    %1561 = vmatprep.subr.mxu0 0.0
    %1562 = vmatpush1.msra.mxu0 0.0
    %1563 = vmatprep.subr.mxu0 0.0
    %1564 = vmatpush1.msra.mxu0 0.0
    %1565 = vmatprep.subr.mxu0 0.0
    %1566 = vmatpush1.msra.mxu0 0.0
    %1567 = vmatprep.subr.mxu0 0.0
    %1568 = vmatpush1.msra.mxu0 0.0
    %1569 = vmatprep.subr.mxu0 0.0
    %1570 = vmatpush1.msra.mxu0 0.0
    %1571 = vmatprep.subr.mxu0 0.0
    %1572 = vmatpush1.msra.mxu0 0.0
    %1573 = vmatprep.subr.mxu0 0.0
    %1574 = vmatpush1.msra.mxu0 0.0
    %1575 = vmatprep.subr.mxu0 0.0
    %1576 = vmatpush1.msra.mxu0 0.0
    %1577 = vmatprep.subr.mxu0 0.0
    %1578 = vmatpush1.msra.mxu0 0.0
    %1579 = vmatprep.subr.mxu0 0.0
    %1580 = vmatpush1.msra.mxu0 0.0
    %1581 = vmatprep.subr.mxu0 0.0
    %1582 = vmatpush1.msra.mxu0 0.0
    %1583 = vmatprep.mubr.f32.mxu0 0.0
    %1584 = vmatmul.mubr.f32.gmra.mrb[0].mxu0 %v1377
    %v1585 = vpop.f32.mrb[0].mxu0
    %v1586 = vadd.f32 %v785, %v1585
    %v1587 = vpop.f32.mrb[0].mxu0
    %1588 = vdwg.mxu0
    %v1590 = vrot.slane %v1446, 2
    %v1592 = vadd.f32 %v457, %v1590
    %v1593 = vxor.u32 %v1592, 2147483648
    %v1594 = vmul.f32 %v1593, 1.442695
    %v1595 = vpow.pop %v1594
    %v1596 = vadd.f32 %v1595, 1.0
    %v1597 = vrcp.pop %v1596
    %v1598 = vmul.f32 1.0, %v1597
    %v1600 = vrot.slane %v1516, 2
    %v1602 = vadd.f32 %v543, %v1600
    %v1603 = vxor.u32 %v1602, 2147483648
    %v1604 = vmul.f32 %v1603, 1.442695
    %v1605 = vpow.pop %v1604
    %v1606 = vadd.f32 %v1605, 1.0
    %v1607 = vrcp.pop %v1606
    %v1608 = vmul.f32 1.0, %v1607
    %v1610 = vrot.slane %v1586, 2
    %v1612 = vmul.f32 %v1598, %v1610
    %v1613 = vadd.f32 %v629, %v1612
    %v1614 = vtanh.pop %v1613
    %v1615 = vsub.f32 1.0, %v1608
    %v1616 = vmul.f32 %v1615, %v1614
    %v1617 = vrot.slane %v1372, 6
    %v1619 = vmul.f32 %v1608, %v1617
    %v1620 = vadd.f32 %v1616, %v1619
    %vm1621 = vcmask 261126
    %1622 = vst.msk [vmem:[#allocation2] sm:$0xc0] %vm1621, %v1620
    %v1624 = vrot.slane %v1620, 6
    %v1625 = vsel %vm637, %v1624, 0
    %1627 = vmatprep.subr.mxu0 0.0
    %1628 = vmatpush1.msra.mxu0 %v358
    %1629 = vmatprep.subr.mxu0 0.0
    %1630 = vmatpush1.msra.mxu0 %v359
    %1631 = vmatprep.subr.mxu0 0.0
    %1632 = vmatpush1.msra.mxu0 %v360
    %1633 = vmatprep.subr.mxu0 0.0
    %1634 = vmatpush1.msra.mxu0 %v361
    %1635 = vmatprep.subr.mxu0 0.0
    %1636 = vmatpush1.msra.mxu0 0.0
    %1637 = vmatprep.subr.mxu0 0.0
    %1638 = vmatpush1.msra.mxu0 0.0
    %1639 = vmatprep.subr.mxu0 0.0
    %1640 = vmatpush1.msra.mxu0 0.0
    %1641 = vmatprep.subr.mxu0 0.0
    %1642 = vmatpush1.msra.mxu0 0.0
    %1643 = vmatprep.subr.mxu0 0.0
    %1644 = vmatpush1.msra.mxu0 0.0
    %1645 = vmatprep.subr.mxu0 0.0
    %1646 = vmatpush1.msra.mxu0 0.0
    %1647 = vmatprep.subr.mxu0 0.0
    %1648 = vmatpush1.msra.mxu0 0.0
    %1649 = vmatprep.subr.mxu0 0.0
    %1650 = vmatpush1.msra.mxu0 0.0
    %1651 = vmatprep.subr.mxu0 0.0
    %1652 = vmatpush1.msra.mxu0 0.0
    %1653 = vmatprep.subr.mxu0 0.0
    %1654 = vmatpush1.msra.mxu0 0.0
    %1655 = vmatprep.subr.mxu0 0.0
    %1656 = vmatpush1.msra.mxu0 0.0
    %1657 = vmatprep.subr.mxu0 0.0
    %1658 = vmatpush1.msra.mxu0 0.0
    %1659 = vmatprep.subr.mxu0 0.0
    %1660 = vmatpush1.msra.mxu0 0.0
    %1661 = vmatprep.subr.mxu0 0.0
    %1662 = vmatpush1.msra.mxu0 0.0
    %1663 = vmatprep.subr.mxu0 0.0
    %1664 = vmatpush1.msra.mxu0 0.0
    %1665 = vmatprep.subr.mxu0 0.0
    %1666 = vmatpush1.msra.mxu0 0.0
    %1667 = vmatprep.subr.mxu0 0.0
    %1668 = vmatpush1.msra.mxu0 0.0
    %1669 = vmatprep.subr.mxu0 0.0
    %1670 = vmatpush1.msra.mxu0 0.0
    %1671 = vmatprep.subr.mxu0 0.0
    %1672 = vmatpush1.msra.mxu0 0.0
    %1673 = vmatprep.subr.mxu0 0.0
    %1674 = vmatpush1.msra.mxu0 0.0
    %1675 = vmatprep.subr.mxu0 0.0
    %1676 = vmatpush1.msra.mxu0 0.0
    %1677 = vmatprep.subr.mxu0 0.0
    %1678 = vmatpush1.msra.mxu0 0.0
    %1679 = vmatprep.subr.mxu0 0.0
    %1680 = vmatpush1.msra.mxu0 0.0
    %1681 = vmatprep.subr.mxu0 0.0
    %1682 = vmatpush1.msra.mxu0 0.0
    %1683 = vmatprep.subr.mxu0 0.0
    %1684 = vmatpush1.msra.mxu0 0.0
    %1685 = vmatprep.subr.mxu0 0.0
    %1686 = vmatpush1.msra.mxu0 0.0
    %1687 = vmatprep.subr.mxu0 0.0
    %1688 = vmatpush1.msra.mxu0 0.0
    %1689 = vmatprep.subr.mxu0 0.0
    %1690 = vmatpush1.msra.mxu0 0.0
    %1691 = vmatprep.mubr.f32.mxu0 0.0
    %1692 = vmatmul.mubr.f32.gmra.mrb[0].mxu0 %v1625
    %v1693 = vpop.f32.mrb[0].mxu0
    %v1694 = vadd.f32 0.0, %v1693
    %v1695 = vpop.f32.mrb[0].mxu0
    %1696 = vdwg.mxu0
    %1697 = vmatprep.subr.mxu0 0.0
    %1698 = vmatpush1.msra.mxu0 %v362
    %1699 = vmatprep.subr.mxu0 0.0
    %1700 = vmatpush1.msra.mxu0 %v363
    %1701 = vmatprep.subr.mxu0 0.0
    %1702 = vmatpush1.msra.mxu0 %v364
    %1703 = vmatprep.subr.mxu0 0.0
    %1704 = vmatpush1.msra.mxu0 %v365
    %1705 = vmatprep.subr.mxu0 0.0
    %1706 = vmatpush1.msra.mxu0 0.0
    %1707 = vmatprep.subr.mxu0 0.0
    %1708 = vmatpush1.msra.mxu0 0.0
    %1709 = vmatprep.subr.mxu0 0.0
    %1710 = vmatpush1.msra.mxu0 0.0
    %1711 = vmatprep.subr.mxu0 0.0
    %1712 = vmatpush1.msra.mxu0 0.0
    %1713 = vmatprep.subr.mxu0 0.0
    %1714 = vmatpush1.msra.mxu0 0.0
    %1715 = vmatprep.subr.mxu0 0.0
    %1716 = vmatpush1.msra.mxu0 0.0
    %1717 = vmatprep.subr.mxu0 0.0
    %1718 = vmatpush1.msra.mxu0 0.0
    %1719 = vmatprep.subr.mxu0 0.0
    %1720 = vmatpush1.msra.mxu0 0.0
    %1721 = vmatprep.subr.mxu0 0.0
    %1722 = vmatpush1.msra.mxu0 0.0
    %1723 = vmatprep.subr.mxu0 0.0
    %1724 = vmatpush1.msra.mxu0 0.0
    %1725 = vmatprep.subr.mxu0 0.0
    %1726 = vmatpush1.msra.mxu0 0.0
    %1727 = vmatprep.subr.mxu0 0.0
    %1728 = vmatpush1.msra.mxu0 0.0
    %1729 = vmatprep.subr.mxu0 0.0
    %1730 = vmatpush1.msra.mxu0 0.0
    %1731 = vmatprep.subr.mxu0 0.0
    %1732 = vmatpush1.msra.mxu0 0.0
    %1733 = vmatprep.subr.mxu0 0.0
    %1734 = vmatpush1.msra.mxu0 0.0
    %1735 = vmatprep.subr.mxu0 0.0
    %1736 = vmatpush1.msra.mxu0 0.0
    %1737 = vmatprep.subr.mxu0 0.0
    %1738 = vmatpush1.msra.mxu0 0.0
    %1739 = vmatprep.subr.mxu0 0.0
    %1740 = vmatpush1.msra.mxu0 0.0
    %1741 = vmatprep.subr.mxu0 0.0
    %1742 = vmatpush1.msra.mxu0 0.0
    %1743 = vmatprep.subr.mxu0 0.0
    %1744 = vmatpush1.msra.mxu0 0.0
    %1745 = vmatprep.subr.mxu0 0.0
    %1746 = vmatpush1.msra.mxu0 0.0
    %1747 = vmatprep.subr.mxu0 0.0
    %1748 = vmatpush1.msra.mxu0 0.0
    %1749 = vmatprep.subr.mxu0 0.0
    %1750 = vmatpush1.msra.mxu0 0.0
    %1751 = vmatprep.subr.mxu0 0.0
    %1752 = vmatpush1.msra.mxu0 0.0
    %1753 = vmatprep.subr.mxu0 0.0
    %1754 = vmatpush1.msra.mxu0 0.0
    %1755 = vmatprep.subr.mxu0 0.0
    %1756 = vmatpush1.msra.mxu0 0.0
    %1757 = vmatprep.subr.mxu0 0.0
    %1758 = vmatpush1.msra.mxu0 0.0
    %1759 = vmatprep.subr.mxu0 0.0
    %1760 = vmatpush1.msra.mxu0 0.0
    %1761 = vmatprep.mubr.f32.mxu0 0.0
    %1762 = vmatmul.mubr.f32.gmra.mrb[0].mxu0 %v1625
    %v1763 = vpop.f32.mrb[0].mxu0
    %v1764 = vadd.f32 0.0, %v1763
    %v1765 = vpop.f32.mrb[0].mxu0
    %1766 = vdwg.mxu0
    %1767 = vmatprep.subr.mxu0 0.0
    %1768 = vmatpush1.msra.mxu0 %v366
    %1769 = vmatprep.subr.mxu0 0.0
    %1770 = vmatpush1.msra.mxu0 %v367
    %1771 = vmatprep.subr.mxu0 0.0
    %1772 = vmatpush1.msra.mxu0 %v368
    %1773 = vmatprep.subr.mxu0 0.0
    %1774 = vmatpush1.msra.mxu0 %v369
    %1775 = vmatprep.subr.mxu0 0.0
    %1776 = vmatpush1.msra.mxu0 0.0
    %1777 = vmatprep.subr.mxu0 0.0
    %1778 = vmatpush1.msra.mxu0 0.0
    %1779 = vmatprep.subr.mxu0 0.0
    %1780 = vmatpush1.msra.mxu0 0.0
    %1781 = vmatprep.subr.mxu0 0.0
    %1782 = vmatpush1.msra.mxu0 0.0
    %1783 = vmatprep.subr.mxu0 0.0
    %1784 = vmatpush1.msra.mxu0 0.0
    %1785 = vmatprep.subr.mxu0 0.0
    %1786 = vmatpush1.msra.mxu0 0.0
    %1787 = vmatprep.subr.mxu0 0.0
    %1788 = vmatpush1.msra.mxu0 0.0
    %1789 = vmatprep.subr.mxu0 0.0
    %1790 = vmatpush1.msra.mxu0 0.0
    %1791 = vmatprep.subr.mxu0 0.0
    %1792 = vmatpush1.msra.mxu0 0.0
    %1793 = vmatprep.subr.mxu0 0.0
    %1794 = vmatpush1.msra.mxu0 0.0
    %1795 = vmatprep.subr.mxu0 0.0
    %1796 = vmatpush1.msra.mxu0 0.0
    %1797 = vmatprep.subr.mxu0 0.0
    %1798 = vmatpush1.msra.mxu0 0.0
    %1799 = vmatprep.subr.mxu0 0.0
    %1800 = vmatpush1.msra.mxu0 0.0
    %1801 = vmatprep.subr.mxu0 0.0
    %1802 = vmatpush1.msra.mxu0 0.0
    %1803 = vmatprep.subr.mxu0 0.0
    %1804 = vmatpush1.msra.mxu0 0.0
    %1805 = vmatprep.subr.mxu0 0.0
    %1806 = vmatpush1.msra.mxu0 0.0
    %1807 = vmatprep.subr.mxu0 0.0
    %1808 = vmatpush1.msra.mxu0 0.0
    %1809 = vmatprep.subr.mxu0 0.0
    %1810 = vmatpush1.msra.mxu0 0.0
    %1811 = vmatprep.subr.mxu0 0.0
    %1812 = vmatpush1.msra.mxu0 0.0
    %1813 = vmatprep.subr.mxu0 0.0
    %1814 = vmatpush1.msra.mxu0 0.0
    %1815 = vmatprep.subr.mxu0 0.0
    %1816 = vmatpush1.msra.mxu0 0.0
    %1817 = vmatprep.subr.mxu0 0.0
    %1818 = vmatpush1.msra.mxu0 0.0
    %1819 = vmatprep.subr.mxu0 0.0
    %1820 = vmatpush1.msra.mxu0 0.0
    %1821 = vmatprep.subr.mxu0 0.0
    %1822 = vmatpush1.msra.mxu0 0.0
    %1823 = vmatprep.subr.mxu0 0.0
    %1824 = vmatpush1.msra.mxu0 0.0
    %1825 = vmatprep.subr.mxu0 0.0
    %1826 = vmatpush1.msra.mxu0 0.0
    %1827 = vmatprep.subr.mxu0 0.0
    %1828 = vmatpush1.msra.mxu0 0.0
    %1829 = vmatprep.subr.mxu0 0.0
    %1830 = vmatpush1.msra.mxu0 0.0
    %1831 = vmatprep.mubr.f32.mxu0 0.0
    %1832 = vmatmul.mubr.f32.gmra.mrb[0].mxu0 %v1625
    %v1833 = vpop.f32.mrb[0].mxu0
    %v1834 = vadd.f32 %v785, %v1833
    %v1835 = vpop.f32.mrb[0].mxu0
    %1836 = vdwg.mxu0
    %v1837 = vadd.f32 %v462, %v1694
    %v1838 = vxor.u32 %v1837, 2147483648
    %v1839 = vmul.f32 %v1838, 1.442695
    %v1840 = vpow.pop %v1839
    %v1841 = vadd.f32 %v1840, 1.0
    %v1842 = vrcp.pop %v1841
    %v1843 = vmul.f32 1.0, %v1842
    %v1844 = vadd.f32 %v548, %v1764
    %v1845 = vxor.u32 %v1844, 2147483648
    %v1846 = vmul.f32 %v1845, 1.442695
    %v1847 = vpow.pop %v1846
    %v1848 = vadd.f32 %v1847, 1.0
    %v1849 = vrcp.pop %v1848
    %v1850 = vmul.f32 1.0, %v1849
    %v1851 = vmul.f32 %v1843, %v1834
    %v1852 = vadd.f32 %v634, %v1851
    %v1853 = vtanh.pop %v1852
    %v1854 = vsub.f32 1.0, %v1850
    %v1855 = vmul.f32 %v1854, %v1853
    %v1857 = vmul.f32 %v1850, %v1624
    %v1858 = vadd.f32 %v1855, %v1857
    %1859 = vst.msk [vmem:[#allocation2 + $0x8] sm:$0x3] %vm878, %v1858
    %v1861 = vsel %vm637, %v1858, 0
    %1863 = vmatprep.subr.mxu0 0.0
    %1864 = vmatpush1.msra.mxu0 %v358
    %1865 = vmatprep.subr.mxu0 0.0
    %1866 = vmatpush1.msra.mxu0 %v359
    %1867 = vmatprep.subr.mxu0 0.0
    %1868 = vmatpush1.msra.mxu0 %v360
    %1869 = vmatprep.subr.mxu0 0.0
    %1870 = vmatpush1.msra.mxu0 %v361
    %1871 = vmatprep.subr.mxu0 0.0
    %1872 = vmatpush1.msra.mxu0 0.0
    %1873 = vmatprep.subr.mxu0 0.0
    %1874 = vmatpush1.msra.mxu0 0.0
    %1875 = vmatprep.subr.mxu0 0.0
    %1876 = vmatpush1.msra.mxu0 0.0
    %1877 = vmatprep.subr.mxu0 0.0
    %1878 = vmatpush1.msra.mxu0 0.0
    %1879 = vmatprep.subr.mxu0 0.0
    %1880 = vmatpush1.msra.mxu0 0.0
    %1881 = vmatprep.subr.mxu0 0.0
    %1882 = vmatpush1.msra.mxu0 0.0
    %1883 = vmatprep.subr.mxu0 0.0
    %1884 = vmatpush1.msra.mxu0 0.0
    %1885 = vmatprep.subr.mxu0 0.0
    %1886 = vmatpush1.msra.mxu0 0.0
    %1887 = vmatprep.subr.mxu0 0.0
    %1888 = vmatpush1.msra.mxu0 0.0
    %1889 = vmatprep.subr.mxu0 0.0
    %1890 = vmatpush1.msra.mxu0 0.0
    %1891 = vmatprep.subr.mxu0 0.0
    %1892 = vmatpush1.msra.mxu0 0.0
    %1893 = vmatprep.subr.mxu0 0.0
    %1894 = vmatpush1.msra.mxu0 0.0
    %1895 = vmatprep.subr.mxu0 0.0
    %1896 = vmatpush1.msra.mxu0 0.0
    %1897 = vmatprep.subr.mxu0 0.0
    %1898 = vmatpush1.msra.mxu0 0.0
    %1899 = vmatprep.subr.mxu0 0.0
    %1900 = vmatpush1.msra.mxu0 0.0
    %1901 = vmatprep.subr.mxu0 0.0
    %1902 = vmatpush1.msra.mxu0 0.0
    %1903 = vmatprep.subr.mxu0 0.0
    %1904 = vmatpush1.msra.mxu0 0.0
    %1905 = vmatprep.subr.mxu0 0.0
    %1906 = vmatpush1.msra.mxu0 0.0
    %1907 = vmatprep.subr.mxu0 0.0
    %1908 = vmatpush1.msra.mxu0 0.0
    %1909 = vmatprep.subr.mxu0 0.0
    %1910 = vmatpush1.msra.mxu0 0.0
    %1911 = vmatprep.subr.mxu0 0.0
    %1912 = vmatpush1.msra.mxu0 0.0
    %1913 = vmatprep.subr.mxu0 0.0
    %1914 = vmatpush1.msra.mxu0 0.0
    %1915 = vmatprep.subr.mxu0 0.0
    %1916 = vmatpush1.msra.mxu0 0.0
    %1917 = vmatprep.subr.mxu0 0.0
    %1918 = vmatpush1.msra.mxu0 0.0
    %1919 = vmatprep.subr.mxu0 0.0
    %1920 = vmatpush1.msra.mxu0 0.0
    %1921 = vmatprep.subr.mxu0 0.0
    %1922 = vmatpush1.msra.mxu0 0.0
    %1923 = vmatprep.subr.mxu0 0.0
    %1924 = vmatpush1.msra.mxu0 0.0
    %1925 = vmatprep.subr.mxu0 0.0
    %1926 = vmatpush1.msra.mxu0 0.0
    %1927 = vmatprep.mubr.f32.mxu0 0.0
    %1928 = vmatmul.mubr.f32.gmra.mrb[0].mxu0 %v1861
    %v1929 = vpop.f32.mrb[0].mxu0
    %v1930 = vadd.f32 0.0, %v1929
    %v1931 = vpop.f32.mrb[0].mxu0
    %1932 = vdwg.mxu0
    %1933 = vmatprep.subr.mxu0 0.0
    %1934 = vmatpush1.msra.mxu0 %v362
    %1935 = vmatprep.subr.mxu0 0.0
    %1936 = vmatpush1.msra.mxu0 %v363
    %1937 = vmatprep.subr.mxu0 0.0
    %1938 = vmatpush1.msra.mxu0 %v364
    %1939 = vmatprep.subr.mxu0 0.0
    %1940 = vmatpush1.msra.mxu0 %v365
    %1941 = vmatprep.subr.mxu0 0.0
    %1942 = vmatpush1.msra.mxu0 0.0
    %1943 = vmatprep.subr.mxu0 0.0
    %1944 = vmatpush1.msra.mxu0 0.0
    %1945 = vmatprep.subr.mxu0 0.0
    %1946 = vmatpush1.msra.mxu0 0.0
    %1947 = vmatprep.subr.mxu0 0.0
    %1948 = vmatpush1.msra.mxu0 0.0
    %1949 = vmatprep.subr.mxu0 0.0
    %1950 = vmatpush1.msra.mxu0 0.0
    %1951 = vmatprep.subr.mxu0 0.0
    %1952 = vmatpush1.msra.mxu0 0.0
    %1953 = vmatprep.subr.mxu0 0.0
    %1954 = vmatpush1.msra.mxu0 0.0
    %1955 = vmatprep.subr.mxu0 0.0
    %1956 = vmatpush1.msra.mxu0 0.0
    %1957 = vmatprep.subr.mxu0 0.0
    %1958 = vmatpush1.msra.mxu0 0.0
    %1959 = vmatprep.subr.mxu0 0.0
    %1960 = vmatpush1.msra.mxu0 0.0
    %1961 = vmatprep.subr.mxu0 0.0
    %1962 = vmatpush1.msra.mxu0 0.0
    %1963 = vmatprep.subr.mxu0 0.0
    %1964 = vmatpush1.msra.mxu0 0.0
    %1965 = vmatprep.subr.mxu0 0.0
    %1966 = vmatpush1.msra.mxu0 0.0
    %1967 = vmatprep.subr.mxu0 0.0
    %1968 = vmatpush1.msra.mxu0 0.0
    %1969 = vmatprep.subr.mxu0 0.0
    %1970 = vmatpush1.msra.mxu0 0.0
    %1971 = vmatprep.subr.mxu0 0.0
    %1972 = vmatpush1.msra.mxu0 0.0
    %1973 = vmatprep.subr.mxu0 0.0
    %1974 = vmatpush1.msra.mxu0 0.0
    %1975 = vmatprep.subr.mxu0 0.0
    %1976 = vmatpush1.msra.mxu0 0.0
    %1977 = vmatprep.subr.mxu0 0.0
    %1978 = vmatpush1.msra.mxu0 0.0
    %1979 = vmatprep.subr.mxu0 0.0
    %1980 = vmatpush1.msra.mxu0 0.0
    %1981 = vmatprep.subr.mxu0 0.0
    %1982 = vmatpush1.msra.mxu0 0.0
    %1983 = vmatprep.subr.mxu0 0.0
    %1984 = vmatpush1.msra.mxu0 0.0
    %1985 = vmatprep.subr.mxu0 0.0
    %1986 = vmatpush1.msra.mxu0 0.0
    %1987 = vmatprep.subr.mxu0 0.0
    %1988 = vmatpush1.msra.mxu0 0.0
    %1989 = vmatprep.subr.mxu0 0.0
    %1990 = vmatpush1.msra.mxu0 0.0
    %1991 = vmatprep.subr.mxu0 0.0
    %1992 = vmatpush1.msra.mxu0 0.0
    %1993 = vmatprep.subr.mxu0 0.0
    %1994 = vmatpush1.msra.mxu0 0.0
    %1995 = vmatprep.subr.mxu0 0.0
    %1996 = vmatpush1.msra.mxu0 0.0
    %1997 = vmatprep.mubr.f32.mxu0 0.0
    %1998 = vmatmul.mubr.f32.gmra.mrb[0].mxu0 %v1861
    %v1999 = vpop.f32.mrb[0].mxu0
    %v2000 = vadd.f32 0.0, %v1999
    %v2001 = vpop.f32.mrb[0].mxu0
    %2002 = vdwg.mxu0
    %2003 = vmatprep.subr.mxu0 0.0
    %2004 = vmatpush1.msra.mxu0 %v366
    %2005 = vmatprep.subr.mxu0 0.0
    %2006 = vmatpush1.msra.mxu0 %v367
    %2007 = vmatprep.subr.mxu0 0.0
    %2008 = vmatpush1.msra.mxu0 %v368
    %2009 = vmatprep.subr.mxu0 0.0
    %2010 = vmatpush1.msra.mxu0 %v369
    %2011 = vmatprep.subr.mxu0 0.0
    %2012 = vmatpush1.msra.mxu0 0.0
    %2013 = vmatprep.subr.mxu0 0.0
    %2014 = vmatpush1.msra.mxu0 0.0
    %2015 = vmatprep.subr.mxu0 0.0
    %2016 = vmatpush1.msra.mxu0 0.0
    %2017 = vmatprep.subr.mxu0 0.0
    %2018 = vmatpush1.msra.mxu0 0.0
    %2019 = vmatprep.subr.mxu0 0.0
    %2020 = vmatpush1.msra.mxu0 0.0
    %2021 = vmatprep.subr.mxu0 0.0
    %2022 = vmatpush1.msra.mxu0 0.0
    %2023 = vmatprep.subr.mxu0 0.0
    %2024 = vmatpush1.msra.mxu0 0.0
    %2025 = vmatprep.subr.mxu0 0.0
    %2026 = vmatpush1.msra.mxu0 0.0
    %2027 = vmatprep.subr.mxu0 0.0
    %2028 = vmatpush1.msra.mxu0 0.0
    %2029 = vmatprep.subr.mxu0 0.0
    %2030 = vmatpush1.msra.mxu0 0.0
    %2031 = vmatprep.subr.mxu0 0.0
    %2032 = vmatpush1.msra.mxu0 0.0
    %2033 = vmatprep.subr.mxu0 0.0
    %2034 = vmatpush1.msra.mxu0 0.0
    %2035 = vmatprep.subr.mxu0 0.0
    %2036 = vmatpush1.msra.mxu0 0.0
    %2037 = vmatprep.subr.mxu0 0.0
    %2038 = vmatpush1.msra.mxu0 0.0
    %2039 = vmatprep.subr.mxu0 0.0
    %2040 = vmatpush1.msra.mxu0 0.0
    %2041 = vmatprep.subr.mxu0 0.0
    %2042 = vmatpush1.msra.mxu0 0.0
    %2043 = vmatprep.subr.mxu0 0.0
    %2044 = vmatpush1.msra.mxu0 0.0
    %2045 = vmatprep.subr.mxu0 0.0
    %2046 = vmatpush1.msra.mxu0 0.0
    %2047 = vmatprep.subr.mxu0 0.0
    %2048 = vmatpush1.msra.mxu0 0.0
    %2049 = vmatprep.subr.mxu0 0.0
    %2050 = vmatpush1.msra.mxu0 0.0
    %2051 = vmatprep.subr.mxu0 0.0
    %2052 = vmatpush1.msra.mxu0 0.0
    %2053 = vmatprep.subr.mxu0 0.0
    %2054 = vmatpush1.msra.mxu0 0.0
    %2055 = vmatprep.subr.mxu0 0.0
    %2056 = vmatpush1.msra.mxu0 0.0
    %2057 = vmatprep.subr.mxu0 0.0
    %2058 = vmatpush1.msra.mxu0 0.0
    %2059 = vmatprep.subr.mxu0 0.0
    %2060 = vmatpush1.msra.mxu0 0.0
    %2061 = vmatprep.subr.mxu0 0.0
    %2062 = vmatpush1.msra.mxu0 0.0
    %2063 = vmatprep.subr.mxu0 0.0
    %2064 = vmatpush1.msra.mxu0 0.0
    %2065 = vmatprep.subr.mxu0 0.0
    %2066 = vmatpush1.msra.mxu0 0.0
    %2067 = vmatprep.mubr.f32.mxu0 0.0
    %2068 = vmatmul.mubr.f32.gmra.mrb[0].mxu0 %v1861
    %v2069 = vpop.f32.mrb[0].mxu0
    %v2070 = vadd.f32 %v785, %v2069
    %v2071 = vpop.f32.mrb[0].mxu0
    %2072 = vdwg.mxu0
    %v2074 = vrot.slane %v1930, 6
    %v2076 = vadd.f32 %v462, %v2074
    %v2077 = vxor.u32 %v2076, 2147483648
    %v2078 = vmul.f32 %v2077, 1.442695
    %v2079 = vpow.pop %v2078
    %v2080 = vadd.f32 %v2079, 1.0
    %v2081 = vrcp.pop %v2080
    %v2082 = vmul.f32 1.0, %v2081
    %v2084 = vrot.slane %v2000, 6
    %v2086 = vadd.f32 %v548, %v2084
    %v2087 = vxor.u32 %v2086, 2147483648
    %v2088 = vmul.f32 %v2087, 1.442695
    %v2089 = vpow.pop %v2088
    %v2090 = vadd.f32 %v2089, 1.0
    %v2091 = vrcp.pop %v2090
    %v2092 = vmul.f32 1.0, %v2091
    %v2094 = vrot.slane %v2070, 6
    %v2096 = vmul.f32 %v2082, %v2094
    %v2097 = vadd.f32 %v634, %v2096
    %v2098 = vtanh.pop %v2097
    %v2099 = vsub.f32 1.0, %v2092
    %v2100 = vmul.f32 %v2099, %v2098
    %v2101 = vrot.slane %v1858, 6
    %v2103 = vmul.f32 %v2092, %v2101
    %v2104 = vadd.f32 %v2100, %v2103
    %2105 = vst.msk [vmem:[#allocation2 + $0x8] sm:$0xc] %vm1125, %v2104
    %v2107 = vrot.slane %v2104, 2
    %v2108 = vsel %vm637, %v2107, 0
    %2110 = vmatprep.subr.mxu0 0.0
    %2111 = vmatpush1.msra.mxu0 %v358
    %2112 = vmatprep.subr.mxu0 0.0
    %2113 = vmatpush1.msra.mxu0 %v359
    %2114 = vmatprep.subr.mxu0 0.0
    %2115 = vmatpush1.msra.mxu0 %v360
    %2116 = vmatprep.subr.mxu0 0.0
    %2117 = vmatpush1.msra.mxu0 %v361
    %2118 = vmatprep.subr.mxu0 0.0
    %2119 = vmatpush1.msra.mxu0 0.0
    %2120 = vmatprep.subr.mxu0 0.0
    %2121 = vmatpush1.msra.mxu0 0.0
    %2122 = vmatprep.subr.mxu0 0.0
    %2123 = vmatpush1.msra.mxu0 0.0
    %2124 = vmatprep.subr.mxu0 0.0
    %2125 = vmatpush1.msra.mxu0 0.0
    %2126 = vmatprep.subr.mxu0 0.0
    %2127 = vmatpush1.msra.mxu0 0.0
    %2128 = vmatprep.subr.mxu0 0.0
    %2129 = vmatpush1.msra.mxu0 0.0
    %2130 = vmatprep.subr.mxu0 0.0
    %2131 = vmatpush1.msra.mxu0 0.0
    %2132 = vmatprep.subr.mxu0 0.0
    %2133 = vmatpush1.msra.mxu0 0.0
    %2134 = vmatprep.subr.mxu0 0.0
    %2135 = vmatpush1.msra.mxu0 0.0
    %2136 = vmatprep.subr.mxu0 0.0
    %2137 = vmatpush1.msra.mxu0 0.0
    %2138 = vmatprep.subr.mxu0 0.0
    %2139 = vmatpush1.msra.mxu0 0.0
    %2140 = vmatprep.subr.mxu0 0.0
    %2141 = vmatpush1.msra.mxu0 0.0
    %2142 = vmatprep.subr.mxu0 0.0
    %2143 = vmatpush1.msra.mxu0 0.0
    %2144 = vmatprep.subr.mxu0 0.0
    %2145 = vmatpush1.msra.mxu0 0.0
    %2146 = vmatprep.subr.mxu0 0.0
    %2147 = vmatpush1.msra.mxu0 0.0
    %2148 = vmatprep.subr.mxu0 0.0
    %2149 = vmatpush1.msra.mxu0 0.0
    %2150 = vmatprep.subr.mxu0 0.0
    %2151 = vmatpush1.msra.mxu0 0.0
    %2152 = vmatprep.subr.mxu0 0.0
    %2153 = vmatpush1.msra.mxu0 0.0
    %2154 = vmatprep.subr.mxu0 0.0
    %2155 = vmatpush1.msra.mxu0 0.0
    %2156 = vmatprep.subr.mxu0 0.0
    %2157 = vmatpush1.msra.mxu0 0.0
    %2158 = vmatprep.subr.mxu0 0.0
    %2159 = vmatpush1.msra.mxu0 0.0
    %2160 = vmatprep.subr.mxu0 0.0
    %2161 = vmatpush1.msra.mxu0 0.0
    %2162 = vmatprep.subr.mxu0 0.0
    %2163 = vmatpush1.msra.mxu0 0.0
    %2164 = vmatprep.subr.mxu0 0.0
    %2165 = vmatpush1.msra.mxu0 0.0
    %2166 = vmatprep.subr.mxu0 0.0
    %2167 = vmatpush1.msra.mxu0 0.0
    %2168 = vmatprep.subr.mxu0 0.0
    %2169 = vmatpush1.msra.mxu0 0.0
    %2170 = vmatprep.subr.mxu0 0.0
    %2171 = vmatpush1.msra.mxu0 0.0
    %2172 = vmatprep.subr.mxu0 0.0
    %2173 = vmatpush1.msra.mxu0 0.0
    %2174 = vmatprep.mubr.f32.mxu0 0.0
    %2175 = vmatmul.mubr.f32.gmra.mrb[0].mxu0 %v2108
    %v2176 = vpop.f32.mrb[0].mxu0
    %v2177 = vadd.f32 0.0, %v2176
    %v2178 = vpop.f32.mrb[0].mxu0
    %2179 = vdwg.mxu0
    %2180 = vmatprep.subr.mxu0 0.0
    %2181 = vmatpush1.msra.mxu0 %v362
    %2182 = vmatprep.subr.mxu0 0.0
    %2183 = vmatpush1.msra.mxu0 %v363
    %2184 = vmatprep.subr.mxu0 0.0
    %2185 = vmatpush1.msra.mxu0 %v364
    %2186 = vmatprep.subr.mxu0 0.0
    %2187 = vmatpush1.msra.mxu0 %v365
    %2188 = vmatprep.subr.mxu0 0.0
    %2189 = vmatpush1.msra.mxu0 0.0
    %2190 = vmatprep.subr.mxu0 0.0
    %2191 = vmatpush1.msra.mxu0 0.0
    %2192 = vmatprep.subr.mxu0 0.0
    %2193 = vmatpush1.msra.mxu0 0.0
    %2194 = vmatprep.subr.mxu0 0.0
    %2195 = vmatpush1.msra.mxu0 0.0
    %2196 = vmatprep.subr.mxu0 0.0
    %2197 = vmatpush1.msra.mxu0 0.0
    %2198 = vmatprep.subr.mxu0 0.0
    %2199 = vmatpush1.msra.mxu0 0.0
    %2200 = vmatprep.subr.mxu0 0.0
    %2201 = vmatpush1.msra.mxu0 0.0
    %2202 = vmatprep.subr.mxu0 0.0
    %2203 = vmatpush1.msra.mxu0 0.0
    %2204 = vmatprep.subr.mxu0 0.0
    %2205 = vmatpush1.msra.mxu0 0.0
    %2206 = vmatprep.subr.mxu0 0.0
    %2207 = vmatpush1.msra.mxu0 0.0
    %2208 = vmatprep.subr.mxu0 0.0
    %2209 = vmatpush1.msra.mxu0 0.0
    %2210 = vmatprep.subr.mxu0 0.0
    %2211 = vmatpush1.msra.mxu0 0.0
    %2212 = vmatprep.subr.mxu0 0.0
    %2213 = vmatpush1.msra.mxu0 0.0
    %2214 = vmatprep.subr.mxu0 0.0
    %2215 = vmatpush1.msra.mxu0 0.0
    %2216 = vmatprep.subr.mxu0 0.0
    %2217 = vmatpush1.msra.mxu0 0.0
    %2218 = vmatprep.subr.mxu0 0.0
    %2219 = vmatpush1.msra.mxu0 0.0
    %2220 = vmatprep.subr.mxu0 0.0
    %2221 = vmatpush1.msra.mxu0 0.0
    %2222 = vmatprep.subr.mxu0 0.0
    %2223 = vmatpush1.msra.mxu0 0.0
    %2224 = vmatprep.subr.mxu0 0.0
    %2225 = vmatpush1.msra.mxu0 0.0
    %2226 = vmatprep.subr.mxu0 0.0
    %2227 = vmatpush1.msra.mxu0 0.0
    %2228 = vmatprep.subr.mxu0 0.0
    %2229 = vmatpush1.msra.mxu0 0.0
    %2230 = vmatprep.subr.mxu0 0.0
    %2231 = vmatpush1.msra.mxu0 0.0
    %2232 = vmatprep.subr.mxu0 0.0
    %2233 = vmatpush1.msra.mxu0 0.0
    %2234 = vmatprep.subr.mxu0 0.0
    %2235 = vmatpush1.msra.mxu0 0.0
    %2236 = vmatprep.subr.mxu0 0.0
    %2237 = vmatpush1.msra.mxu0 0.0
    %2238 = vmatprep.subr.mxu0 0.0
    %2239 = vmatpush1.msra.mxu0 0.0
    %2240 = vmatprep.subr.mxu0 0.0
    %2241 = vmatpush1.msra.mxu0 0.0
    %2242 = vmatprep.subr.mxu0 0.0
    %2243 = vmatpush1.msra.mxu0 0.0
    %2244 = vmatprep.mubr.f32.mxu0 0.0
    %2245 = vmatmul.mubr.f32.gmra.mrb[0].mxu0 %v2108
    %v2246 = vpop.f32.mrb[0].mxu0
    %v2247 = vadd.f32 0.0, %v2246
    %v2248 = vpop.f32.mrb[0].mxu0
    %2249 = vdwg.mxu0
    %2250 = vmatprep.subr.mxu0 0.0
    %2251 = vmatpush1.msra.mxu0 %v366
    %2252 = vmatprep.subr.mxu0 0.0
    %2253 = vmatpush1.msra.mxu0 %v367
    %2254 = vmatprep.subr.mxu0 0.0
    %2255 = vmatpush1.msra.mxu0 %v368
    %2256 = vmatprep.subr.mxu0 0.0
    %2257 = vmatpush1.msra.mxu0 %v369
    %2258 = vmatprep.subr.mxu0 0.0
    %2259 = vmatpush1.msra.mxu0 0.0
    %2260 = vmatprep.subr.mxu0 0.0
    %2261 = vmatpush1.msra.mxu0 0.0
    %2262 = vmatprep.subr.mxu0 0.0
    %2263 = vmatpush1.msra.mxu0 0.0
    %2264 = vmatprep.subr.mxu0 0.0
    %2265 = vmatpush1.msra.mxu0 0.0
    %2266 = vmatprep.subr.mxu0 0.0
    %2267 = vmatpush1.msra.mxu0 0.0
    %2268 = vmatprep.subr.mxu0 0.0
    %2269 = vmatpush1.msra.mxu0 0.0
    %2270 = vmatprep.subr.mxu0 0.0
    %2271 = vmatpush1.msra.mxu0 0.0
    %2272 = vmatprep.subr.mxu0 0.0
    %2273 = vmatpush1.msra.mxu0 0.0
    %2274 = vmatprep.subr.mxu0 0.0
    %2275 = vmatpush1.msra.mxu0 0.0
    %2276 = vmatprep.subr.mxu0 0.0
    %2277 = vmatpush1.msra.mxu0 0.0
    %2278 = vmatprep.subr.mxu0 0.0
    %2279 = vmatpush1.msra.mxu0 0.0
    %2280 = vmatprep.subr.mxu0 0.0
    %2281 = vmatpush1.msra.mxu0 0.0
    %2282 = vmatprep.subr.mxu0 0.0
    %2283 = vmatpush1.msra.mxu0 0.0
    %2284 = vmatprep.subr.mxu0 0.0
    %2285 = vmatpush1.msra.mxu0 0.0
    %2286 = vmatprep.subr.mxu0 0.0
    %2287 = vmatpush1.msra.mxu0 0.0
    %2288 = vmatprep.subr.mxu0 0.0
    %2289 = vmatpush1.msra.mxu0 0.0
    %2290 = vmatprep.subr.mxu0 0.0
    %2291 = vmatpush1.msra.mxu0 0.0
    %2292 = vmatprep.subr.mxu0 0.0
    %2293 = vmatpush1.msra.mxu0 0.0
    %2294 = vmatprep.subr.mxu0 0.0
    %2295 = vmatpush1.msra.mxu0 0.0
    %2296 = vmatprep.subr.mxu0 0.0
    %2297 = vmatpush1.msra.mxu0 0.0
    %2298 = vmatprep.subr.mxu0 0.0
    %2299 = vmatpush1.msra.mxu0 0.0
    %2300 = vmatprep.subr.mxu0 0.0
    %2301 = vmatpush1.msra.mxu0 0.0
    %2302 = vmatprep.subr.mxu0 0.0
    %2303 = vmatpush1.msra.mxu0 0.0
    %2304 = vmatprep.subr.mxu0 0.0
    %2305 = vmatpush1.msra.mxu0 0.0
    %2306 = vmatprep.subr.mxu0 0.0
    %2307 = vmatpush1.msra.mxu0 0.0
    %2308 = vmatprep.subr.mxu0 0.0
    %2309 = vmatpush1.msra.mxu0 0.0
    %2310 = vmatprep.subr.mxu0 0.0
    %2311 = vmatpush1.msra.mxu0 0.0
    %2312 = vmatprep.subr.mxu0 0.0
    %2313 = vmatpush1.msra.mxu0 0.0
    %2314 = vmatprep.mubr.f32.mxu0 0.0
    %2315 = vmatmul.mubr.f32.gmra.mrb[0].mxu0 %v2108
    %v2316 = vpop.f32.mrb[0].mxu0
    %v2317 = vadd.f32 %v785, %v2316
    %v2318 = vpop.f32.mrb[0].mxu0
    %2319 = vdwg.mxu0
    %v2321 = vrot.slane %v2177, 4
    %v2323 = vadd.f32 %v462, %v2321
    %v2324 = vxor.u32 %v2323, 2147483648
    %v2325 = vmul.f32 %v2324, 1.442695
    %v2326 = vpow.pop %v2325
    %v2327 = vadd.f32 %v2326, 1.0
    %v2328 = vrcp.pop %v2327
    %v2329 = vmul.f32 1.0, %v2328
    %v2331 = vrot.slane %v2247, 4
    %v2333 = vadd.f32 %v548, %v2331
    %v2334 = vxor.u32 %v2333, 2147483648
    %v2335 = vmul.f32 %v2334, 1.442695
    %v2336 = vpow.pop %v2335
    %v2337 = vadd.f32 %v2336, 1.0
    %v2338 = vrcp.pop %v2337
    %v2339 = vmul.f32 1.0, %v2338
    %v2341 = vrot.slane %v2317, 4
    %v2343 = vmul.f32 %v2329, %v2341
    %v2344 = vadd.f32 %v634, %v2343
    %v2345 = vtanh.pop %v2344
    %v2346 = vsub.f32 1.0, %v2339
    %v2347 = vmul.f32 %v2346, %v2345
    %v2348 = vrot.slane %v2104, 6
    %v2350 = vmul.f32 %v2339, %v2348
    %v2351 = vadd.f32 %v2347, %v2350
    %2352 = vst.msk [vmem:[#allocation2 + $0x8] sm:$0x30] %vm1373, %v2351
    %v2354 = vrot.slane %v2351, 4
    %v2355 = vsel %vm637, %v2354, 0
    %2357 = vmatprep.subr.mxu0 0.0
    %2358 = vmatpush1.msra.mxu0 %v358
    %2359 = vmatprep.subr.mxu0 0.0
    %2360 = vmatpush1.msra.mxu0 %v359
    %2361 = vmatprep.subr.mxu0 0.0
    %2362 = vmatpush1.msra.mxu0 %v360
    %2363 = vmatprep.subr.mxu0 0.0
    %2364 = vmatpush1.msra.mxu0 %v361
    %2365 = vmatprep.subr.mxu0 0.0
    %2366 = vmatpush1.msra.mxu0 0.0
    %2367 = vmatprep.subr.mxu0 0.0
    %2368 = vmatpush1.msra.mxu0 0.0
    %2369 = vmatprep.subr.mxu0 0.0
    %2370 = vmatpush1.msra.mxu0 0.0
    %2371 = vmatprep.subr.mxu0 0.0
    %2372 = vmatpush1.msra.mxu0 0.0
    %2373 = vmatprep.subr.mxu0 0.0
    %2374 = vmatpush1.msra.mxu0 0.0
    %2375 = vmatprep.subr.mxu0 0.0
    %2376 = vmatpush1.msra.mxu0 0.0
    %2377 = vmatprep.subr.mxu0 0.0
    %2378 = vmatpush1.msra.mxu0 0.0
    %2379 = vmatprep.subr.mxu0 0.0
    %2380 = vmatpush1.msra.mxu0 0.0
    %2381 = vmatprep.subr.mxu0 0.0
    %2382 = vmatpush1.msra.mxu0 0.0
    %2383 = vmatprep.subr.mxu0 0.0
    %2384 = vmatpush1.msra.mxu0 0.0
    %2385 = vmatprep.subr.mxu0 0.0
    %2386 = vmatpush1.msra.mxu0 0.0
    %2387 = vmatprep.subr.mxu0 0.0
    %2388 = vmatpush1.msra.mxu0 0.0
    %2389 = vmatprep.subr.mxu0 0.0
    %2390 = vmatpush1.msra.mxu0 0.0
    %2391 = vmatprep.subr.mxu0 0.0
    %2392 = vmatpush1.msra.mxu0 0.0
    %2393 = vmatprep.subr.mxu0 0.0
    %2394 = vmatpush1.msra.mxu0 0.0
    %2395 = vmatprep.subr.mxu0 0.0
    %2396 = vmatpush1.msra.mxu0 0.0
    %2397 = vmatprep.subr.mxu0 0.0
    %2398 = vmatpush1.msra.mxu0 0.0
    %2399 = vmatprep.subr.mxu0 0.0
    %2400 = vmatpush1.msra.mxu0 0.0
    %2401 = vmatprep.subr.mxu0 0.0
    %2402 = vmatpush1.msra.mxu0 0.0
    %2403 = vmatprep.subr.mxu0 0.0
    %2404 = vmatpush1.msra.mxu0 0.0
    %2405 = vmatprep.subr.mxu0 0.0
    %2406 = vmatpush1.msra.mxu0 0.0
    %2407 = vmatprep.subr.mxu0 0.0
    %2408 = vmatpush1.msra.mxu0 0.0
    %2409 = vmatprep.subr.mxu0 0.0
    %2410 = vmatpush1.msra.mxu0 0.0
    %2411 = vmatprep.subr.mxu0 0.0
    %2412 = vmatpush1.msra.mxu0 0.0
    %2413 = vmatprep.subr.mxu0 0.0
    %2414 = vmatpush1.msra.mxu0 0.0
    %2415 = vmatprep.subr.mxu0 0.0
    %2416 = vmatpush1.msra.mxu0 0.0
    %2417 = vmatprep.subr.mxu0 0.0
    %2418 = vmatpush1.msra.mxu0 0.0
    %2419 = vmatprep.subr.mxu0 0.0
    %2420 = vmatpush1.msra.mxu0 0.0
    %2421 = vmatprep.mubr.f32.mxu0 0.0
    %2422 = vmatmul.mubr.f32.gmra.mrb[0].mxu0 %v2355
    %v2423 = vpop.f32.mrb[0].mxu0
    %v2424 = vadd.f32 0.0, %v2423
    %v2425 = vpop.f32.mrb[0].mxu0
    %2426 = vdwg.mxu0
    %2427 = vmatprep.subr.mxu0 0.0
    %2428 = vmatpush1.msra.mxu0 %v362
    %2429 = vmatprep.subr.mxu0 0.0
    %2430 = vmatpush1.msra.mxu0 %v363
    %2431 = vmatprep.subr.mxu0 0.0
    %2432 = vmatpush1.msra.mxu0 %v364
    %2433 = vmatprep.subr.mxu0 0.0
    %2434 = vmatpush1.msra.mxu0 %v365
    %2435 = vmatprep.subr.mxu0 0.0
    %2436 = vmatpush1.msra.mxu0 0.0
    %2437 = vmatprep.subr.mxu0 0.0
    %2438 = vmatpush1.msra.mxu0 0.0
    %2439 = vmatprep.subr.mxu0 0.0
    %2440 = vmatpush1.msra.mxu0 0.0
    %2441 = vmatprep.subr.mxu0 0.0
    %2442 = vmatpush1.msra.mxu0 0.0
    %2443 = vmatprep.subr.mxu0 0.0
    %2444 = vmatpush1.msra.mxu0 0.0
    %2445 = vmatprep.subr.mxu0 0.0
    %2446 = vmatpush1.msra.mxu0 0.0
    %2447 = vmatprep.subr.mxu0 0.0
    %2448 = vmatpush1.msra.mxu0 0.0
    %2449 = vmatprep.subr.mxu0 0.0
    %2450 = vmatpush1.msra.mxu0 0.0
    %2451 = vmatprep.subr.mxu0 0.0
    %2452 = vmatpush1.msra.mxu0 0.0
    %2453 = vmatprep.subr.mxu0 0.0
    %2454 = vmatpush1.msra.mxu0 0.0
    %2455 = vmatprep.subr.mxu0 0.0
    %2456 = vmatpush1.msra.mxu0 0.0
    %2457 = vmatprep.subr.mxu0 0.0
    %2458 = vmatpush1.msra.mxu0 0.0
    %2459 = vmatprep.subr.mxu0 0.0
    %2460 = vmatpush1.msra.mxu0 0.0
    %2461 = vmatprep.subr.mxu0 0.0
    %2462 = vmatpush1.msra.mxu0 0.0
    %2463 = vmatprep.subr.mxu0 0.0
    %2464 = vmatpush1.msra.mxu0 0.0
    %2465 = vmatprep.subr.mxu0 0.0
    %2466 = vmatpush1.msra.mxu0 0.0
    %2467 = vmatprep.subr.mxu0 0.0
    %2468 = vmatpush1.msra.mxu0 0.0
    %2469 = vmatprep.subr.mxu0 0.0
    %2470 = vmatpush1.msra.mxu0 0.0
    %2471 = vmatprep.subr.mxu0 0.0
    %2472 = vmatpush1.msra.mxu0 0.0
    %2473 = vmatprep.subr.mxu0 0.0
    %2474 = vmatpush1.msra.mxu0 0.0
    %2475 = vmatprep.subr.mxu0 0.0
    %2476 = vmatpush1.msra.mxu0 0.0
    %2477 = vmatprep.subr.mxu0 0.0
    %2478 = vmatpush1.msra.mxu0 0.0
    %2479 = vmatprep.subr.mxu0 0.0
    %2480 = vmatpush1.msra.mxu0 0.0
    %2481 = vmatprep.subr.mxu0 0.0
    %2482 = vmatpush1.msra.mxu0 0.0
    %2483 = vmatprep.subr.mxu0 0.0
    %2484 = vmatpush1.msra.mxu0 0.0
    %2485 = vmatprep.subr.mxu0 0.0
    %2486 = vmatpush1.msra.mxu0 0.0
    %2487 = vmatprep.subr.mxu0 0.0
    %2488 = vmatpush1.msra.mxu0 0.0
    %2489 = vmatprep.subr.mxu0 0.0
    %2490 = vmatpush1.msra.mxu0 0.0
    %2491 = vmatprep.mubr.f32.mxu0 0.0
    %2492 = vmatmul.mubr.f32.gmra.mrb[0].mxu0 %v2355
    %v2493 = vpop.f32.mrb[0].mxu0
    %v2494 = vadd.f32 0.0, %v2493
    %v2495 = vpop.f32.mrb[0].mxu0
    %2496 = vdwg.mxu0
    %2497 = vmatprep.subr.mxu0 0.0
    %2498 = vmatpush1.msra.mxu0 %v366
    %2499 = vmatprep.subr.mxu0 0.0
    %2500 = vmatpush1.msra.mxu0 %v367
    %2501 = vmatprep.subr.mxu0 0.0
    %2502 = vmatpush1.msra.mxu0 %v368
    %2503 = vmatprep.subr.mxu0 0.0
    %2504 = vmatpush1.msra.mxu0 %v369
    %2505 = vmatprep.subr.mxu0 0.0
    %2506 = vmatpush1.msra.mxu0 0.0
    %2507 = vmatprep.subr.mxu0 0.0
    %2508 = vmatpush1.msra.mxu0 0.0
    %2509 = vmatprep.subr.mxu0 0.0
    %2510 = vmatpush1.msra.mxu0 0.0
    %2511 = vmatprep.subr.mxu0 0.0
    %2512 = vmatpush1.msra.mxu0 0.0
    %2513 = vmatprep.subr.mxu0 0.0
    %2514 = vmatpush1.msra.mxu0 0.0
    %2515 = vmatprep.subr.mxu0 0.0
    %2516 = vmatpush1.msra.mxu0 0.0
    %2517 = vmatprep.subr.mxu0 0.0
    %2518 = vmatpush1.msra.mxu0 0.0
    %2519 = vmatprep.subr.mxu0 0.0
    %2520 = vmatpush1.msra.mxu0 0.0
    %2521 = vmatprep.subr.mxu0 0.0
    %2522 = vmatpush1.msra.mxu0 0.0
    %2523 = vmatprep.subr.mxu0 0.0
    %2524 = vmatpush1.msra.mxu0 0.0
    %2525 = vmatprep.subr.mxu0 0.0
    %2526 = vmatpush1.msra.mxu0 0.0
    %2527 = vmatprep.subr.mxu0 0.0
    %2528 = vmatpush1.msra.mxu0 0.0
    %2529 = vmatprep.subr.mxu0 0.0
    %2530 = vmatpush1.msra.mxu0 0.0
    %2531 = vmatprep.subr.mxu0 0.0
    %2532 = vmatpush1.msra.mxu0 0.0
    %2533 = vmatprep.subr.mxu0 0.0
    %2534 = vmatpush1.msra.mxu0 0.0
    %2535 = vmatprep.subr.mxu0 0.0
    %2536 = vmatpush1.msra.mxu0 0.0
    %2537 = vmatprep.subr.mxu0 0.0
    %2538 = vmatpush1.msra.mxu0 0.0
    %2539 = vmatprep.subr.mxu0 0.0
    %2540 = vmatpush1.msra.mxu0 0.0
    %2541 = vmatprep.subr.mxu0 0.0
    %2542 = vmatpush1.msra.mxu0 0.0
    %2543 = vmatprep.subr.mxu0 0.0
    %2544 = vmatpush1.msra.mxu0 0.0
    %2545 = vmatprep.subr.mxu0 0.0
    %2546 = vmatpush1.msra.mxu0 0.0
    %2547 = vmatprep.subr.mxu0 0.0
    %2548 = vmatpush1.msra.mxu0 0.0
    %2549 = vmatprep.subr.mxu0 0.0
    %2550 = vmatpush1.msra.mxu0 0.0
    %2551 = vmatprep.subr.mxu0 0.0
    %2552 = vmatpush1.msra.mxu0 0.0
    %2553 = vmatprep.subr.mxu0 0.0
    %2554 = vmatpush1.msra.mxu0 0.0
    %2555 = vmatprep.subr.mxu0 0.0
    %2556 = vmatpush1.msra.mxu0 0.0
    %2557 = vmatprep.subr.mxu0 0.0
    %2558 = vmatpush1.msra.mxu0 0.0
    %2559 = vmatprep.subr.mxu0 0.0
    %2560 = vmatpush1.msra.mxu0 0.0
    %2561 = vmatprep.mubr.f32.mxu0 0.0
    %2562 = vmatmul.mubr.f32.gmra.mrb[0].mxu0 %v2355
    %v2563 = vpop.f32.mrb[0].mxu0
    %v2564 = vadd.f32 %v785, %v2563
    %v2565 = vpop.f32.mrb[0].mxu0
    %2566 = vdwg.mxu0
    %v2568 = vrot.slane %v2424, 2
    %v2570 = vadd.f32 %v462, %v2568
    %v2571 = vxor.u32 %v2570, 2147483648
    %v2572 = vmul.f32 %v2571, 1.442695
    %v2573 = vpow.pop %v2572
    %v2574 = vadd.f32 %v2573, 1.0
    %v2575 = vrcp.pop %v2574
    %v2576 = vmul.f32 1.0, %v2575
    %v2578 = vrot.slane %v2494, 2
    %v2580 = vadd.f32 %v548, %v2578
    %v2581 = vxor.u32 %v2580, 2147483648
    %v2582 = vmul.f32 %v2581, 1.442695
    %v2583 = vpow.pop %v2582
    %v2584 = vadd.f32 %v2583, 1.0
    %v2585 = vrcp.pop %v2584
    %v2586 = vmul.f32 1.0, %v2585
    %v2588 = vrot.slane %v2564, 2
    %v2590 = vmul.f32 %v2576, %v2588
    %v2591 = vadd.f32 %v634, %v2590
    %v2592 = vtanh.pop %v2591
    %v2593 = vsub.f32 1.0, %v2586
    %v2594 = vmul.f32 %v2593, %v2592
    %v2595 = vrot.slane %v2351, 6
    %v2597 = vmul.f32 %v2586, %v2595
    %v2598 = vadd.f32 %v2594, %v2597
    %2599 = vst.msk [vmem:[#allocation2 + $0x8] sm:$0xc0] %vm1621, %v2598
    %v2600 = vld [vmem:[#allocation2] sm:$0xff]
    %v2601 = vld [vmem:[#allocation2 + $0x8] sm:$0xff]
    %v2602 = vld [vmem:[#allocation27] sm:$0xff]
    %v2603 = vld [vmem:[#allocation27 + $0x8] sm:$0xff]
    %v2604 = vld [vmem:[#allocation27 + $0x10] sm:$0xff]
    %v2605 = vld [vmem:[#allocation27 + $0x18] sm:$0xff]
    %v2606 = vld [vmem:[#allocation28] sm:$0xff]
    %v2607 = vld [vmem:[#allocation28 + $0x8] sm:$0xff]
    %v2608 = vld [vmem:[#allocation28 + $0x10] sm:$0xff]
    %v2609 = vld [vmem:[#allocation28 + $0x18] sm:$0xff]
    %v2610 = vld [vmem:[#allocation30] sm:$0xff]
    %v2611 = vld [vmem:[#allocation30 + $0x8] sm:$0xff]
    %v2612 = vld [vmem:[#allocation30 + $0x10] sm:$0xff]
    %v2613 = vld [vmem:[#allocation30 + $0x18] sm:$0xff]
    %v2614 = vld [vmem:[#allocation36] sm:$0x1]
    %v2615 = vld [vmem:[#allocation22] sm:$0xff]
    %v2616 = vld [vmem:[#allocation22 + $0x8] sm:$0xff]
    %v2617 = vld [vmem:[#allocation22 + $0x10] sm:$0xff]
    %v2618 = vld [vmem:[#allocation22 + $0x18] sm:$0xff]
    %v2619 = vld [vmem:[#allocation31] sm:$0x1]
    %v2621 = vlaneseq
    %v2622 = vshrl.u32 %v2621, 7
    %v2623 = vsub.s32 0, %v2622
    %v2624 = vrot.slane %v2619, %v2623
    %v2627 = vsel %vm637, %v2600, 0
    %v2630 = vsel %vm637, %v2601, 0
    %2632 = vmatprep.subr.mxu0 0.0
    %2633 = vmatpush1.msra.mxu0 %v2615
    %2634 = vmatprep.subr.mxu0 0.0
    %2635 = vmatpush1.msra.mxu0 %v2616
    %2636 = vmatprep.subr.mxu0 0.0
    %2637 = vmatpush1.msra.mxu0 %v2617
    %2638 = vmatprep.subr.mxu0 0.0
    %2639 = vmatpush1.msra.mxu0 %v2618
    %2640 = vmatprep.subr.mxu0 0.0
    %2641 = vmatpush1.msra.mxu0 0.0
    %2642 = vmatprep.subr.mxu0 0.0
    %2643 = vmatpush1.msra.mxu0 0.0
    %2644 = vmatprep.subr.mxu0 0.0
    %2645 = vmatpush1.msra.mxu0 0.0
    %2646 = vmatprep.subr.mxu0 0.0
    %2647 = vmatpush1.msra.mxu0 0.0
    %2648 = vmatprep.subr.mxu0 0.0
    %2649 = vmatpush1.msra.mxu0 0.0
    %2650 = vmatprep.subr.mxu0 0.0
    %2651 = vmatpush1.msra.mxu0 0.0
    %2652 = vmatprep.subr.mxu0 0.0
    %2653 = vmatpush1.msra.mxu0 0.0
    %2654 = vmatprep.subr.mxu0 0.0
    %2655 = vmatpush1.msra.mxu0 0.0
    %2656 = vmatprep.subr.mxu0 0.0
    %2657 = vmatpush1.msra.mxu0 0.0
    %2658 = vmatprep.subr.mxu0 0.0
    %2659 = vmatpush1.msra.mxu0 0.0
    %2660 = vmatprep.subr.mxu0 0.0
    %2661 = vmatpush1.msra.mxu0 0.0
    %2662 = vmatprep.subr.mxu0 0.0
    %2663 = vmatpush1.msra.mxu0 0.0
    %2664 = vmatprep.subr.mxu0 0.0
    %2665 = vmatpush1.msra.mxu0 0.0
    %2666 = vmatprep.subr.mxu0 0.0
    %2667 = vmatpush1.msra.mxu0 0.0
    %2668 = vmatprep.subr.mxu0 0.0
    %2669 = vmatpush1.msra.mxu0 0.0
    %2670 = vmatprep.subr.mxu0 0.0
    %2671 = vmatpush1.msra.mxu0 0.0
    %2672 = vmatprep.subr.mxu0 0.0
    %2673 = vmatpush1.msra.mxu0 0.0
    %2674 = vmatprep.subr.mxu0 0.0
    %2675 = vmatpush1.msra.mxu0 0.0
    %2676 = vmatprep.subr.mxu0 0.0
    %2677 = vmatpush1.msra.mxu0 0.0
    %2678 = vmatprep.subr.mxu0 0.0
    %2679 = vmatpush1.msra.mxu0 0.0
    %2680 = vmatprep.subr.mxu0 0.0
    %2681 = vmatpush1.msra.mxu0 0.0
    %2682 = vmatprep.subr.mxu0 0.0
    %2683 = vmatpush1.msra.mxu0 0.0
    %2684 = vmatprep.subr.mxu0 0.0
    %2685 = vmatpush1.msra.mxu0 0.0
    %2686 = vmatprep.subr.mxu0 0.0
    %2687 = vmatpush1.msra.mxu0 0.0
    %2688 = vmatprep.subr.mxu0 0.0
    %2689 = vmatpush1.msra.mxu0 0.0
    %2690 = vmatprep.subr.mxu0 0.0
    %2691 = vmatpush1.msra.mxu0 0.0
    %2692 = vmatprep.subr.mxu0 0.0
    %2693 = vmatpush1.msra.mxu0 0.0
    %2694 = vmatprep.subr.mxu0 0.0
    %2695 = vmatpush1.msra.mxu0 0.0
    %2696 = vmatprep.mubr.f32.mxu0 0.0
    %2697 = vmatmul.mubr.f32.gmra.mrb[0].mxu0 %v2627
    %v2698 = vpop.f32.mrb[0].mxu0
    %v2699 = vadd.f32 %v2624, %v2698
    %v2700 = vpop.f32.mrb[0].mxu0
    %2701 = vmatprep.mubr.f32.mxu0 0.0
    %2702 = vmatmul.mubr.f32.gmra.mrb[0].mxu0 %v2630
    %v2703 = vpop.f32.mrb[0].mxu0
    %v2704 = vadd.f32 %v2624, %v2703
    %v2705 = vpop.f32.mrb[0].mxu0
    %2706 = vdwg.mxu0
    %v2707 = vld [vmem:[#allocation24] sm:$0xff]
    %v2708 = vld [vmem:[#allocation24 + $0x8] sm:$0xff]
    %v2709 = vld [vmem:[#allocation24 + $0x10] sm:$0xff]
    %v2710 = vld [vmem:[#allocation24 + $0x18] sm:$0xff]
    %v2711 = vld [vmem:[#allocation33] sm:$0x1]
    %v2713 = vlaneseq
    %v2714 = vshrl.u32 %v2713, 7
    %v2715 = vsub.s32 0, %v2714
    %v2716 = vrot.slane %v2711, %v2715
    %2718 = vmatprep.subr.mxu0 0.0
    %2719 = vmatpush1.msra.mxu0 %v2707
    %2720 = vmatprep.subr.mxu0 0.0
    %2721 = vmatpush1.msra.mxu0 %v2708
    %2722 = vmatprep.subr.mxu0 0.0
    %2723 = vmatpush1.msra.mxu0 %v2709
    %2724 = vmatprep.subr.mxu0 0.0
    %2725 = vmatpush1.msra.mxu0 %v2710
    %2726 = vmatprep.subr.mxu0 0.0
    %2727 = vmatpush1.msra.mxu0 0.0
    %2728 = vmatprep.subr.mxu0 0.0
    %2729 = vmatpush1.msra.mxu0 0.0
    %2730 = vmatprep.subr.mxu0 0.0
    %2731 = vmatpush1.msra.mxu0 0.0
    %2732 = vmatprep.subr.mxu0 0.0
    %2733 = vmatpush1.msra.mxu0 0.0
    %2734 = vmatprep.subr.mxu0 0.0
    %2735 = vmatpush1.msra.mxu0 0.0
    %2736 = vmatprep.subr.mxu0 0.0
    %2737 = vmatpush1.msra.mxu0 0.0
    %2738 = vmatprep.subr.mxu0 0.0
    %2739 = vmatpush1.msra.mxu0 0.0
    %2740 = vmatprep.subr.mxu0 0.0
    %2741 = vmatpush1.msra.mxu0 0.0
    %2742 = vmatprep.subr.mxu0 0.0
    %2743 = vmatpush1.msra.mxu0 0.0
    %2744 = vmatprep.subr.mxu0 0.0
    %2745 = vmatpush1.msra.mxu0 0.0
    %2746 = vmatprep.subr.mxu0 0.0
    %2747 = vmatpush1.msra.mxu0 0.0
    %2748 = vmatprep.subr.mxu0 0.0
    %2749 = vmatpush1.msra.mxu0 0.0
    %2750 = vmatprep.subr.mxu0 0.0
    %2751 = vmatpush1.msra.mxu0 0.0
    %2752 = vmatprep.subr.mxu0 0.0
    %2753 = vmatpush1.msra.mxu0 0.0
    %2754 = vmatprep.subr.mxu0 0.0
    %2755 = vmatpush1.msra.mxu0 0.0
    %2756 = vmatprep.subr.mxu0 0.0
    %2757 = vmatpush1.msra.mxu0 0.0
    %2758 = vmatprep.subr.mxu0 0.0
    %2759 = vmatpush1.msra.mxu0 0.0
    %2760 = vmatprep.subr.mxu0 0.0
    %2761 = vmatpush1.msra.mxu0 0.0
    %2762 = vmatprep.subr.mxu0 0.0
    %2763 = vmatpush1.msra.mxu0 0.0
    %2764 = vmatprep.subr.mxu0 0.0
    %2765 = vmatpush1.msra.mxu0 0.0
    %2766 = vmatprep.subr.mxu0 0.0
    %2767 = vmatpush1.msra.mxu0 0.0
    %2768 = vmatprep.subr.mxu0 0.0
    %2769 = vmatpush1.msra.mxu0 0.0
    %2770 = vmatprep.subr.mxu0 0.0
    %2771 = vmatpush1.msra.mxu0 0.0
    %2772 = vmatprep.subr.mxu0 0.0
    %2773 = vmatpush1.msra.mxu0 0.0
    %2774 = vmatprep.subr.mxu0 0.0
    %2775 = vmatpush1.msra.mxu0 0.0
    %2776 = vmatprep.subr.mxu0 0.0
    %2777 = vmatpush1.msra.mxu0 0.0
    %2778 = vmatprep.subr.mxu0 0.0
    %2779 = vmatpush1.msra.mxu0 0.0
    %2780 = vmatprep.subr.mxu0 0.0
    %2781 = vmatpush1.msra.mxu0 0.0
    %2782 = vmatprep.mubr.f32.mxu0 0.0
    %2783 = vmatmul.mubr.f32.gmra.mrb[0].mxu0 %v2627
    %v2784 = vpop.f32.mrb[0].mxu0
    %v2785 = vadd.f32 %v2716, %v2784
    %v2786 = vpop.f32.mrb[0].mxu0
    %2787 = vmatprep.mubr.f32.mxu0 0.0
    %2788 = vmatmul.mubr.f32.gmra.mrb[0].mxu0 %v2630
    %v2789 = vpop.f32.mrb[0].mxu0
    %v2790 = vadd.f32 %v2716, %v2789
    %v2791 = vpop.f32.mrb[0].mxu0
    %2792 = vdwg.mxu0
    %v2793 = vld [vmem:[#allocation25] sm:$0xff]
    %v2794 = vld [vmem:[#allocation25 + $0x8] sm:$0xff]
    %v2795 = vld [vmem:[#allocation25 + $0x10] sm:$0xff]
    %v2796 = vld [vmem:[#allocation25 + $0x18] sm:$0xff]
    %v2797 = vld [vmem:[#allocation34] sm:$0x1]
    %v2799 = vlaneseq
    %v2800 = vshrl.u32 %v2799, 7
    %v2801 = vsub.s32 0, %v2800
    %v2802 = vrot.slane %v2797, %v2801
    %2804 = vmatprep.subr.mxu0 0.0
    %2805 = vmatpush1.msra.mxu0 %v2793
    %2806 = vmatprep.subr.mxu0 0.0
    %2807 = vmatpush1.msra.mxu0 %v2794
    %2808 = vmatprep.subr.mxu0 0.0
    %2809 = vmatpush1.msra.mxu0 %v2795
    %2810 = vmatprep.subr.mxu0 0.0
    %2811 = vmatpush1.msra.mxu0 %v2796
    %2812 = vmatprep.subr.mxu0 0.0
    %2813 = vmatpush1.msra.mxu0 0.0
    %2814 = vmatprep.subr.mxu0 0.0
    %2815 = vmatpush1.msra.mxu0 0.0
    %2816 = vmatprep.subr.mxu0 0.0
    %2817 = vmatpush1.msra.mxu0 0.0
    %2818 = vmatprep.subr.mxu0 0.0
    %2819 = vmatpush1.msra.mxu0 0.0
    %2820 = vmatprep.subr.mxu0 0.0
    %2821 = vmatpush1.msra.mxu0 0.0
    %2822 = vmatprep.subr.mxu0 0.0
    %2823 = vmatpush1.msra.mxu0 0.0
    %2824 = vmatprep.subr.mxu0 0.0
    %2825 = vmatpush1.msra.mxu0 0.0
    %2826 = vmatprep.subr.mxu0 0.0
    %2827 = vmatpush1.msra.mxu0 0.0
    %2828 = vmatprep.subr.mxu0 0.0
    %2829 = vmatpush1.msra.mxu0 0.0
    %2830 = vmatprep.subr.mxu0 0.0
    %2831 = vmatpush1.msra.mxu0 0.0
    %2832 = vmatprep.subr.mxu0 0.0
    %2833 = vmatpush1.msra.mxu0 0.0
    %2834 = vmatprep.subr.mxu0 0.0
    %2835 = vmatpush1.msra.mxu0 0.0
    %2836 = vmatprep.subr.mxu0 0.0
    %2837 = vmatpush1.msra.mxu0 0.0
    %2838 = vmatprep.subr.mxu0 0.0
    %2839 = vmatpush1.msra.mxu0 0.0
    %2840 = vmatprep.subr.mxu0 0.0
    %2841 = vmatpush1.msra.mxu0 0.0
    %2842 = vmatprep.subr.mxu0 0.0
    %2843 = vmatpush1.msra.mxu0 0.0
    %2844 = vmatprep.subr.mxu0 0.0
    %2845 = vmatpush1.msra.mxu0 0.0
    %2846 = vmatprep.subr.mxu0 0.0
    %2847 = vmatpush1.msra.mxu0 0.0
    %2848 = vmatprep.subr.mxu0 0.0
    %2849 = vmatpush1.msra.mxu0 0.0
    %2850 = vmatprep.subr.mxu0 0.0
    %2851 = vmatpush1.msra.mxu0 0.0
    %2852 = vmatprep.subr.mxu0 0.0
    %2853 = vmatpush1.msra.mxu0 0.0
    %2854 = vmatprep.subr.mxu0 0.0
    %2855 = vmatpush1.msra.mxu0 0.0
    %2856 = vmatprep.subr.mxu0 0.0
    %2857 = vmatpush1.msra.mxu0 0.0
    %2858 = vmatprep.subr.mxu0 0.0
    %2859 = vmatpush1.msra.mxu0 0.0
    %2860 = vmatprep.subr.mxu0 0.0
    %2861 = vmatpush1.msra.mxu0 0.0
    %2862 = vmatprep.subr.mxu0 0.0
    %2863 = vmatpush1.msra.mxu0 0.0
    %2864 = vmatprep.subr.mxu0 0.0
    %2865 = vmatpush1.msra.mxu0 0.0
    %2866 = vmatprep.subr.mxu0 0.0
    %2867 = vmatpush1.msra.mxu0 0.0
    %2868 = vmatprep.mubr.f32.mxu0 0.0
    %2869 = vmatmul.mubr.f32.gmra.mrb[0].mxu0 %v2627
    %v2870 = vpop.f32.mrb[0].mxu0
    %v2871 = vadd.f32 %v2802, %v2870
    %v2872 = vpop.f32.mrb[0].mxu0
    %2873 = vmatprep.mubr.f32.mxu0 0.0
    %2874 = vmatmul.mubr.f32.gmra.mrb[0].mxu0 %v2630
    %v2875 = vpop.f32.mrb[0].mxu0
    %v2876 = vadd.f32 %v2802, %v2875
    %v2877 = vpop.f32.mrb[0].mxu0
    %2878 = vdwg.mxu0
    %2879 = vmatprep.subr.mxu0 0.0
    %2880 = vmatpush1.msra.mxu0 %v2602
    %2881 = vmatprep.subr.mxu0 0.0
    %2882 = vmatpush1.msra.mxu0 %v2603
    %2883 = vmatprep.subr.mxu0 0.0
    %2884 = vmatpush1.msra.mxu0 %v2604
    %2885 = vmatprep.subr.mxu0 0.0
    %2886 = vmatpush1.msra.mxu0 %v2605
    %2887 = vmatprep.subr.mxu0 0.0
    %2888 = vmatpush1.msra.mxu0 0.0
    %2889 = vmatprep.subr.mxu0 0.0
    %2890 = vmatpush1.msra.mxu0 0.0
    %2891 = vmatprep.subr.mxu0 0.0
    %2892 = vmatpush1.msra.mxu0 0.0
    %2893 = vmatprep.subr.mxu0 0.0
    %2894 = vmatpush1.msra.mxu0 0.0
    %2895 = vmatprep.subr.mxu0 0.0
    %2896 = vmatpush1.msra.mxu0 0.0
    %2897 = vmatprep.subr.mxu0 0.0
    %2898 = vmatpush1.msra.mxu0 0.0
    %2899 = vmatprep.subr.mxu0 0.0
    %2900 = vmatpush1.msra.mxu0 0.0
    %2901 = vmatprep.subr.mxu0 0.0
    %2902 = vmatpush1.msra.mxu0 0.0
    %2903 = vmatprep.subr.mxu0 0.0
    %2904 = vmatpush1.msra.mxu0 0.0
    %2905 = vmatprep.subr.mxu0 0.0
    %2906 = vmatpush1.msra.mxu0 0.0
    %2907 = vmatprep.subr.mxu0 0.0
    %2908 = vmatpush1.msra.mxu0 0.0
    %2909 = vmatprep.subr.mxu0 0.0
    %2910 = vmatpush1.msra.mxu0 0.0
    %2911 = vmatprep.subr.mxu0 0.0
    %2912 = vmatpush1.msra.mxu0 0.0
    %2913 = vmatprep.subr.mxu0 0.0
    %2914 = vmatpush1.msra.mxu0 0.0
    %2915 = vmatprep.subr.mxu0 0.0
    %2916 = vmatpush1.msra.mxu0 0.0
    %2917 = vmatprep.subr.mxu0 0.0
    %2918 = vmatpush1.msra.mxu0 0.0
    %2919 = vmatprep.subr.mxu0 0.0
    %2920 = vmatpush1.msra.mxu0 0.0
    %2921 = vmatprep.subr.mxu0 0.0
    %2922 = vmatpush1.msra.mxu0 0.0
    %2923 = vmatprep.subr.mxu0 0.0
    %2924 = vmatpush1.msra.mxu0 0.0
    %2925 = vmatprep.subr.mxu0 0.0
    %2926 = vmatpush1.msra.mxu0 0.0
    %2927 = vmatprep.subr.mxu0 0.0
    %2928 = vmatpush1.msra.mxu0 0.0
    %2929 = vmatprep.subr.mxu0 0.0
    %2930 = vmatpush1.msra.mxu0 0.0
    %2931 = vmatprep.subr.mxu0 0.0
    %2932 = vmatpush1.msra.mxu0 0.0
    %2933 = vmatprep.subr.mxu0 0.0
    %2934 = vmatpush1.msra.mxu0 0.0
    %2935 = vmatprep.subr.mxu0 0.0
    %2936 = vmatpush1.msra.mxu0 0.0
    %2937 = vmatprep.subr.mxu0 0.0
    %2938 = vmatpush1.msra.mxu0 0.0
    %2939 = vmatprep.subr.mxu0 0.0
    %2940 = vmatpush1.msra.mxu0 0.0
    %2941 = vmatprep.subr.mxu0 0.0
    %2942 = vmatpush1.msra.mxu0 0.0
    %2943 = vmatprep.mubr.f32.mxu0 0.0
    %2944 = vmatmul.mubr.f32.gmra.mrb[0].mxu0 %v639
    %v2945 = vpop.f32.mrb[0].mxu0
    %v2946 = vadd.f32 0.0, %v2945
    %v2947 = vpop.f32.mrb[0].mxu0
    %2948 = vdwg.mxu0
    %2949 = vmatprep.subr.mxu0 0.0
    %2950 = vmatpush1.msra.mxu0 %v2606
    %2951 = vmatprep.subr.mxu0 0.0
    %2952 = vmatpush1.msra.mxu0 %v2607
    %2953 = vmatprep.subr.mxu0 0.0
    %2954 = vmatpush1.msra.mxu0 %v2608
    %2955 = vmatprep.subr.mxu0 0.0
    %2956 = vmatpush1.msra.mxu0 %v2609
    %2957 = vmatprep.subr.mxu0 0.0
    %2958 = vmatpush1.msra.mxu0 0.0
    %2959 = vmatprep.subr.mxu0 0.0
    %2960 = vmatpush1.msra.mxu0 0.0
    %2961 = vmatprep.subr.mxu0 0.0
    %2962 = vmatpush1.msra.mxu0 0.0
    %2963 = vmatprep.subr.mxu0 0.0
    %2964 = vmatpush1.msra.mxu0 0.0
    %2965 = vmatprep.subr.mxu0 0.0
    %2966 = vmatpush1.msra.mxu0 0.0
    %2967 = vmatprep.subr.mxu0 0.0
    %2968 = vmatpush1.msra.mxu0 0.0
    %2969 = vmatprep.subr.mxu0 0.0
    %2970 = vmatpush1.msra.mxu0 0.0
    %2971 = vmatprep.subr.mxu0 0.0
    %2972 = vmatpush1.msra.mxu0 0.0
    %2973 = vmatprep.subr.mxu0 0.0
    %2974 = vmatpush1.msra.mxu0 0.0
    %2975 = vmatprep.subr.mxu0 0.0
    %2976 = vmatpush1.msra.mxu0 0.0
    %2977 = vmatprep.subr.mxu0 0.0
    %2978 = vmatpush1.msra.mxu0 0.0
    %2979 = vmatprep.subr.mxu0 0.0
    %2980 = vmatpush1.msra.mxu0 0.0
    %2981 = vmatprep.subr.mxu0 0.0
    %2982 = vmatpush1.msra.mxu0 0.0
    %2983 = vmatprep.subr.mxu0 0.0
    %2984 = vmatpush1.msra.mxu0 0.0
    %2985 = vmatprep.subr.mxu0 0.0
    %2986 = vmatpush1.msra.mxu0 0.0
    %2987 = vmatprep.subr.mxu0 0.0
    %2988 = vmatpush1.msra.mxu0 0.0
    %2989 = vmatprep.subr.mxu0 0.0
    %2990 = vmatpush1.msra.mxu0 0.0
    %2991 = vmatprep.subr.mxu0 0.0
    %2992 = vmatpush1.msra.mxu0 0.0
    %2993 = vmatprep.subr.mxu0 0.0
    %2994 = vmatpush1.msra.mxu0 0.0
    %2995 = vmatprep.subr.mxu0 0.0
    %2996 = vmatpush1.msra.mxu0 0.0
    %2997 = vmatprep.subr.mxu0 0.0
    %2998 = vmatpush1.msra.mxu0 0.0
    %2999 = vmatprep.subr.mxu0 0.0
    %3000 = vmatpush1.msra.mxu0 0.0
    %3001 = vmatprep.subr.mxu0 0.0
    %3002 = vmatpush1.msra.mxu0 0.0
    %3003 = vmatprep.subr.mxu0 0.0
    %3004 = vmatpush1.msra.mxu0 0.0
    %3005 = vmatprep.subr.mxu0 0.0
    %3006 = vmatpush1.msra.mxu0 0.0
    %3007 = vmatprep.subr.mxu0 0.0
    %3008 = vmatpush1.msra.mxu0 0.0
    %3009 = vmatprep.subr.mxu0 0.0
    %3010 = vmatpush1.msra.mxu0 0.0
    %3011 = vmatprep.subr.mxu0 0.0
    %3012 = vmatpush1.msra.mxu0 0.0
    %3013 = vmatprep.mubr.f32.mxu0 0.0
    %3014 = vmatmul.mubr.f32.gmra.mrb[0].mxu0 %v639
    %v3015 = vpop.f32.mrb[0].mxu0
    %v3016 = vadd.f32 0.0, %v3015
    %v3017 = vpop.f32.mrb[0].mxu0
    %3018 = vdwg.mxu0
    %v3020 = vlaneseq
    %v3021 = vshrl.u32 %v3020, 7
    %v3022 = vsub.s32 0, %v3021
    %v3023 = vrot.slane %v2614, %v3022
    %3025 = vmatprep.subr.mxu0 0.0
    %3026 = vmatpush1.msra.mxu0 %v2610
    %3027 = vmatprep.subr.mxu0 0.0
    %3028 = vmatpush1.msra.mxu0 %v2611
    %3029 = vmatprep.subr.mxu0 0.0
    %3030 = vmatpush1.msra.mxu0 %v2612
    %3031 = vmatprep.subr.mxu0 0.0
    %3032 = vmatpush1.msra.mxu0 %v2613
    %3033 = vmatprep.subr.mxu0 0.0
    %3034 = vmatpush1.msra.mxu0 0.0
    %3035 = vmatprep.subr.mxu0 0.0
    %3036 = vmatpush1.msra.mxu0 0.0
    %3037 = vmatprep.subr.mxu0 0.0
    %3038 = vmatpush1.msra.mxu0 0.0
    %3039 = vmatprep.subr.mxu0 0.0
    %3040 = vmatpush1.msra.mxu0 0.0
    %3041 = vmatprep.subr.mxu0 0.0
    %3042 = vmatpush1.msra.mxu0 0.0
    %3043 = vmatprep.subr.mxu0 0.0
    %3044 = vmatpush1.msra.mxu0 0.0
    %3045 = vmatprep.subr.mxu0 0.0
    %3046 = vmatpush1.msra.mxu0 0.0
    %3047 = vmatprep.subr.mxu0 0.0
    %3048 = vmatpush1.msra.mxu0 0.0
    %3049 = vmatprep.subr.mxu0 0.0
    %3050 = vmatpush1.msra.mxu0 0.0
    %3051 = vmatprep.subr.mxu0 0.0
    %3052 = vmatpush1.msra.mxu0 0.0
    %3053 = vmatprep.subr.mxu0 0.0
    %3054 = vmatpush1.msra.mxu0 0.0
    %3055 = vmatprep.subr.mxu0 0.0
    %3056 = vmatpush1.msra.mxu0 0.0
    %3057 = vmatprep.subr.mxu0 0.0
    %3058 = vmatpush1.msra.mxu0 0.0
    %3059 = vmatprep.subr.mxu0 0.0
    %3060 = vmatpush1.msra.mxu0 0.0
    %3061 = vmatprep.subr.mxu0 0.0
    %3062 = vmatpush1.msra.mxu0 0.0
    %3063 = vmatprep.subr.mxu0 0.0
    %3064 = vmatpush1.msra.mxu0 0.0
    %3065 = vmatprep.subr.mxu0 0.0
    %3066 = vmatpush1.msra.mxu0 0.0
    %3067 = vmatprep.subr.mxu0 0.0
    %3068 = vmatpush1.msra.mxu0 0.0
    %3069 = vmatprep.subr.mxu0 0.0
    %3070 = vmatpush1.msra.mxu0 0.0
    %3071 = vmatprep.subr.mxu0 0.0
    %3072 = vmatpush1.msra.mxu0 0.0
    %3073 = vmatprep.subr.mxu0 0.0
    %3074 = vmatpush1.msra.mxu0 0.0
    %3075 = vmatprep.subr.mxu0 0.0
    %3076 = vmatpush1.msra.mxu0 0.0
    %3077 = vmatprep.subr.mxu0 0.0
    %3078 = vmatpush1.msra.mxu0 0.0
    %3079 = vmatprep.subr.mxu0 0.0
    %3080 = vmatpush1.msra.mxu0 0.0
    %3081 = vmatprep.subr.mxu0 0.0
    %3082 = vmatpush1.msra.mxu0 0.0
    %3083 = vmatprep.subr.mxu0 0.0
    %3084 = vmatpush1.msra.mxu0 0.0
    %3085 = vmatprep.subr.mxu0 0.0
    %3086 = vmatpush1.msra.mxu0 0.0
    %3087 = vmatprep.subr.mxu0 0.0
    %3088 = vmatpush1.msra.mxu0 0.0
    %3089 = vmatprep.mubr.f32.mxu0 0.0
    %3090 = vmatmul.mubr.f32.gmra.mrb[0].mxu0 %v639
    %v3091 = vpop.f32.mrb[0].mxu0
    %v3092 = vadd.f32 %v3023, %v3091
    %v3093 = vpop.f32.mrb[0].mxu0
    %3094 = vdwg.mxu0
    %v3095 = vadd.f32 %v2699, %v2946
    %v3096 = vxor.u32 %v3095, 2147483648
    %v3097 = vmul.f32 %v3096, 1.442695
    %v3098 = vpow.pop %v3097
    %v3099 = vadd.f32 %v3098, 1.0
    %v3100 = vrcp.pop %v3099
    %v3101 = vmul.f32 1.0, %v3100
    %v3102 = vadd.f32 %v2785, %v3016
    %v3103 = vxor.u32 %v3102, 2147483648
    %v3104 = vmul.f32 %v3103, 1.442695
    %v3105 = vpow.pop %v3104
    %v3106 = vadd.f32 %v3105, 1.0
    %v3107 = vrcp.pop %v3106
    %v3108 = vmul.f32 1.0, %v3107
    %v3109 = vmul.f32 %v3101, %v3092
    %v3110 = vadd.f32 %v2871, %v3109
    %v3111 = vtanh.pop %v3110
    %v3112 = vsub.f32 1.0, %v3108
    %v3113 = vmul.f32 %v3112, %v3111
    %v3114 = vmul.f32 %v3108, 0.0
    %v3115 = vadd.f32 %v3113, %v3114
    %v3117 = vsel %vm637, %v3115, 0
    %3119 = vmatprep.subr.mxu0 0.0
    %3120 = vmatpush1.msra.mxu0 %v2602
    %3121 = vmatprep.subr.mxu0 0.0
    %3122 = vmatpush1.msra.mxu0 %v2603
    %3123 = vmatprep.subr.mxu0 0.0
    %3124 = vmatpush1.msra.mxu0 %v2604
    %3125 = vmatprep.subr.mxu0 0.0
    %3126 = vmatpush1.msra.mxu0 %v2605
    %3127 = vmatprep.subr.mxu0 0.0
    %3128 = vmatpush1.msra.mxu0 0.0
    %3129 = vmatprep.subr.mxu0 0.0
    %3130 = vmatpush1.msra.mxu0 0.0
    %3131 = vmatprep.subr.mxu0 0.0
    %3132 = vmatpush1.msra.mxu0 0.0
    %3133 = vmatprep.subr.mxu0 0.0
    %3134 = vmatpush1.msra.mxu0 0.0
    %3135 = vmatprep.subr.mxu0 0.0
    %3136 = vmatpush1.msra.mxu0 0.0
    %3137 = vmatprep.subr.mxu0 0.0
    %3138 = vmatpush1.msra.mxu0 0.0
    %3139 = vmatprep.subr.mxu0 0.0
    %3140 = vmatpush1.msra.mxu0 0.0
    %3141 = vmatprep.subr.mxu0 0.0
    %3142 = vmatpush1.msra.mxu0 0.0
    %3143 = vmatprep.subr.mxu0 0.0
    %3144 = vmatpush1.msra.mxu0 0.0
    %3145 = vmatprep.subr.mxu0 0.0
    %3146 = vmatpush1.msra.mxu0 0.0
    %3147 = vmatprep.subr.mxu0 0.0
    %3148 = vmatpush1.msra.mxu0 0.0
    %3149 = vmatprep.subr.mxu0 0.0
    %3150 = vmatpush1.msra.mxu0 0.0
    %3151 = vmatprep.subr.mxu0 0.0
    %3152 = vmatpush1.msra.mxu0 0.0
    %3153 = vmatprep.subr.mxu0 0.0
    %3154 = vmatpush1.msra.mxu0 0.0
    %3155 = vmatprep.subr.mxu0 0.0
    %3156 = vmatpush1.msra.mxu0 0.0
    %3157 = vmatprep.subr.mxu0 0.0
    %3158 = vmatpush1.msra.mxu0 0.0
    %3159 = vmatprep.subr.mxu0 0.0
    %3160 = vmatpush1.msra.mxu0 0.0
    %3161 = vmatprep.subr.mxu0 0.0
    %3162 = vmatpush1.msra.mxu0 0.0
    %3163 = vmatprep.subr.mxu0 0.0
    %3164 = vmatpush1.msra.mxu0 0.0
    %3165 = vmatprep.subr.mxu0 0.0
    %3166 = vmatpush1.msra.mxu0 0.0
    %3167 = vmatprep.subr.mxu0 0.0
    %3168 = vmatpush1.msra.mxu0 0.0
    %3169 = vmatprep.subr.mxu0 0.0
    %3170 = vmatpush1.msra.mxu0 0.0
    %3171 = vmatprep.subr.mxu0 0.0
    %3172 = vmatpush1.msra.mxu0 0.0
    %3173 = vmatprep.subr.mxu0 0.0
    %3174 = vmatpush1.msra.mxu0 0.0
    %3175 = vmatprep.subr.mxu0 0.0
    %3176 = vmatpush1.msra.mxu0 0.0
    %3177 = vmatprep.subr.mxu0 0.0
    %3178 = vmatpush1.msra.mxu0 0.0
    %3179 = vmatprep.subr.mxu0 0.0
    %3180 = vmatpush1.msra.mxu0 0.0
    %3181 = vmatprep.subr.mxu0 0.0
    %3182 = vmatpush1.msra.mxu0 0.0
    %3183 = vmatprep.mubr.f32.mxu0 0.0
    %3184 = vmatmul.mubr.f32.gmra.mrb[0].mxu0 %v3117
    %v3185 = vpop.f32.mrb[0].mxu0
    %v3186 = vadd.f32 0.0, %v3185
    %v3187 = vpop.f32.mrb[0].mxu0
    %3188 = vdwg.mxu0
    %3189 = vmatprep.subr.mxu0 0.0
    %3190 = vmatpush1.msra.mxu0 %v2606
    %3191 = vmatprep.subr.mxu0 0.0
    %3192 = vmatpush1.msra.mxu0 %v2607
    %3193 = vmatprep.subr.mxu0 0.0
    %3194 = vmatpush1.msra.mxu0 %v2608
    %3195 = vmatprep.subr.mxu0 0.0
    %3196 = vmatpush1.msra.mxu0 %v2609
    %3197 = vmatprep.subr.mxu0 0.0
    %3198 = vmatpush1.msra.mxu0 0.0
    %3199 = vmatprep.subr.mxu0 0.0
    %3200 = vmatpush1.msra.mxu0 0.0
    %3201 = vmatprep.subr.mxu0 0.0
    %3202 = vmatpush1.msra.mxu0 0.0
    %3203 = vmatprep.subr.mxu0 0.0
    %3204 = vmatpush1.msra.mxu0 0.0
    %3205 = vmatprep.subr.mxu0 0.0
    %3206 = vmatpush1.msra.mxu0 0.0
    %3207 = vmatprep.subr.mxu0 0.0
    %3208 = vmatpush1.msra.mxu0 0.0
    %3209 = vmatprep.subr.mxu0 0.0
    %3210 = vmatpush1.msra.mxu0 0.0
    %3211 = vmatprep.subr.mxu0 0.0
    %3212 = vmatpush1.msra.mxu0 0.0
    %3213 = vmatprep.subr.mxu0 0.0
    %3214 = vmatpush1.msra.mxu0 0.0
    %3215 = vmatprep.subr.mxu0 0.0
    %3216 = vmatpush1.msra.mxu0 0.0
    %3217 = vmatprep.subr.mxu0 0.0
    %3218 = vmatpush1.msra.mxu0 0.0
    %3219 = vmatprep.subr.mxu0 0.0
    %3220 = vmatpush1.msra.mxu0 0.0
    %3221 = vmatprep.subr.mxu0 0.0
    %3222 = vmatpush1.msra.mxu0 0.0
    %3223 = vmatprep.subr.mxu0 0.0
    %3224 = vmatpush1.msra.mxu0 0.0
    %3225 = vmatprep.subr.mxu0 0.0
    %3226 = vmatpush1.msra.mxu0 0.0
    %3227 = vmatprep.subr.mxu0 0.0
    %3228 = vmatpush1.msra.mxu0 0.0
    %3229 = vmatprep.subr.mxu0 0.0
    %3230 = vmatpush1.msra.mxu0 0.0
    %3231 = vmatprep.subr.mxu0 0.0
    %3232 = vmatpush1.msra.mxu0 0.0
    %3233 = vmatprep.subr.mxu0 0.0
    %3234 = vmatpush1.msra.mxu0 0.0
    %3235 = vmatprep.subr.mxu0 0.0
    %3236 = vmatpush1.msra.mxu0 0.0
    %3237 = vmatprep.subr.mxu0 0.0
    %3238 = vmatpush1.msra.mxu0 0.0
    %3239 = vmatprep.subr.mxu0 0.0
    %3240 = vmatpush1.msra.mxu0 0.0
    %3241 = vmatprep.subr.mxu0 0.0
    %3242 = vmatpush1.msra.mxu0 0.0
    %3243 = vmatprep.subr.mxu0 0.0
    %3244 = vmatpush1.msra.mxu0 0.0
    %3245 = vmatprep.subr.mxu0 0.0
    %3246 = vmatpush1.msra.mxu0 0.0
    %3247 = vmatprep.subr.mxu0 0.0
    %3248 = vmatpush1.msra.mxu0 0.0
    %3249 = vmatprep.subr.mxu0 0.0
    %3250 = vmatpush1.msra.mxu0 0.0
    %3251 = vmatprep.subr.mxu0 0.0
    %3252 = vmatpush1.msra.mxu0 0.0
    %3253 = vmatprep.mubr.f32.mxu0 0.0
    %3254 = vmatmul.mubr.f32.gmra.mrb[0].mxu0 %v3117
    %v3255 = vpop.f32.mrb[0].mxu0
    %v3256 = vadd.f32 0.0, %v3255
    %v3257 = vpop.f32.mrb[0].mxu0
    %3258 = vdwg.mxu0
    %3259 = vmatprep.subr.mxu0 0.0
    %3260 = vmatpush1.msra.mxu0 %v2610
    %3261 = vmatprep.subr.mxu0 0.0
    %3262 = vmatpush1.msra.mxu0 %v2611
    %3263 = vmatprep.subr.mxu0 0.0
    %3264 = vmatpush1.msra.mxu0 %v2612
    %3265 = vmatprep.subr.mxu0 0.0
    %3266 = vmatpush1.msra.mxu0 %v2613
    %3267 = vmatprep.subr.mxu0 0.0
    %3268 = vmatpush1.msra.mxu0 0.0
    %3269 = vmatprep.subr.mxu0 0.0
    %3270 = vmatpush1.msra.mxu0 0.0
    %3271 = vmatprep.subr.mxu0 0.0
    %3272 = vmatpush1.msra.mxu0 0.0
    %3273 = vmatprep.subr.mxu0 0.0
    %3274 = vmatpush1.msra.mxu0 0.0
    %3275 = vmatprep.subr.mxu0 0.0
    %3276 = vmatpush1.msra.mxu0 0.0
    %3277 = vmatprep.subr.mxu0 0.0
    %3278 = vmatpush1.msra.mxu0 0.0
    %3279 = vmatprep.subr.mxu0 0.0
    %3280 = vmatpush1.msra.mxu0 0.0
    %3281 = vmatprep.subr.mxu0 0.0
    %3282 = vmatpush1.msra.mxu0 0.0
    %3283 = vmatprep.subr.mxu0 0.0
    %3284 = vmatpush1.msra.mxu0 0.0
    %3285 = vmatprep.subr.mxu0 0.0
    %3286 = vmatpush1.msra.mxu0 0.0
    %3287 = vmatprep.subr.mxu0 0.0
    %3288 = vmatpush1.msra.mxu0 0.0
    %3289 = vmatprep.subr.mxu0 0.0
    %3290 = vmatpush1.msra.mxu0 0.0
    %3291 = vmatprep.subr.mxu0 0.0
    %3292 = vmatpush1.msra.mxu0 0.0
    %3293 = vmatprep.subr.mxu0 0.0
    %3294 = vmatpush1.msra.mxu0 0.0
    %3295 = vmatprep.subr.mxu0 0.0
    %3296 = vmatpush1.msra.mxu0 0.0
    %3297 = vmatprep.subr.mxu0 0.0
    %3298 = vmatpush1.msra.mxu0 0.0
    %3299 = vmatprep.subr.mxu0 0.0
    %3300 = vmatpush1.msra.mxu0 0.0
    %3301 = vmatprep.subr.mxu0 0.0
    %3302 = vmatpush1.msra.mxu0 0.0
    %3303 = vmatprep.subr.mxu0 0.0
    %3304 = vmatpush1.msra.mxu0 0.0
    %3305 = vmatprep.subr.mxu0 0.0
    %3306 = vmatpush1.msra.mxu0 0.0
    %3307 = vmatprep.subr.mxu0 0.0
    %3308 = vmatpush1.msra.mxu0 0.0
    %3309 = vmatprep.subr.mxu0 0.0
    %3310 = vmatpush1.msra.mxu0 0.0
    %3311 = vmatprep.subr.mxu0 0.0
    %3312 = vmatpush1.msra.mxu0 0.0
    %3313 = vmatprep.subr.mxu0 0.0
    %3314 = vmatpush1.msra.mxu0 0.0
    %3315 = vmatprep.subr.mxu0 0.0
    %3316 = vmatpush1.msra.mxu0 0.0
    %3317 = vmatprep.subr.mxu0 0.0
    %3318 = vmatpush1.msra.mxu0 0.0
    %3319 = vmatprep.subr.mxu0 0.0
    %3320 = vmatpush1.msra.mxu0 0.0
    %3321 = vmatprep.subr.mxu0 0.0
    %3322 = vmatpush1.msra.mxu0 0.0
    %3323 = vmatprep.mubr.f32.mxu0 0.0
    %3324 = vmatmul.mubr.f32.gmra.mrb[0].mxu0 %v3117
    %v3325 = vpop.f32.mrb[0].mxu0
    %v3326 = vadd.f32 %v3023, %v3325
    %v3327 = vpop.f32.mrb[0].mxu0
    %3328 = vdwg.mxu0
    %v3330 = vrot.slane %v3186, 6
    %v3332 = vadd.f32 %v2699, %v3330
    %v3333 = vxor.u32 %v3332, 2147483648
    %v3334 = vmul.f32 %v3333, 1.442695
    %v3335 = vpow.pop %v3334
    %v3336 = vadd.f32 %v3335, 1.0
    %v3337 = vrcp.pop %v3336
    %v3338 = vmul.f32 1.0, %v3337
    %v3340 = vrot.slane %v3256, 6
    %v3342 = vadd.f32 %v2785, %v3340
    %v3343 = vxor.u32 %v3342, 2147483648
    %v3344 = vmul.f32 %v3343, 1.442695
    %v3345 = vpow.pop %v3344
    %v3346 = vadd.f32 %v3345, 1.0
    %v3347 = vrcp.pop %v3346
    %v3348 = vmul.f32 1.0, %v3347
    %v3350 = vrot.slane %v3326, 6
    %v3352 = vmul.f32 %v3338, %v3350
    %v3353 = vadd.f32 %v2871, %v3352
    %v3354 = vtanh.pop %v3353
    %v3355 = vsub.f32 1.0, %v3348
    %v3356 = vmul.f32 %v3355, %v3354
    %v3357 = vrot.slane %v3115, 6
    %v3359 = vmul.f32 %v3348, %v3357
    %v3360 = vadd.f32 %v3356, %v3359
    %v3362 = vrot.slane %v3360, 2
    %v3363 = vsel %vm637, %v3362, 0
    %3365 = vmatprep.subr.mxu0 0.0
    %3366 = vmatpush1.msra.mxu0 %v2602
    %3367 = vmatprep.subr.mxu0 0.0
    %3368 = vmatpush1.msra.mxu0 %v2603
    %3369 = vmatprep.subr.mxu0 0.0
    %3370 = vmatpush1.msra.mxu0 %v2604
    %3371 = vmatprep.subr.mxu0 0.0
    %3372 = vmatpush1.msra.mxu0 %v2605
    %3373 = vmatprep.subr.mxu0 0.0
    %3374 = vmatpush1.msra.mxu0 0.0
    %3375 = vmatprep.subr.mxu0 0.0
    %3376 = vmatpush1.msra.mxu0 0.0
    %3377 = vmatprep.subr.mxu0 0.0
    %3378 = vmatpush1.msra.mxu0 0.0
    %3379 = vmatprep.subr.mxu0 0.0
    %3380 = vmatpush1.msra.mxu0 0.0
    %3381 = vmatprep.subr.mxu0 0.0
    %3382 = vmatpush1.msra.mxu0 0.0
    %3383 = vmatprep.subr.mxu0 0.0
    %3384 = vmatpush1.msra.mxu0 0.0
    %3385 = vmatprep.subr.mxu0 0.0
    %3386 = vmatpush1.msra.mxu0 0.0
    %3387 = vmatprep.subr.mxu0 0.0
    %3388 = vmatpush1.msra.mxu0 0.0
    %3389 = vmatprep.subr.mxu0 0.0
    %3390 = vmatpush1.msra.mxu0 0.0
    %3391 = vmatprep.subr.mxu0 0.0
    %3392 = vmatpush1.msra.mxu0 0.0
    %3393 = vmatprep.subr.mxu0 0.0
    %3394 = vmatpush1.msra.mxu0 0.0
    %3395 = vmatprep.subr.mxu0 0.0
    %3396 = vmatpush1.msra.mxu0 0.0
    %3397 = vmatprep.subr.mxu0 0.0
    %3398 = vmatpush1.msra.mxu0 0.0
    %3399 = vmatprep.subr.mxu0 0.0
    %3400 = vmatpush1.msra.mxu0 0.0
    %3401 = vmatprep.subr.mxu0 0.0
    %3402 = vmatpush1.msra.mxu0 0.0
    %3403 = vmatprep.subr.mxu0 0.0
    %3404 = vmatpush1.msra.mxu0 0.0
    %3405 = vmatprep.subr.mxu0 0.0
    %3406 = vmatpush1.msra.mxu0 0.0
    %3407 = vmatprep.subr.mxu0 0.0
    %3408 = vmatpush1.msra.mxu0 0.0
    %3409 = vmatprep.subr.mxu0 0.0
    %3410 = vmatpush1.msra.mxu0 0.0
    %3411 = vmatprep.subr.mxu0 0.0
    %3412 = vmatpush1.msra.mxu0 0.0
    %3413 = vmatprep.subr.mxu0 0.0
    %3414 = vmatpush1.msra.mxu0 0.0
    %3415 = vmatprep.subr.mxu0 0.0
    %3416 = vmatpush1.msra.mxu0 0.0
    %3417 = vmatprep.subr.mxu0 0.0
    %3418 = vmatpush1.msra.mxu0 0.0
    %3419 = vmatprep.subr.mxu0 0.0
    %3420 = vmatpush1.msra.mxu0 0.0
    %3421 = vmatprep.subr.mxu0 0.0
    %3422 = vmatpush1.msra.mxu0 0.0
    %3423 = vmatprep.subr.mxu0 0.0
    %3424 = vmatpush1.msra.mxu0 0.0
    %3425 = vmatprep.subr.mxu0 0.0
    %3426 = vmatpush1.msra.mxu0 0.0
    %3427 = vmatprep.subr.mxu0 0.0
    %3428 = vmatpush1.msra.mxu0 0.0
    %3429 = vmatprep.mubr.f32.mxu0 0.0
    %3430 = vmatmul.mubr.f32.gmra.mrb[0].mxu0 %v3363
    %v3431 = vpop.f32.mrb[0].mxu0
    %v3432 = vadd.f32 0.0, %v3431
    %v3433 = vpop.f32.mrb[0].mxu0
    %3434 = vdwg.mxu0
    %3435 = vmatprep.subr.mxu0 0.0
    %3436 = vmatpush1.msra.mxu0 %v2606
    %3437 = vmatprep.subr.mxu0 0.0
    %3438 = vmatpush1.msra.mxu0 %v2607
    %3439 = vmatprep.subr.mxu0 0.0
    %3440 = vmatpush1.msra.mxu0 %v2608
    %3441 = vmatprep.subr.mxu0 0.0
    %3442 = vmatpush1.msra.mxu0 %v2609
    %3443 = vmatprep.subr.mxu0 0.0
    %3444 = vmatpush1.msra.mxu0 0.0
    %3445 = vmatprep.subr.mxu0 0.0
    %3446 = vmatpush1.msra.mxu0 0.0
    %3447 = vmatprep.subr.mxu0 0.0
    %3448 = vmatpush1.msra.mxu0 0.0
    %3449 = vmatprep.subr.mxu0 0.0
    %3450 = vmatpush1.msra.mxu0 0.0
    %3451 = vmatprep.subr.mxu0 0.0
    %3452 = vmatpush1.msra.mxu0 0.0
    %3453 = vmatprep.subr.mxu0 0.0
    %3454 = vmatpush1.msra.mxu0 0.0
    %3455 = vmatprep.subr.mxu0 0.0
    %3456 = vmatpush1.msra.mxu0 0.0
    %3457 = vmatprep.subr.mxu0 0.0
    %3458 = vmatpush1.msra.mxu0 0.0
    %3459 = vmatprep.subr.mxu0 0.0
    %3460 = vmatpush1.msra.mxu0 0.0
    %3461 = vmatprep.subr.mxu0 0.0
    %3462 = vmatpush1.msra.mxu0 0.0
    %3463 = vmatprep.subr.mxu0 0.0
    %3464 = vmatpush1.msra.mxu0 0.0
    %3465 = vmatprep.subr.mxu0 0.0
    %3466 = vmatpush1.msra.mxu0 0.0
    %3467 = vmatprep.subr.mxu0 0.0
    %3468 = vmatpush1.msra.mxu0 0.0
    %3469 = vmatprep.subr.mxu0 0.0
    %3470 = vmatpush1.msra.mxu0 0.0
    %3471 = vmatprep.subr.mxu0 0.0
    %3472 = vmatpush1.msra.mxu0 0.0
    %3473 = vmatprep.subr.mxu0 0.0
    %3474 = vmatpush1.msra.mxu0 0.0
    %3475 = vmatprep.subr.mxu0 0.0
    %3476 = vmatpush1.msra.mxu0 0.0
    %3477 = vmatprep.subr.mxu0 0.0
    %3478 = vmatpush1.msra.mxu0 0.0
    %3479 = vmatprep.subr.mxu0 0.0
    %3480 = vmatpush1.msra.mxu0 0.0
    %3481 = vmatprep.subr.mxu0 0.0
    %3482 = vmatpush1.msra.mxu0 0.0
    %3483 = vmatprep.subr.mxu0 0.0
    %3484 = vmatpush1.msra.mxu0 0.0
    %3485 = vmatprep.subr.mxu0 0.0
    %3486 = vmatpush1.msra.mxu0 0.0
    %3487 = vmatprep.subr.mxu0 0.0
    %3488 = vmatpush1.msra.mxu0 0.0
    %3489 = vmatprep.subr.mxu0 0.0
    %3490 = vmatpush1.msra.mxu0 0.0
    %3491 = vmatprep.subr.mxu0 0.0
    %3492 = vmatpush1.msra.mxu0 0.0
    %3493 = vmatprep.subr.mxu0 0.0
    %3494 = vmatpush1.msra.mxu0 0.0
    %3495 = vmatprep.subr.mxu0 0.0
    %3496 = vmatpush1.msra.mxu0 0.0
    %3497 = vmatprep.subr.mxu0 0.0
    %3498 = vmatpush1.msra.mxu0 0.0
    %3499 = vmatprep.mubr.f32.mxu0 0.0
    %3500 = vmatmul.mubr.f32.gmra.mrb[0].mxu0 %v3363
    %v3501 = vpop.f32.mrb[0].mxu0
    %v3502 = vadd.f32 0.0, %v3501
    %v3503 = vpop.f32.mrb[0].mxu0
    %3504 = vdwg.mxu0
    %3505 = vmatprep.subr.mxu0 0.0
    %3506 = vmatpush1.msra.mxu0 %v2610
    %3507 = vmatprep.subr.mxu0 0.0
    %3508 = vmatpush1.msra.mxu0 %v2611
    %3509 = vmatprep.subr.mxu0 0.0
    %3510 = vmatpush1.msra.mxu0 %v2612
    %3511 = vmatprep.subr.mxu0 0.0
    %3512 = vmatpush1.msra.mxu0 %v2613
    %3513 = vmatprep.subr.mxu0 0.0
    %3514 = vmatpush1.msra.mxu0 0.0
    %3515 = vmatprep.subr.mxu0 0.0
    %3516 = vmatpush1.msra.mxu0 0.0
    %3517 = vmatprep.subr.mxu0 0.0
    %3518 = vmatpush1.msra.mxu0 0.0
    %3519 = vmatprep.subr.mxu0 0.0
    %3520 = vmatpush1.msra.mxu0 0.0
    %3521 = vmatprep.subr.mxu0 0.0
    %3522 = vmatpush1.msra.mxu0 0.0
    %3523 = vmatprep.subr.mxu0 0.0
    %3524 = vmatpush1.msra.mxu0 0.0
    %3525 = vmatprep.subr.mxu0 0.0
    %3526 = vmatpush1.msra.mxu0 0.0
    %3527 = vmatprep.subr.mxu0 0.0
    %3528 = vmatpush1.msra.mxu0 0.0
    %3529 = vmatprep.subr.mxu0 0.0
    %3530 = vmatpush1.msra.mxu0 0.0
    %3531 = vmatprep.subr.mxu0 0.0
    %3532 = vmatpush1.msra.mxu0 0.0
    %3533 = vmatprep.subr.mxu0 0.0
    %3534 = vmatpush1.msra.mxu0 0.0
    %3535 = vmatprep.subr.mxu0 0.0
    %3536 = vmatpush1.msra.mxu0 0.0
    %3537 = vmatprep.subr.mxu0 0.0
    %3538 = vmatpush1.msra.mxu0 0.0
    %3539 = vmatprep.subr.mxu0 0.0
    %3540 = vmatpush1.msra.mxu0 0.0
    %3541 = vmatprep.subr.mxu0 0.0
    %3542 = vmatpush1.msra.mxu0 0.0
    %3543 = vmatprep.subr.mxu0 0.0
    %3544 = vmatpush1.msra.mxu0 0.0
    %3545 = vmatprep.subr.mxu0 0.0
    %3546 = vmatpush1.msra.mxu0 0.0
    %3547 = vmatprep.subr.mxu0 0.0
    %3548 = vmatpush1.msra.mxu0 0.0
    %3549 = vmatprep.subr.mxu0 0.0
    %3550 = vmatpush1.msra.mxu0 0.0
    %3551 = vmatprep.subr.mxu0 0.0
    %3552 = vmatpush1.msra.mxu0 0.0
    %3553 = vmatprep.subr.mxu0 0.0
    %3554 = vmatpush1.msra.mxu0 0.0
    %3555 = vmatprep.subr.mxu0 0.0
    %3556 = vmatpush1.msra.mxu0 0.0
    %3557 = vmatprep.subr.mxu0 0.0
    %3558 = vmatpush1.msra.mxu0 0.0
    %3559 = vmatprep.subr.mxu0 0.0
    %3560 = vmatpush1.msra.mxu0 0.0
    %3561 = vmatprep.subr.mxu0 0.0
    %3562 = vmatpush1.msra.mxu0 0.0
    %3563 = vmatprep.subr.mxu0 0.0
    %3564 = vmatpush1.msra.mxu0 0.0
    %3565 = vmatprep.subr.mxu0 0.0
    %3566 = vmatpush1.msra.mxu0 0.0
    %3567 = vmatprep.subr.mxu0 0.0
    %3568 = vmatpush1.msra.mxu0 0.0
    %3569 = vmatprep.mubr.f32.mxu0 0.0
    %3570 = vmatmul.mubr.f32.gmra.mrb[0].mxu0 %v3363
    %v3571 = vpop.f32.mrb[0].mxu0
    %v3572 = vadd.f32 %v3023, %v3571
    %v3573 = vpop.f32.mrb[0].mxu0
    %3574 = vdwg.mxu0
    %v3576 = vrot.slane %v3432, 4
    %v3578 = vadd.f32 %v2699, %v3576
    %v3579 = vxor.u32 %v3578, 2147483648
    %v3580 = vmul.f32 %v3579, 1.442695
    %v3581 = vpow.pop %v3580
    %v3582 = vadd.f32 %v3581, 1.0
    %v3583 = vrcp.pop %v3582
    %v3584 = vmul.f32 1.0, %v3583
    %v3586 = vrot.slane %v3502, 4
    %v3588 = vadd.f32 %v2785, %v3586
    %v3589 = vxor.u32 %v3588, 2147483648
    %v3590 = vmul.f32 %v3589, 1.442695
    %v3591 = vpow.pop %v3590
    %v3592 = vadd.f32 %v3591, 1.0
    %v3593 = vrcp.pop %v3592
    %v3594 = vmul.f32 1.0, %v3593
    %v3596 = vrot.slane %v3572, 4
    %v3598 = vmul.f32 %v3584, %v3596
    %v3599 = vadd.f32 %v2871, %v3598
    %v3600 = vtanh.pop %v3599
    %v3601 = vsub.f32 1.0, %v3594
    %v3602 = vmul.f32 %v3601, %v3600
    %v3603 = vrot.slane %v3360, 6
    %v3605 = vmul.f32 %v3594, %v3603
    %v3606 = vadd.f32 %v3602, %v3605
    %v3608 = vrot.slane %v3606, 4
    %v3609 = vsel %vm637, %v3608, 0
    %3611 = vmatprep.subr.mxu0 0.0
    %3612 = vmatpush1.msra.mxu0 %v2602
    %3613 = vmatprep.subr.mxu0 0.0
    %3614 = vmatpush1.msra.mxu0 %v2603
    %3615 = vmatprep.subr.mxu0 0.0
    %3616 = vmatpush1.msra.mxu0 %v2604
    %3617 = vmatprep.subr.mxu0 0.0
    %3618 = vmatpush1.msra.mxu0 %v2605
    %3619 = vmatprep.subr.mxu0 0.0
    %3620 = vmatpush1.msra.mxu0 0.0
    %3621 = vmatprep.subr.mxu0 0.0
    %3622 = vmatpush1.msra.mxu0 0.0
    %3623 = vmatprep.subr.mxu0 0.0
    %3624 = vmatpush1.msra.mxu0 0.0
    %3625 = vmatprep.subr.mxu0 0.0
    %3626 = vmatpush1.msra.mxu0 0.0
    %3627 = vmatprep.subr.mxu0 0.0
    %3628 = vmatpush1.msra.mxu0 0.0
    %3629 = vmatprep.subr.mxu0 0.0
    %3630 = vmatpush1.msra.mxu0 0.0
    %3631 = vmatprep.subr.mxu0 0.0
    %3632 = vmatpush1.msra.mxu0 0.0
    %3633 = vmatprep.subr.mxu0 0.0
    %3634 = vmatpush1.msra.mxu0 0.0
    %3635 = vmatprep.subr.mxu0 0.0
    %3636 = vmatpush1.msra.mxu0 0.0
    %3637 = vmatprep.subr.mxu0 0.0
    %3638 = vmatpush1.msra.mxu0 0.0
    %3639 = vmatprep.subr.mxu0 0.0
    %3640 = vmatpush1.msra.mxu0 0.0
    %3641 = vmatprep.subr.mxu0 0.0
    %3642 = vmatpush1.msra.mxu0 0.0
    %3643 = vmatprep.subr.mxu0 0.0
    %3644 = vmatpush1.msra.mxu0 0.0
    %3645 = vmatprep.subr.mxu0 0.0
    %3646 = vmatpush1.msra.mxu0 0.0
    %3647 = vmatprep.subr.mxu0 0.0
    %3648 = vmatpush1.msra.mxu0 0.0
    %3649 = vmatprep.subr.mxu0 0.0
    %3650 = vmatpush1.msra.mxu0 0.0
    %3651 = vmatprep.subr.mxu0 0.0
    %3652 = vmatpush1.msra.mxu0 0.0
    %3653 = vmatprep.subr.mxu0 0.0
    %3654 = vmatpush1.msra.mxu0 0.0
    %3655 = vmatprep.subr.mxu0 0.0
    %3656 = vmatpush1.msra.mxu0 0.0
    %3657 = vmatprep.subr.mxu0 0.0
    %3658 = vmatpush1.msra.mxu0 0.0
    %3659 = vmatprep.subr.mxu0 0.0
    %3660 = vmatpush1.msra.mxu0 0.0
    %3661 = vmatprep.subr.mxu0 0.0
    %3662 = vmatpush1.msra.mxu0 0.0
    %3663 = vmatprep.subr.mxu0 0.0
    %3664 = vmatpush1.msra.mxu0 0.0
    %3665 = vmatprep.subr.mxu0 0.0
    %3666 = vmatpush1.msra.mxu0 0.0
    %3667 = vmatprep.subr.mxu0 0.0
    %3668 = vmatpush1.msra.mxu0 0.0
    %3669 = vmatprep.subr.mxu0 0.0
    %3670 = vmatpush1.msra.mxu0 0.0
    %3671 = vmatprep.subr.mxu0 0.0
    %3672 = vmatpush1.msra.mxu0 0.0
    %3673 = vmatprep.subr.mxu0 0.0
    %3674 = vmatpush1.msra.mxu0 0.0
    %3675 = vmatprep.mubr.f32.mxu0 0.0
    %3676 = vmatmul.mubr.f32.gmra.mrb[0].mxu0 %v3609
    %v3677 = vpop.f32.mrb[0].mxu0
    %v3678 = vadd.f32 0.0, %v3677
    %v3679 = vpop.f32.mrb[0].mxu0
    %3680 = vdwg.mxu0
    %3681 = vmatprep.subr.mxu0 0.0
    %3682 = vmatpush1.msra.mxu0 %v2606
    %3683 = vmatprep.subr.mxu0 0.0
    %3684 = vmatpush1.msra.mxu0 %v2607
    %3685 = vmatprep.subr.mxu0 0.0
    %3686 = vmatpush1.msra.mxu0 %v2608
    %3687 = vmatprep.subr.mxu0 0.0
    %3688 = vmatpush1.msra.mxu0 %v2609
    %3689 = vmatprep.subr.mxu0 0.0
    %3690 = vmatpush1.msra.mxu0 0.0
    %3691 = vmatprep.subr.mxu0 0.0
    %3692 = vmatpush1.msra.mxu0 0.0
    %3693 = vmatprep.subr.mxu0 0.0
    %3694 = vmatpush1.msra.mxu0 0.0
    %3695 = vmatprep.subr.mxu0 0.0
    %3696 = vmatpush1.msra.mxu0 0.0
    %3697 = vmatprep.subr.mxu0 0.0
    %3698 = vmatpush1.msra.mxu0 0.0
    %3699 = vmatprep.subr.mxu0 0.0
    %3700 = vmatpush1.msra.mxu0 0.0
    %3701 = vmatprep.subr.mxu0 0.0
    %3702 = vmatpush1.msra.mxu0 0.0
    %3703 = vmatprep.subr.mxu0 0.0
    %3704 = vmatpush1.msra.mxu0 0.0
    %3705 = vmatprep.subr.mxu0 0.0
    %3706 = vmatpush1.msra.mxu0 0.0
    %3707 = vmatprep.subr.mxu0 0.0
    %3708 = vmatpush1.msra.mxu0 0.0
    %3709 = vmatprep.subr.mxu0 0.0
    %3710 = vmatpush1.msra.mxu0 0.0
    %3711 = vmatprep.subr.mxu0 0.0
    %3712 = vmatpush1.msra.mxu0 0.0
    %3713 = vmatprep.subr.mxu0 0.0
    %3714 = vmatpush1.msra.mxu0 0.0
    %3715 = vmatprep.subr.mxu0 0.0
    %3716 = vmatpush1.msra.mxu0 0.0
    %3717 = vmatprep.subr.mxu0 0.0
    %3718 = vmatpush1.msra.mxu0 0.0
    %3719 = vmatprep.subr.mxu0 0.0
    %3720 = vmatpush1.msra.mxu0 0.0
    %3721 = vmatprep.subr.mxu0 0.0
    %3722 = vmatpush1.msra.mxu0 0.0
    %3723 = vmatprep.subr.mxu0 0.0
    %3724 = vmatpush1.msra.mxu0 0.0
    %3725 = vmatprep.subr.mxu0 0.0
    %3726 = vmatpush1.msra.mxu0 0.0
    %3727 = vmatprep.subr.mxu0 0.0
    %3728 = vmatpush1.msra.mxu0 0.0
    %3729 = vmatprep.subr.mxu0 0.0
    %3730 = vmatpush1.msra.mxu0 0.0
    %3731 = vmatprep.subr.mxu0 0.0
    %3732 = vmatpush1.msra.mxu0 0.0
    %3733 = vmatprep.subr.mxu0 0.0
    %3734 = vmatpush1.msra.mxu0 0.0
    %3735 = vmatprep.subr.mxu0 0.0
    %3736 = vmatpush1.msra.mxu0 0.0
    %3737 = vmatprep.subr.mxu0 0.0
    %3738 = vmatpush1.msra.mxu0 0.0
    %3739 = vmatprep.subr.mxu0 0.0
    %3740 = vmatpush1.msra.mxu0 0.0
    %3741 = vmatprep.subr.mxu0 0.0
    %3742 = vmatpush1.msra.mxu0 0.0
    %3743 = vmatprep.subr.mxu0 0.0
    %3744 = vmatpush1.msra.mxu0 0.0
    %3745 = vmatprep.mubr.f32.mxu0 0.0
    %3746 = vmatmul.mubr.f32.gmra.mrb[0].mxu0 %v3609
    %v3747 = vpop.f32.mrb[0].mxu0
    %v3748 = vadd.f32 0.0, %v3747
    %v3749 = vpop.f32.mrb[0].mxu0
    %3750 = vdwg.mxu0
    %3751 = vmatprep.subr.mxu0 0.0
    %3752 = vmatpush1.msra.mxu0 %v2610
    %3753 = vmatprep.subr.mxu0 0.0
    %3754 = vmatpush1.msra.mxu0 %v2611
    %3755 = vmatprep.subr.mxu0 0.0
    %3756 = vmatpush1.msra.mxu0 %v2612
    %3757 = vmatprep.subr.mxu0 0.0
    %3758 = vmatpush1.msra.mxu0 %v2613
    %3759 = vmatprep.subr.mxu0 0.0
    %3760 = vmatpush1.msra.mxu0 0.0
    %3761 = vmatprep.subr.mxu0 0.0
    %3762 = vmatpush1.msra.mxu0 0.0
    %3763 = vmatprep.subr.mxu0 0.0
    %3764 = vmatpush1.msra.mxu0 0.0
    %3765 = vmatprep.subr.mxu0 0.0
    %3766 = vmatpush1.msra.mxu0 0.0
    %3767 = vmatprep.subr.mxu0 0.0
    %3768 = vmatpush1.msra.mxu0 0.0
    %3769 = vmatprep.subr.mxu0 0.0
    %3770 = vmatpush1.msra.mxu0 0.0
    %3771 = vmatprep.subr.mxu0 0.0
    %3772 = vmatpush1.msra.mxu0 0.0
    %3773 = vmatprep.subr.mxu0 0.0
    %3774 = vmatpush1.msra.mxu0 0.0
    %3775 = vmatprep.subr.mxu0 0.0
    %3776 = vmatpush1.msra.mxu0 0.0
    %3777 = vmatprep.subr.mxu0 0.0
    %3778 = vmatpush1.msra.mxu0 0.0
    %3779 = vmatprep.subr.mxu0 0.0
    %3780 = vmatpush1.msra.mxu0 0.0
    %3781 = vmatprep.subr.mxu0 0.0
    %3782 = vmatpush1.msra.mxu0 0.0
    %3783 = vmatprep.subr.mxu0 0.0
    %3784 = vmatpush1.msra.mxu0 0.0
    %3785 = vmatprep.subr.mxu0 0.0
    %3786 = vmatpush1.msra.mxu0 0.0
    %3787 = vmatprep.subr.mxu0 0.0
    %3788 = vmatpush1.msra.mxu0 0.0
    %3789 = vmatprep.subr.mxu0 0.0
    %3790 = vmatpush1.msra.mxu0 0.0
    %3791 = vmatprep.subr.mxu0 0.0
    %3792 = vmatpush1.msra.mxu0 0.0
    %3793 = vmatprep.subr.mxu0 0.0
    %3794 = vmatpush1.msra.mxu0 0.0
    %3795 = vmatprep.subr.mxu0 0.0
    %3796 = vmatpush1.msra.mxu0 0.0
    %3797 = vmatprep.subr.mxu0 0.0
    %3798 = vmatpush1.msra.mxu0 0.0
    %3799 = vmatprep.subr.mxu0 0.0
    %3800 = vmatpush1.msra.mxu0 0.0
    %3801 = vmatprep.subr.mxu0 0.0
    %3802 = vmatpush1.msra.mxu0 0.0
    %3803 = vmatprep.subr.mxu0 0.0
    %3804 = vmatpush1.msra.mxu0 0.0
    %3805 = vmatprep.subr.mxu0 0.0
    %3806 = vmatpush1.msra.mxu0 0.0
    %3807 = vmatprep.subr.mxu0 0.0
    %3808 = vmatpush1.msra.mxu0 0.0
    %3809 = vmatprep.subr.mxu0 0.0
    %3810 = vmatpush1.msra.mxu0 0.0
    %3811 = vmatprep.subr.mxu0 0.0
    %3812 = vmatpush1.msra.mxu0 0.0
    %3813 = vmatprep.subr.mxu0 0.0
    %3814 = vmatpush1.msra.mxu0 0.0
    %3815 = vmatprep.mubr.f32.mxu0 0.0
    %3816 = vmatmul.mubr.f32.gmra.mrb[0].mxu0 %v3609
    %v3817 = vpop.f32.mrb[0].mxu0
    %v3818 = vadd.f32 %v3023, %v3817
    %v3819 = vpop.f32.mrb[0].mxu0
    %3820 = vdwg.mxu0
    %v3822 = vrot.slane %v3678, 2
    %v3824 = vadd.f32 %v2699, %v3822
    %v3825 = vxor.u32 %v3824, 2147483648
    %v3826 = vmul.f32 %v3825, 1.442695
    %v3827 = vpow.pop %v3826
    %v3828 = vadd.f32 %v3827, 1.0
    %v3829 = vrcp.pop %v3828
    %v3830 = vmul.f32 1.0, %v3829
    %v3832 = vrot.slane %v3748, 2
    %v3834 = vadd.f32 %v2785, %v3832
    %v3835 = vxor.u32 %v3834, 2147483648
    %v3836 = vmul.f32 %v3835, 1.442695
    %v3837 = vpow.pop %v3836
    %v3838 = vadd.f32 %v3837, 1.0
    %v3839 = vrcp.pop %v3838
    %v3840 = vmul.f32 1.0, %v3839
    %v3842 = vrot.slane %v3818, 2
    %v3844 = vmul.f32 %v3830, %v3842
    %v3845 = vadd.f32 %v2871, %v3844
    %v3846 = vtanh.pop %v3845
    %v3847 = vsub.f32 1.0, %v3840
    %v3848 = vmul.f32 %v3847, %v3846
    %v3849 = vrot.slane %v3606, 6
    %v3851 = vmul.f32 %v3840, %v3849
    %v3852 = vadd.f32 %v3848, %v3851
    %v3854 = vrot.slane %v3852, 6
    %v3855 = vsel %vm637, %v3854, 0
    %3857 = vmatprep.subr.mxu0 0.0
    %3858 = vmatpush1.msra.mxu0 %v2602
    %3859 = vmatprep.subr.mxu0 0.0
    %3860 = vmatpush1.msra.mxu0 %v2603
    %3861 = vmatprep.subr.mxu0 0.0
    %3862 = vmatpush1.msra.mxu0 %v2604
    %3863 = vmatprep.subr.mxu0 0.0
    %3864 = vmatpush1.msra.mxu0 %v2605
    %3865 = vmatprep.subr.mxu0 0.0
    %3866 = vmatpush1.msra.mxu0 0.0
    %3867 = vmatprep.subr.mxu0 0.0
    %3868 = vmatpush1.msra.mxu0 0.0
    %3869 = vmatprep.subr.mxu0 0.0
    %3870 = vmatpush1.msra.mxu0 0.0
    %3871 = vmatprep.subr.mxu0 0.0
    %3872 = vmatpush1.msra.mxu0 0.0
    %3873 = vmatprep.subr.mxu0 0.0
    %3874 = vmatpush1.msra.mxu0 0.0
    %3875 = vmatprep.subr.mxu0 0.0
    %3876 = vmatpush1.msra.mxu0 0.0
    %3877 = vmatprep.subr.mxu0 0.0
    %3878 = vmatpush1.msra.mxu0 0.0
    %3879 = vmatprep.subr.mxu0 0.0
    %3880 = vmatpush1.msra.mxu0 0.0
    %3881 = vmatprep.subr.mxu0 0.0
    %3882 = vmatpush1.msra.mxu0 0.0
    %3883 = vmatprep.subr.mxu0 0.0
    %3884 = vmatpush1.msra.mxu0 0.0
    %3885 = vmatprep.subr.mxu0 0.0
    %3886 = vmatpush1.msra.mxu0 0.0
    %3887 = vmatprep.subr.mxu0 0.0
    %3888 = vmatpush1.msra.mxu0 0.0
    %3889 = vmatprep.subr.mxu0 0.0
    %3890 = vmatpush1.msra.mxu0 0.0
    %3891 = vmatprep.subr.mxu0 0.0
    %3892 = vmatpush1.msra.mxu0 0.0
    %3893 = vmatprep.subr.mxu0 0.0
    %3894 = vmatpush1.msra.mxu0 0.0
    %3895 = vmatprep.subr.mxu0 0.0
    %3896 = vmatpush1.msra.mxu0 0.0
    %3897 = vmatprep.subr.mxu0 0.0
    %3898 = vmatpush1.msra.mxu0 0.0
    %3899 = vmatprep.subr.mxu0 0.0
    %3900 = vmatpush1.msra.mxu0 0.0
    %3901 = vmatprep.subr.mxu0 0.0
    %3902 = vmatpush1.msra.mxu0 0.0
    %3903 = vmatprep.subr.mxu0 0.0
    %3904 = vmatpush1.msra.mxu0 0.0
    %3905 = vmatprep.subr.mxu0 0.0
    %3906 = vmatpush1.msra.mxu0 0.0
    %3907 = vmatprep.subr.mxu0 0.0
    %3908 = vmatpush1.msra.mxu0 0.0
    %3909 = vmatprep.subr.mxu0 0.0
    %3910 = vmatpush1.msra.mxu0 0.0
    %3911 = vmatprep.subr.mxu0 0.0
    %3912 = vmatpush1.msra.mxu0 0.0
    %3913 = vmatprep.subr.mxu0 0.0
    %3914 = vmatpush1.msra.mxu0 0.0
    %3915 = vmatprep.subr.mxu0 0.0
    %3916 = vmatpush1.msra.mxu0 0.0
    %3917 = vmatprep.subr.mxu0 0.0
    %3918 = vmatpush1.msra.mxu0 0.0
    %3919 = vmatprep.subr.mxu0 0.0
    %3920 = vmatpush1.msra.mxu0 0.0
    %3921 = vmatprep.mubr.f32.mxu0 0.0
    %3922 = vmatmul.mubr.f32.gmra.mrb[0].mxu0 %v3855
    %v3923 = vpop.f32.mrb[0].mxu0
    %v3924 = vadd.f32 0.0, %v3923
    %v3925 = vpop.f32.mrb[0].mxu0
    %3926 = vdwg.mxu0
    %3927 = vmatprep.subr.mxu0 0.0
    %3928 = vmatpush1.msra.mxu0 %v2606
    %3929 = vmatprep.subr.mxu0 0.0
    %3930 = vmatpush1.msra.mxu0 %v2607
    %3931 = vmatprep.subr.mxu0 0.0
    %3932 = vmatpush1.msra.mxu0 %v2608
    %3933 = vmatprep.subr.mxu0 0.0
    %3934 = vmatpush1.msra.mxu0 %v2609
    %3935 = vmatprep.subr.mxu0 0.0
    %3936 = vmatpush1.msra.mxu0 0.0
    %3937 = vmatprep.subr.mxu0 0.0
    %3938 = vmatpush1.msra.mxu0 0.0
    %3939 = vmatprep.subr.mxu0 0.0
    %3940 = vmatpush1.msra.mxu0 0.0
    %3941 = vmatprep.subr.mxu0 0.0
    %3942 = vmatpush1.msra.mxu0 0.0
    %3943 = vmatprep.subr.mxu0 0.0
    %3944 = vmatpush1.msra.mxu0 0.0
    %3945 = vmatprep.subr.mxu0 0.0
    %3946 = vmatpush1.msra.mxu0 0.0
    %3947 = vmatprep.subr.mxu0 0.0
    %3948 = vmatpush1.msra.mxu0 0.0
    %3949 = vmatprep.subr.mxu0 0.0
    %3950 = vmatpush1.msra.mxu0 0.0
    %3951 = vmatprep.subr.mxu0 0.0
    %3952 = vmatpush1.msra.mxu0 0.0
    %3953 = vmatprep.subr.mxu0 0.0
    %3954 = vmatpush1.msra.mxu0 0.0
    %3955 = vmatprep.subr.mxu0 0.0
    %3956 = vmatpush1.msra.mxu0 0.0
    %3957 = vmatprep.subr.mxu0 0.0
    %3958 = vmatpush1.msra.mxu0 0.0
    %3959 = vmatprep.subr.mxu0 0.0
    %3960 = vmatpush1.msra.mxu0 0.0
    %3961 = vmatprep.subr.mxu0 0.0
    %3962 = vmatpush1.msra.mxu0 0.0
    %3963 = vmatprep.subr.mxu0 0.0
    %3964 = vmatpush1.msra.mxu0 0.0
    %3965 = vmatprep.subr.mxu0 0.0
    %3966 = vmatpush1.msra.mxu0 0.0
    %3967 = vmatprep.subr.mxu0 0.0
    %3968 = vmatpush1.msra.mxu0 0.0
    %3969 = vmatprep.subr.mxu0 0.0
    %3970 = vmatpush1.msra.mxu0 0.0
    %3971 = vmatprep.subr.mxu0 0.0
    %3972 = vmatpush1.msra.mxu0 0.0
    %3973 = vmatprep.subr.mxu0 0.0
    %3974 = vmatpush1.msra.mxu0 0.0
    %3975 = vmatprep.subr.mxu0 0.0
    %3976 = vmatpush1.msra.mxu0 0.0
    %3977 = vmatprep.subr.mxu0 0.0
    %3978 = vmatpush1.msra.mxu0 0.0
    %3979 = vmatprep.subr.mxu0 0.0
    %3980 = vmatpush1.msra.mxu0 0.0
    %3981 = vmatprep.subr.mxu0 0.0
    %3982 = vmatpush1.msra.mxu0 0.0
    %3983 = vmatprep.subr.mxu0 0.0
    %3984 = vmatpush1.msra.mxu0 0.0
    %3985 = vmatprep.subr.mxu0 0.0
    %3986 = vmatpush1.msra.mxu0 0.0
    %3987 = vmatprep.subr.mxu0 0.0
    %3988 = vmatpush1.msra.mxu0 0.0
    %3989 = vmatprep.subr.mxu0 0.0
    %3990 = vmatpush1.msra.mxu0 0.0
    %3991 = vmatprep.mubr.f32.mxu0 0.0
    %3992 = vmatmul.mubr.f32.gmra.mrb[0].mxu0 %v3855
    %v3993 = vpop.f32.mrb[0].mxu0
    %v3994 = vadd.f32 0.0, %v3993
    %v3995 = vpop.f32.mrb[0].mxu0
    %3996 = vdwg.mxu0
    %3997 = vmatprep.subr.mxu0 0.0
    %3998 = vmatpush1.msra.mxu0 %v2610
    %3999 = vmatprep.subr.mxu0 0.0
    %4000 = vmatpush1.msra.mxu0 %v2611
    %4001 = vmatprep.subr.mxu0 0.0
    %4002 = vmatpush1.msra.mxu0 %v2612
    %4003 = vmatprep.subr.mxu0 0.0
    %4004 = vmatpush1.msra.mxu0 %v2613
    %4005 = vmatprep.subr.mxu0 0.0
    %4006 = vmatpush1.msra.mxu0 0.0
    %4007 = vmatprep.subr.mxu0 0.0
    %4008 = vmatpush1.msra.mxu0 0.0
    %4009 = vmatprep.subr.mxu0 0.0
    %4010 = vmatpush1.msra.mxu0 0.0
    %4011 = vmatprep.subr.mxu0 0.0
    %4012 = vmatpush1.msra.mxu0 0.0
    %4013 = vmatprep.subr.mxu0 0.0
    %4014 = vmatpush1.msra.mxu0 0.0
    %4015 = vmatprep.subr.mxu0 0.0
    %4016 = vmatpush1.msra.mxu0 0.0
    %4017 = vmatprep.subr.mxu0 0.0
    %4018 = vmatpush1.msra.mxu0 0.0
    %4019 = vmatprep.subr.mxu0 0.0
    %4020 = vmatpush1.msra.mxu0 0.0
    %4021 = vmatprep.subr.mxu0 0.0
    %4022 = vmatpush1.msra.mxu0 0.0
    %4023 = vmatprep.subr.mxu0 0.0
    %4024 = vmatpush1.msra.mxu0 0.0
    %4025 = vmatprep.subr.mxu0 0.0
    %4026 = vmatpush1.msra.mxu0 0.0
    %4027 = vmatprep.subr.mxu0 0.0
    %4028 = vmatpush1.msra.mxu0 0.0
    %4029 = vmatprep.subr.mxu0 0.0
    %4030 = vmatpush1.msra.mxu0 0.0
    %4031 = vmatprep.subr.mxu0 0.0
    %4032 = vmatpush1.msra.mxu0 0.0
    %4033 = vmatprep.subr.mxu0 0.0
    %4034 = vmatpush1.msra.mxu0 0.0
    %4035 = vmatprep.subr.mxu0 0.0
    %4036 = vmatpush1.msra.mxu0 0.0
    %4037 = vmatprep.subr.mxu0 0.0
    %4038 = vmatpush1.msra.mxu0 0.0
    %4039 = vmatprep.subr.mxu0 0.0
    %4040 = vmatpush1.msra.mxu0 0.0
    %4041 = vmatprep.subr.mxu0 0.0
    %4042 = vmatpush1.msra.mxu0 0.0
    %4043 = vmatprep.subr.mxu0 0.0
    %4044 = vmatpush1.msra.mxu0 0.0
    %4045 = vmatprep.subr.mxu0 0.0
    %4046 = vmatpush1.msra.mxu0 0.0
    %4047 = vmatprep.subr.mxu0 0.0
    %4048 = vmatpush1.msra.mxu0 0.0
    %4049 = vmatprep.subr.mxu0 0.0
    %4050 = vmatpush1.msra.mxu0 0.0
    %4051 = vmatprep.subr.mxu0 0.0
    %4052 = vmatpush1.msra.mxu0 0.0
    %4053 = vmatprep.subr.mxu0 0.0
    %4054 = vmatpush1.msra.mxu0 0.0
    %4055 = vmatprep.subr.mxu0 0.0
    %4056 = vmatpush1.msra.mxu0 0.0
    %4057 = vmatprep.subr.mxu0 0.0
    %4058 = vmatpush1.msra.mxu0 0.0
    %4059 = vmatprep.subr.mxu0 0.0
    %4060 = vmatpush1.msra.mxu0 0.0
    %4061 = vmatprep.mubr.f32.mxu0 0.0
    %4062 = vmatmul.mubr.f32.gmra.mrb[0].mxu0 %v3855
    %v4063 = vpop.f32.mrb[0].mxu0
    %v4064 = vadd.f32 %v3023, %v4063
    %v4065 = vpop.f32.mrb[0].mxu0
    %4066 = vdwg.mxu0
    %v4067 = vadd.f32 %v2704, %v3924
    %v4068 = vxor.u32 %v4067, 2147483648
    %v4069 = vmul.f32 %v4068, 1.442695
    %v4070 = vpow.pop %v4069
    %v4071 = vadd.f32 %v4070, 1.0
    %v4072 = vrcp.pop %v4071
    %v4073 = vmul.f32 1.0, %v4072
    %v4074 = vadd.f32 %v2790, %v3994
    %v4075 = vxor.u32 %v4074, 2147483648
    %v4076 = vmul.f32 %v4075, 1.442695
    %v4077 = vpow.pop %v4076
    %v4078 = vadd.f32 %v4077, 1.0
    %v4079 = vrcp.pop %v4078
    %v4080 = vmul.f32 1.0, %v4079
    %v4081 = vmul.f32 %v4073, %v4064
    %v4082 = vadd.f32 %v2876, %v4081
    %v4083 = vtanh.pop %v4082
    %v4084 = vsub.f32 1.0, %v4080
    %v4085 = vmul.f32 %v4084, %v4083
    %v4087 = vmul.f32 %v4080, %v3854
    %v4088 = vadd.f32 %v4085, %v4087
    %v4090 = vsel %vm637, %v4088, 0
    %4092 = vmatprep.subr.mxu0 0.0
    %4093 = vmatpush1.msra.mxu0 %v2602
    %4094 = vmatprep.subr.mxu0 0.0
    %4095 = vmatpush1.msra.mxu0 %v2603
    %4096 = vmatprep.subr.mxu0 0.0
    %4097 = vmatpush1.msra.mxu0 %v2604
    %4098 = vmatprep.subr.mxu0 0.0
    %4099 = vmatpush1.msra.mxu0 %v2605
    %4100 = vmatprep.subr.mxu0 0.0
    %4101 = vmatpush1.msra.mxu0 0.0
    %4102 = vmatprep.subr.mxu0 0.0
    %4103 = vmatpush1.msra.mxu0 0.0
    %4104 = vmatprep.subr.mxu0 0.0
    %4105 = vmatpush1.msra.mxu0 0.0
    %4106 = vmatprep.subr.mxu0 0.0
    %4107 = vmatpush1.msra.mxu0 0.0
    %4108 = vmatprep.subr.mxu0 0.0
    %4109 = vmatpush1.msra.mxu0 0.0
    %4110 = vmatprep.subr.mxu0 0.0
    %4111 = vmatpush1.msra.mxu0 0.0
    %4112 = vmatprep.subr.mxu0 0.0
    %4113 = vmatpush1.msra.mxu0 0.0
    %4114 = vmatprep.subr.mxu0 0.0
    %4115 = vmatpush1.msra.mxu0 0.0
    %4116 = vmatprep.subr.mxu0 0.0
    %4117 = vmatpush1.msra.mxu0 0.0
    %4118 = vmatprep.subr.mxu0 0.0
    %4119 = vmatpush1.msra.mxu0 0.0
    %4120 = vmatprep.subr.mxu0 0.0
    %4121 = vmatpush1.msra.mxu0 0.0
    %4122 = vmatprep.subr.mxu0 0.0
    %4123 = vmatpush1.msra.mxu0 0.0
    %4124 = vmatprep.subr.mxu0 0.0
    %4125 = vmatpush1.msra.mxu0 0.0
    %4126 = vmatprep.subr.mxu0 0.0
    %4127 = vmatpush1.msra.mxu0 0.0
    %4128 = vmatprep.subr.mxu0 0.0
    %4129 = vmatpush1.msra.mxu0 0.0
    %4130 = vmatprep.subr.mxu0 0.0
    %4131 = vmatpush1.msra.mxu0 0.0
    %4132 = vmatprep.subr.mxu0 0.0
    %4133 = vmatpush1.msra.mxu0 0.0
    %4134 = vmatprep.subr.mxu0 0.0
    %4135 = vmatpush1.msra.mxu0 0.0
    %4136 = vmatprep.subr.mxu0 0.0
    %4137 = vmatpush1.msra.mxu0 0.0
    %4138 = vmatprep.subr.mxu0 0.0
    %4139 = vmatpush1.msra.mxu0 0.0
    %4140 = vmatprep.subr.mxu0 0.0
    %4141 = vmatpush1.msra.mxu0 0.0
    %4142 = vmatprep.subr.mxu0 0.0
    %4143 = vmatpush1.msra.mxu0 0.0
    %4144 = vmatprep.subr.mxu0 0.0
    %4145 = vmatpush1.msra.mxu0 0.0
    %4146 = vmatprep.subr.mxu0 0.0
    %4147 = vmatpush1.msra.mxu0 0.0
    %4148 = vmatprep.subr.mxu0 0.0
    %4149 = vmatpush1.msra.mxu0 0.0
    %4150 = vmatprep.subr.mxu0 0.0
    %4151 = vmatpush1.msra.mxu0 0.0
    %4152 = vmatprep.subr.mxu0 0.0
    %4153 = vmatpush1.msra.mxu0 0.0
    %4154 = vmatprep.subr.mxu0 0.0
    %4155 = vmatpush1.msra.mxu0 0.0
    %4156 = vmatprep.mubr.f32.mxu0 0.0
    %4157 = vmatmul.mubr.f32.gmra.mrb[0].mxu0 %v4090
    %v4158 = vpop.f32.mrb[0].mxu0
    %v4159 = vadd.f32 0.0, %v4158
    %v4160 = vpop.f32.mrb[0].mxu0
    %4161 = vdwg.mxu0
    %4162 = vmatprep.subr.mxu0 0.0
    %4163 = vmatpush1.msra.mxu0 %v2606
    %4164 = vmatprep.subr.mxu0 0.0
    %4165 = vmatpush1.msra.mxu0 %v2607
    %4166 = vmatprep.subr.mxu0 0.0
    %4167 = vmatpush1.msra.mxu0 %v2608
    %4168 = vmatprep.subr.mxu0 0.0
    %4169 = vmatpush1.msra.mxu0 %v2609
    %4170 = vmatprep.subr.mxu0 0.0
    %4171 = vmatpush1.msra.mxu0 0.0
    %4172 = vmatprep.subr.mxu0 0.0
    %4173 = vmatpush1.msra.mxu0 0.0
    %4174 = vmatprep.subr.mxu0 0.0
    %4175 = vmatpush1.msra.mxu0 0.0
    %4176 = vmatprep.subr.mxu0 0.0
    %4177 = vmatpush1.msra.mxu0 0.0
    %4178 = vmatprep.subr.mxu0 0.0
    %4179 = vmatpush1.msra.mxu0 0.0
    %4180 = vmatprep.subr.mxu0 0.0
    %4181 = vmatpush1.msra.mxu0 0.0
    %4182 = vmatprep.subr.mxu0 0.0
    %4183 = vmatpush1.msra.mxu0 0.0
    %4184 = vmatprep.subr.mxu0 0.0
    %4185 = vmatpush1.msra.mxu0 0.0
    %4186 = vmatprep.subr.mxu0 0.0
    %4187 = vmatpush1.msra.mxu0 0.0
    %4188 = vmatprep.subr.mxu0 0.0
    %4189 = vmatpush1.msra.mxu0 0.0
    %4190 = vmatprep.subr.mxu0 0.0
    %4191 = vmatpush1.msra.mxu0 0.0
    %4192 = vmatprep.subr.mxu0 0.0
    %4193 = vmatpush1.msra.mxu0 0.0
    %4194 = vmatprep.subr.mxu0 0.0
    %4195 = vmatpush1.msra.mxu0 0.0
    %4196 = vmatprep.subr.mxu0 0.0
    %4197 = vmatpush1.msra.mxu0 0.0
    %4198 = vmatprep.subr.mxu0 0.0
    %4199 = vmatpush1.msra.mxu0 0.0
    %4200 = vmatprep.subr.mxu0 0.0
    %4201 = vmatpush1.msra.mxu0 0.0
    %4202 = vmatprep.subr.mxu0 0.0
    %4203 = vmatpush1.msra.mxu0 0.0
    %4204 = vmatprep.subr.mxu0 0.0
    %4205 = vmatpush1.msra.mxu0 0.0
    %4206 = vmatprep.subr.mxu0 0.0
    %4207 = vmatpush1.msra.mxu0 0.0
    %4208 = vmatprep.subr.mxu0 0.0
    %4209 = vmatpush1.msra.mxu0 0.0
    %4210 = vmatprep.subr.mxu0 0.0
    %4211 = vmatpush1.msra.mxu0 0.0
    %4212 = vmatprep.subr.mxu0 0.0
    %4213 = vmatpush1.msra.mxu0 0.0
    %4214 = vmatprep.subr.mxu0 0.0
    %4215 = vmatpush1.msra.mxu0 0.0
    %4216 = vmatprep.subr.mxu0 0.0
    %4217 = vmatpush1.msra.mxu0 0.0
    %4218 = vmatprep.subr.mxu0 0.0
    %4219 = vmatpush1.msra.mxu0 0.0
    %4220 = vmatprep.subr.mxu0 0.0
    %4221 = vmatpush1.msra.mxu0 0.0
    %4222 = vmatprep.subr.mxu0 0.0
    %4223 = vmatpush1.msra.mxu0 0.0
    %4224 = vmatprep.subr.mxu0 0.0
    %4225 = vmatpush1.msra.mxu0 0.0
    %4226 = vmatprep.mubr.f32.mxu0 0.0
    %4227 = vmatmul.mubr.f32.gmra.mrb[0].mxu0 %v4090
    %v4228 = vpop.f32.mrb[0].mxu0
    %v4229 = vadd.f32 0.0, %v4228
    %v4230 = vpop.f32.mrb[0].mxu0
    %4231 = vdwg.mxu0
    %4232 = vmatprep.subr.mxu0 0.0
    %4233 = vmatpush1.msra.mxu0 %v2610
    %4234 = vmatprep.subr.mxu0 0.0
    %4235 = vmatpush1.msra.mxu0 %v2611
    %4236 = vmatprep.subr.mxu0 0.0
    %4237 = vmatpush1.msra.mxu0 %v2612
    %4238 = vmatprep.subr.mxu0 0.0
    %4239 = vmatpush1.msra.mxu0 %v2613
    %4240 = vmatprep.subr.mxu0 0.0
    %4241 = vmatpush1.msra.mxu0 0.0
    %4242 = vmatprep.subr.mxu0 0.0
    %4243 = vmatpush1.msra.mxu0 0.0
    %4244 = vmatprep.subr.mxu0 0.0
    %4245 = vmatpush1.msra.mxu0 0.0
    %4246 = vmatprep.subr.mxu0 0.0
    %4247 = vmatpush1.msra.mxu0 0.0
    %4248 = vmatprep.subr.mxu0 0.0
    %4249 = vmatpush1.msra.mxu0 0.0
    %4250 = vmatprep.subr.mxu0 0.0
    %4251 = vmatpush1.msra.mxu0 0.0
    %4252 = vmatprep.subr.mxu0 0.0
    %4253 = vmatpush1.msra.mxu0 0.0
    %4254 = vmatprep.subr.mxu0 0.0
    %4255 = vmatpush1.msra.mxu0 0.0
    %4256 = vmatprep.subr.mxu0 0.0
    %4257 = vmatpush1.msra.mxu0 0.0
    %4258 = vmatprep.subr.mxu0 0.0
    %4259 = vmatpush1.msra.mxu0 0.0
    %4260 = vmatprep.subr.mxu0 0.0
    %4261 = vmatpush1.msra.mxu0 0.0
    %4262 = vmatprep.subr.mxu0 0.0
    %4263 = vmatpush1.msra.mxu0 0.0
    %4264 = vmatprep.subr.mxu0 0.0
    %4265 = vmatpush1.msra.mxu0 0.0
    %4266 = vmatprep.subr.mxu0 0.0
    %4267 = vmatpush1.msra.mxu0 0.0
    %4268 = vmatprep.subr.mxu0 0.0
    %4269 = vmatpush1.msra.mxu0 0.0
    %4270 = vmatprep.subr.mxu0 0.0
    %4271 = vmatpush1.msra.mxu0 0.0
    %4272 = vmatprep.subr.mxu0 0.0
    %4273 = vmatpush1.msra.mxu0 0.0
    %4274 = vmatprep.subr.mxu0 0.0
    %4275 = vmatpush1.msra.mxu0 0.0
    %4276 = vmatprep.subr.mxu0 0.0
    %4277 = vmatpush1.msra.mxu0 0.0
    %4278 = vmatprep.subr.mxu0 0.0
    %4279 = vmatpush1.msra.mxu0 0.0
    %4280 = vmatprep.subr.mxu0 0.0
    %4281 = vmatpush1.msra.mxu0 0.0
    %4282 = vmatprep.subr.mxu0 0.0
    %4283 = vmatpush1.msra.mxu0 0.0
    %4284 = vmatprep.subr.mxu0 0.0
    %4285 = vmatpush1.msra.mxu0 0.0
    %4286 = vmatprep.subr.mxu0 0.0
    %4287 = vmatpush1.msra.mxu0 0.0
    %4288 = vmatprep.subr.mxu0 0.0
    %4289 = vmatpush1.msra.mxu0 0.0
    %4290 = vmatprep.subr.mxu0 0.0
    %4291 = vmatpush1.msra.mxu0 0.0
    %4292 = vmatprep.subr.mxu0 0.0
    %4293 = vmatpush1.msra.mxu0 0.0
    %4294 = vmatprep.subr.mxu0 0.0
    %4295 = vmatpush1.msra.mxu0 0.0
    %4296 = vmatprep.mubr.f32.mxu0 0.0
    %4297 = vmatmul.mubr.f32.gmra.mrb[0].mxu0 %v4090
    %v4298 = vpop.f32.mrb[0].mxu0
    %v4299 = vadd.f32 %v3023, %v4298
    %v4300 = vpop.f32.mrb[0].mxu0
    %4301 = vdwg.mxu0
    %v4303 = vrot.slane %v4159, 6
    %v4305 = vadd.f32 %v2704, %v4303
    %v4306 = vxor.u32 %v4305, 2147483648
    %v4307 = vmul.f32 %v4306, 1.442695
    %v4308 = vpow.pop %v4307
    %v4309 = vadd.f32 %v4308, 1.0
    %v4310 = vrcp.pop %v4309
    %v4311 = vmul.f32 1.0, %v4310
    %v4313 = vrot.slane %v4229, 6
    %v4315 = vadd.f32 %v2790, %v4313
    %v4316 = vxor.u32 %v4315, 2147483648
    %v4317 = vmul.f32 %v4316, 1.442695
    %v4318 = vpow.pop %v4317
    %v4319 = vadd.f32 %v4318, 1.0
    %v4320 = vrcp.pop %v4319
    %v4321 = vmul.f32 1.0, %v4320
    %v4323 = vrot.slane %v4299, 6
    %v4325 = vmul.f32 %v4311, %v4323
    %v4326 = vadd.f32 %v2876, %v4325
    %v4327 = vtanh.pop %v4326
    %v4328 = vsub.f32 1.0, %v4321
    %v4329 = vmul.f32 %v4328, %v4327
    %v4330 = vrot.slane %v4088, 6
    %v4332 = vmul.f32 %v4321, %v4330
    %v4333 = vadd.f32 %v4329, %v4332
    %v4335 = vrot.slane %v4333, 2
    %v4336 = vsel %vm637, %v4335, 0
    %4338 = vmatprep.subr.mxu0 0.0
    %4339 = vmatpush1.msra.mxu0 %v2602
    %4340 = vmatprep.subr.mxu0 0.0
    %4341 = vmatpush1.msra.mxu0 %v2603
    %4342 = vmatprep.subr.mxu0 0.0
    %4343 = vmatpush1.msra.mxu0 %v2604
    %4344 = vmatprep.subr.mxu0 0.0
    %4345 = vmatpush1.msra.mxu0 %v2605
    %4346 = vmatprep.subr.mxu0 0.0
    %4347 = vmatpush1.msra.mxu0 0.0
    %4348 = vmatprep.subr.mxu0 0.0
    %4349 = vmatpush1.msra.mxu0 0.0
    %4350 = vmatprep.subr.mxu0 0.0
    %4351 = vmatpush1.msra.mxu0 0.0
    %4352 = vmatprep.subr.mxu0 0.0
    %4353 = vmatpush1.msra.mxu0 0.0
    %4354 = vmatprep.subr.mxu0 0.0
    %4355 = vmatpush1.msra.mxu0 0.0
    %4356 = vmatprep.subr.mxu0 0.0
    %4357 = vmatpush1.msra.mxu0 0.0
    %4358 = vmatprep.subr.mxu0 0.0
    %4359 = vmatpush1.msra.mxu0 0.0
    %4360 = vmatprep.subr.mxu0 0.0
    %4361 = vmatpush1.msra.mxu0 0.0
    %4362 = vmatprep.subr.mxu0 0.0
    %4363 = vmatpush1.msra.mxu0 0.0
    %4364 = vmatprep.subr.mxu0 0.0
    %4365 = vmatpush1.msra.mxu0 0.0
    %4366 = vmatprep.subr.mxu0 0.0
    %4367 = vmatpush1.msra.mxu0 0.0
    %4368 = vmatprep.subr.mxu0 0.0
    %4369 = vmatpush1.msra.mxu0 0.0
    %4370 = vmatprep.subr.mxu0 0.0
    %4371 = vmatpush1.msra.mxu0 0.0
    %4372 = vmatprep.subr.mxu0 0.0
    %4373 = vmatpush1.msra.mxu0 0.0
    %4374 = vmatprep.subr.mxu0 0.0
    %4375 = vmatpush1.msra.mxu0 0.0
    %4376 = vmatprep.subr.mxu0 0.0
    %4377 = vmatpush1.msra.mxu0 0.0
    %4378 = vmatprep.subr.mxu0 0.0
    %4379 = vmatpush1.msra.mxu0 0.0
    %4380 = vmatprep.subr.mxu0 0.0
    %4381 = vmatpush1.msra.mxu0 0.0
    %4382 = vmatprep.subr.mxu0 0.0
    %4383 = vmatpush1.msra.mxu0 0.0
    %4384 = vmatprep.subr.mxu0 0.0
    %4385 = vmatpush1.msra.mxu0 0.0
    %4386 = vmatprep.subr.mxu0 0.0
    %4387 = vmatpush1.msra.mxu0 0.0
    %4388 = vmatprep.subr.mxu0 0.0
    %4389 = vmatpush1.msra.mxu0 0.0
    %4390 = vmatprep.subr.mxu0 0.0
    %4391 = vmatpush1.msra.mxu0 0.0
    %4392 = vmatprep.subr.mxu0 0.0
    %4393 = vmatpush1.msra.mxu0 0.0
    %4394 = vmatprep.subr.mxu0 0.0
    %4395 = vmatpush1.msra.mxu0 0.0
    %4396 = vmatprep.subr.mxu0 0.0
    %4397 = vmatpush1.msra.mxu0 0.0
    %4398 = vmatprep.subr.mxu0 0.0
    %4399 = vmatpush1.msra.mxu0 0.0
    %4400 = vmatprep.subr.mxu0 0.0
    %4401 = vmatpush1.msra.mxu0 0.0
    %4402 = vmatprep.mubr.f32.mxu0 0.0
    %4403 = vmatmul.mubr.f32.gmra.mrb[0].mxu0 %v4336
    %v4404 = vpop.f32.mrb[0].mxu0
    %v4405 = vadd.f32 0.0, %v4404
    %v4406 = vpop.f32.mrb[0].mxu0
    %4407 = vdwg.mxu0
    %4408 = vmatprep.subr.mxu0 0.0
    %4409 = vmatpush1.msra.mxu0 %v2606
    %4410 = vmatprep.subr.mxu0 0.0
    %4411 = vmatpush1.msra.mxu0 %v2607
    %4412 = vmatprep.subr.mxu0 0.0
    %4413 = vmatpush1.msra.mxu0 %v2608
    %4414 = vmatprep.subr.mxu0 0.0
    %4415 = vmatpush1.msra.mxu0 %v2609
    %4416 = vmatprep.subr.mxu0 0.0
    %4417 = vmatpush1.msra.mxu0 0.0
    %4418 = vmatprep.subr.mxu0 0.0
    %4419 = vmatpush1.msra.mxu0 0.0
    %4420 = vmatprep.subr.mxu0 0.0
    %4421 = vmatpush1.msra.mxu0 0.0
    %4422 = vmatprep.subr.mxu0 0.0
    %4423 = vmatpush1.msra.mxu0 0.0
    %4424 = vmatprep.subr.mxu0 0.0
    %4425 = vmatpush1.msra.mxu0 0.0
    %4426 = vmatprep.subr.mxu0 0.0
    %4427 = vmatpush1.msra.mxu0 0.0
    %4428 = vmatprep.subr.mxu0 0.0
    %4429 = vmatpush1.msra.mxu0 0.0
    %4430 = vmatprep.subr.mxu0 0.0
    %4431 = vmatpush1.msra.mxu0 0.0
    %4432 = vmatprep.subr.mxu0 0.0
    %4433 = vmatpush1.msra.mxu0 0.0
    %4434 = vmatprep.subr.mxu0 0.0
    %4435 = vmatpush1.msra.mxu0 0.0
    %4436 = vmatprep.subr.mxu0 0.0
    %4437 = vmatpush1.msra.mxu0 0.0
    %4438 = vmatprep.subr.mxu0 0.0
    %4439 = vmatpush1.msra.mxu0 0.0
    %4440 = vmatprep.subr.mxu0 0.0
    %4441 = vmatpush1.msra.mxu0 0.0
    %4442 = vmatprep.subr.mxu0 0.0
    %4443 = vmatpush1.msra.mxu0 0.0
    %4444 = vmatprep.subr.mxu0 0.0
    %4445 = vmatpush1.msra.mxu0 0.0
    %4446 = vmatprep.subr.mxu0 0.0
    %4447 = vmatpush1.msra.mxu0 0.0
    %4448 = vmatprep.subr.mxu0 0.0
    %4449 = vmatpush1.msra.mxu0 0.0
    %4450 = vmatprep.subr.mxu0 0.0
    %4451 = vmatpush1.msra.mxu0 0.0
    %4452 = vmatprep.subr.mxu0 0.0
    %4453 = vmatpush1.msra.mxu0 0.0
    %4454 = vmatprep.subr.mxu0 0.0
    %4455 = vmatpush1.msra.mxu0 0.0
    %4456 = vmatprep.subr.mxu0 0.0
    %4457 = vmatpush1.msra.mxu0 0.0
    %4458 = vmatprep.subr.mxu0 0.0
    %4459 = vmatpush1.msra.mxu0 0.0
    %4460 = vmatprep.subr.mxu0 0.0
    %4461 = vmatpush1.msra.mxu0 0.0
    %4462 = vmatprep.subr.mxu0 0.0
    %4463 = vmatpush1.msra.mxu0 0.0
    %4464 = vmatprep.subr.mxu0 0.0
    %4465 = vmatpush1.msra.mxu0 0.0
    %4466 = vmatprep.subr.mxu0 0.0
    %4467 = vmatpush1.msra.mxu0 0.0
    %4468 = vmatprep.subr.mxu0 0.0
    %4469 = vmatpush1.msra.mxu0 0.0
    %4470 = vmatprep.subr.mxu0 0.0
    %4471 = vmatpush1.msra.mxu0 0.0
    %4472 = vmatprep.mubr.f32.mxu0 0.0
    %4473 = vmatmul.mubr.f32.gmra.mrb[0].mxu0 %v4336
    %v4474 = vpop.f32.mrb[0].mxu0
    %v4475 = vadd.f32 0.0, %v4474
    %v4476 = vpop.f32.mrb[0].mxu0
    %4477 = vdwg.mxu0
    %4478 = vmatprep.subr.mxu0 0.0
    %4479 = vmatpush1.msra.mxu0 %v2610
    %4480 = vmatprep.subr.mxu0 0.0
    %4481 = vmatpush1.msra.mxu0 %v2611
    %4482 = vmatprep.subr.mxu0 0.0
    %4483 = vmatpush1.msra.mxu0 %v2612
    %4484 = vmatprep.subr.mxu0 0.0
    %4485 = vmatpush1.msra.mxu0 %v2613
    %4486 = vmatprep.subr.mxu0 0.0
    %4487 = vmatpush1.msra.mxu0 0.0
    %4488 = vmatprep.subr.mxu0 0.0
    %4489 = vmatpush1.msra.mxu0 0.0
    %4490 = vmatprep.subr.mxu0 0.0
    %4491 = vmatpush1.msra.mxu0 0.0
    %4492 = vmatprep.subr.mxu0 0.0
    %4493 = vmatpush1.msra.mxu0 0.0
    %4494 = vmatprep.subr.mxu0 0.0
    %4495 = vmatpush1.msra.mxu0 0.0
    %4496 = vmatprep.subr.mxu0 0.0
    %4497 = vmatpush1.msra.mxu0 0.0
    %4498 = vmatprep.subr.mxu0 0.0
    %4499 = vmatpush1.msra.mxu0 0.0
    %4500 = vmatprep.subr.mxu0 0.0
    %4501 = vmatpush1.msra.mxu0 0.0
    %4502 = vmatprep.subr.mxu0 0.0
    %4503 = vmatpush1.msra.mxu0 0.0
    %4504 = vmatprep.subr.mxu0 0.0
    %4505 = vmatpush1.msra.mxu0 0.0
    %4506 = vmatprep.subr.mxu0 0.0
    %4507 = vmatpush1.msra.mxu0 0.0
    %4508 = vmatprep.subr.mxu0 0.0
    %4509 = vmatpush1.msra.mxu0 0.0
    %4510 = vmatprep.subr.mxu0 0.0
    %4511 = vmatpush1.msra.mxu0 0.0
    %4512 = vmatprep.subr.mxu0 0.0
    %4513 = vmatpush1.msra.mxu0 0.0
    %4514 = vmatprep.subr.mxu0 0.0
    %4515 = vmatpush1.msra.mxu0 0.0
    %4516 = vmatprep.subr.mxu0 0.0
    %4517 = vmatpush1.msra.mxu0 0.0
    %4518 = vmatprep.subr.mxu0 0.0
    %4519 = vmatpush1.msra.mxu0 0.0
    %4520 = vmatprep.subr.mxu0 0.0
    %4521 = vmatpush1.msra.mxu0 0.0
    %4522 = vmatprep.subr.mxu0 0.0
    %4523 = vmatpush1.msra.mxu0 0.0
    %4524 = vmatprep.subr.mxu0 0.0
    %4525 = vmatpush1.msra.mxu0 0.0
    %4526 = vmatprep.subr.mxu0 0.0
    %4527 = vmatpush1.msra.mxu0 0.0
    %4528 = vmatprep.subr.mxu0 0.0
    %4529 = vmatpush1.msra.mxu0 0.0
    %4530 = vmatprep.subr.mxu0 0.0
    %4531 = vmatpush1.msra.mxu0 0.0
    %4532 = vmatprep.subr.mxu0 0.0
    %4533 = vmatpush1.msra.mxu0 0.0
    %4534 = vmatprep.subr.mxu0 0.0
    %4535 = vmatpush1.msra.mxu0 0.0
    %4536 = vmatprep.subr.mxu0 0.0
    %4537 = vmatpush1.msra.mxu0 0.0
    %4538 = vmatprep.subr.mxu0 0.0
    %4539 = vmatpush1.msra.mxu0 0.0
    %4540 = vmatprep.subr.mxu0 0.0
    %4541 = vmatpush1.msra.mxu0 0.0
    %4542 = vmatprep.mubr.f32.mxu0 0.0
    %4543 = vmatmul.mubr.f32.gmra.mrb[0].mxu0 %v4336
    %v4544 = vpop.f32.mrb[0].mxu0
    %v4545 = vadd.f32 %v3023, %v4544
    %v4546 = vpop.f32.mrb[0].mxu0
    %4547 = vdwg.mxu0
    %v4549 = vrot.slane %v4405, 4
    %v4551 = vadd.f32 %v2704, %v4549
    %v4552 = vxor.u32 %v4551, 2147483648
    %v4553 = vmul.f32 %v4552, 1.442695
    %v4554 = vpow.pop %v4553
    %v4555 = vadd.f32 %v4554, 1.0
    %v4556 = vrcp.pop %v4555
    %v4557 = vmul.f32 1.0, %v4556
    %v4559 = vrot.slane %v4475, 4
    %v4561 = vadd.f32 %v2790, %v4559
    %v4562 = vxor.u32 %v4561, 2147483648
    %v4563 = vmul.f32 %v4562, 1.442695
    %v4564 = vpow.pop %v4563
    %v4565 = vadd.f32 %v4564, 1.0
    %v4566 = vrcp.pop %v4565
    %v4567 = vmul.f32 1.0, %v4566
    %v4569 = vrot.slane %v4545, 4
    %v4571 = vmul.f32 %v4557, %v4569
    %v4572 = vadd.f32 %v2876, %v4571
    %v4573 = vtanh.pop %v4572
    %v4574 = vsub.f32 1.0, %v4567
    %v4575 = vmul.f32 %v4574, %v4573
    %v4576 = vrot.slane %v4333, 6
    %v4578 = vmul.f32 %v4567, %v4576
    %v4579 = vadd.f32 %v4575, %v4578
    %v4581 = vrot.slane %v4579, 4
    %v4582 = vsel %vm637, %v4581, 0
    %4584 = vmatprep.subr.mxu0 0.0
    %4585 = vmatpush1.msra.mxu0 %v2602
    %4586 = vmatprep.subr.mxu0 0.0
    %4587 = vmatpush1.msra.mxu0 %v2603
    %4588 = vmatprep.subr.mxu0 0.0
    %4589 = vmatpush1.msra.mxu0 %v2604
    %4590 = vmatprep.subr.mxu0 0.0
    %4591 = vmatpush1.msra.mxu0 %v2605
    %4592 = vmatprep.subr.mxu0 0.0
    %4593 = vmatpush1.msra.mxu0 0.0
    %4594 = vmatprep.subr.mxu0 0.0
    %4595 = vmatpush1.msra.mxu0 0.0
    %4596 = vmatprep.subr.mxu0 0.0
    %4597 = vmatpush1.msra.mxu0 0.0
    %4598 = vmatprep.subr.mxu0 0.0
    %4599 = vmatpush1.msra.mxu0 0.0
    %4600 = vmatprep.subr.mxu0 0.0
    %4601 = vmatpush1.msra.mxu0 0.0
    %4602 = vmatprep.subr.mxu0 0.0
    %4603 = vmatpush1.msra.mxu0 0.0
    %4604 = vmatprep.subr.mxu0 0.0
    %4605 = vmatpush1.msra.mxu0 0.0
    %4606 = vmatprep.subr.mxu0 0.0
    %4607 = vmatpush1.msra.mxu0 0.0
    %4608 = vmatprep.subr.mxu0 0.0
    %4609 = vmatpush1.msra.mxu0 0.0
    %4610 = vmatprep.subr.mxu0 0.0
    %4611 = vmatpush1.msra.mxu0 0.0
    %4612 = vmatprep.subr.mxu0 0.0
    %4613 = vmatpush1.msra.mxu0 0.0
    %4614 = vmatprep.subr.mxu0 0.0
    %4615 = vmatpush1.msra.mxu0 0.0
    %4616 = vmatprep.subr.mxu0 0.0
    %4617 = vmatpush1.msra.mxu0 0.0
    %4618 = vmatprep.subr.mxu0 0.0
    %4619 = vmatpush1.msra.mxu0 0.0
    %4620 = vmatprep.subr.mxu0 0.0
    %4621 = vmatpush1.msra.mxu0 0.0
    %4622 = vmatprep.subr.mxu0 0.0
    %4623 = vmatpush1.msra.mxu0 0.0
    %4624 = vmatprep.subr.mxu0 0.0
    %4625 = vmatpush1.msra.mxu0 0.0
    %4626 = vmatprep.subr.mxu0 0.0
    %4627 = vmatpush1.msra.mxu0 0.0
    %4628 = vmatprep.subr.mxu0 0.0
    %4629 = vmatpush1.msra.mxu0 0.0
    %4630 = vmatprep.subr.mxu0 0.0
    %4631 = vmatpush1.msra.mxu0 0.0
    %4632 = vmatprep.subr.mxu0 0.0
    %4633 = vmatpush1.msra.mxu0 0.0
    %4634 = vmatprep.subr.mxu0 0.0
    %4635 = vmatpush1.msra.mxu0 0.0
    %4636 = vmatprep.subr.mxu0 0.0
    %4637 = vmatpush1.msra.mxu0 0.0
    %4638 = vmatprep.subr.mxu0 0.0
    %4639 = vmatpush1.msra.mxu0 0.0
    %4640 = vmatprep.subr.mxu0 0.0
    %4641 = vmatpush1.msra.mxu0 0.0
    %4642 = vmatprep.subr.mxu0 0.0
    %4643 = vmatpush1.msra.mxu0 0.0
    %4644 = vmatprep.subr.mxu0 0.0
    %4645 = vmatpush1.msra.mxu0 0.0
    %4646 = vmatprep.subr.mxu0 0.0
    %4647 = vmatpush1.msra.mxu0 0.0
    %4648 = vmatprep.mubr.f32.mxu0 0.0
    %4649 = vmatmul.mubr.f32.gmra.mrb[0].mxu0 %v4582
    %v4650 = vpop.f32.mrb[0].mxu0
    %v4651 = vadd.f32 0.0, %v4650
    %v4652 = vpop.f32.mrb[0].mxu0
    %4653 = vdwg.mxu0
    %4654 = vmatprep.subr.mxu0 0.0
    %4655 = vmatpush1.msra.mxu0 %v2606
    %4656 = vmatprep.subr.mxu0 0.0
    %4657 = vmatpush1.msra.mxu0 %v2607
    %4658 = vmatprep.subr.mxu0 0.0
    %4659 = vmatpush1.msra.mxu0 %v2608
    %4660 = vmatprep.subr.mxu0 0.0
    %4661 = vmatpush1.msra.mxu0 %v2609
    %4662 = vmatprep.subr.mxu0 0.0
    %4663 = vmatpush1.msra.mxu0 0.0
    %4664 = vmatprep.subr.mxu0 0.0
    %4665 = vmatpush1.msra.mxu0 0.0
    %4666 = vmatprep.subr.mxu0 0.0
    %4667 = vmatpush1.msra.mxu0 0.0
    %4668 = vmatprep.subr.mxu0 0.0
    %4669 = vmatpush1.msra.mxu0 0.0
    %4670 = vmatprep.subr.mxu0 0.0
    %4671 = vmatpush1.msra.mxu0 0.0
    %4672 = vmatprep.subr.mxu0 0.0
    %4673 = vmatpush1.msra.mxu0 0.0
    %4674 = vmatprep.subr.mxu0 0.0
    %4675 = vmatpush1.msra.mxu0 0.0
    %4676 = vmatprep.subr.mxu0 0.0
    %4677 = vmatpush1.msra.mxu0 0.0
    %4678 = vmatprep.subr.mxu0 0.0
    %4679 = vmatpush1.msra.mxu0 0.0
    %4680 = vmatprep.subr.mxu0 0.0
    %4681 = vmatpush1.msra.mxu0 0.0
    %4682 = vmatprep.subr.mxu0 0.0
    %4683 = vmatpush1.msra.mxu0 0.0
    %4684 = vmatprep.subr.mxu0 0.0
    %4685 = vmatpush1.msra.mxu0 0.0
    %4686 = vmatprep.subr.mxu0 0.0
    %4687 = vmatpush1.msra.mxu0 0.0
    %4688 = vmatprep.subr.mxu0 0.0
    %4689 = vmatpush1.msra.mxu0 0.0
    %4690 = vmatprep.subr.mxu0 0.0
    %4691 = vmatpush1.msra.mxu0 0.0
    %4692 = vmatprep.subr.mxu0 0.0
    %4693 = vmatpush1.msra.mxu0 0.0
    %4694 = vmatprep.subr.mxu0 0.0
    %4695 = vmatpush1.msra.mxu0 0.0
    %4696 = vmatprep.subr.mxu0 0.0
    %4697 = vmatpush1.msra.mxu0 0.0
    %4698 = vmatprep.subr.mxu0 0.0
    %4699 = vmatpush1.msra.mxu0 0.0
    %4700 = vmatprep.subr.mxu0 0.0
    %4701 = vmatpush1.msra.mxu0 0.0
    %4702 = vmatprep.subr.mxu0 0.0
    %4703 = vmatpush1.msra.mxu0 0.0
    %4704 = vmatprep.subr.mxu0 0.0
    %4705 = vmatpush1.msra.mxu0 0.0
    %4706 = vmatprep.subr.mxu0 0.0
    %4707 = vmatpush1.msra.mxu0 0.0
    %4708 = vmatprep.subr.mxu0 0.0
    %4709 = vmatpush1.msra.mxu0 0.0
    %4710 = vmatprep.subr.mxu0 0.0
    %4711 = vmatpush1.msra.mxu0 0.0
    %4712 = vmatprep.subr.mxu0 0.0
    %4713 = vmatpush1.msra.mxu0 0.0
    %4714 = vmatprep.subr.mxu0 0.0
    %4715 = vmatpush1.msra.mxu0 0.0
    %4716 = vmatprep.subr.mxu0 0.0
    %4717 = vmatpush1.msra.mxu0 0.0
    %4718 = vmatprep.mubr.f32.mxu0 0.0
    %4719 = vmatmul.mubr.f32.gmra.mrb[0].mxu0 %v4582
    %v4720 = vpop.f32.mrb[0].mxu0
    %v4721 = vadd.f32 0.0, %v4720
    %v4722 = vpop.f32.mrb[0].mxu0
    %4723 = vdwg.mxu0
    %4724 = vmatprep.subr.mxu0 0.0
    %4725 = vmatpush1.msra.mxu0 %v2610
    %4726 = vmatprep.subr.mxu0 0.0
    %4727 = vmatpush1.msra.mxu0 %v2611
    %4728 = vmatprep.subr.mxu0 0.0
    %4729 = vmatpush1.msra.mxu0 %v2612
    %4730 = vmatprep.subr.mxu0 0.0
    %4731 = vmatpush1.msra.mxu0 %v2613
    %4732 = vmatprep.subr.mxu0 0.0
    %4733 = vmatpush1.msra.mxu0 0.0
    %4734 = vmatprep.subr.mxu0 0.0
    %4735 = vmatpush1.msra.mxu0 0.0
    %4736 = vmatprep.subr.mxu0 0.0
    %4737 = vmatpush1.msra.mxu0 0.0
    %4738 = vmatprep.subr.mxu0 0.0
    %4739 = vmatpush1.msra.mxu0 0.0
    %4740 = vmatprep.subr.mxu0 0.0
    %4741 = vmatpush1.msra.mxu0 0.0
    %4742 = vmatprep.subr.mxu0 0.0
    %4743 = vmatpush1.msra.mxu0 0.0
    %4744 = vmatprep.subr.mxu0 0.0
    %4745 = vmatpush1.msra.mxu0 0.0
    %4746 = vmatprep.subr.mxu0 0.0
    %4747 = vmatpush1.msra.mxu0 0.0
    %4748 = vmatprep.subr.mxu0 0.0
    %4749 = vmatpush1.msra.mxu0 0.0
    %4750 = vmatprep.subr.mxu0 0.0
    %4751 = vmatpush1.msra.mxu0 0.0
    %4752 = vmatprep.subr.mxu0 0.0
    %4753 = vmatpush1.msra.mxu0 0.0
    %4754 = vmatprep.subr.mxu0 0.0
    %4755 = vmatpush1.msra.mxu0 0.0
    %4756 = vmatprep.subr.mxu0 0.0
    %4757 = vmatpush1.msra.mxu0 0.0
    %4758 = vmatprep.subr.mxu0 0.0
    %4759 = vmatpush1.msra.mxu0 0.0
    %4760 = vmatprep.subr.mxu0 0.0
    %4761 = vmatpush1.msra.mxu0 0.0
    %4762 = vmatprep.subr.mxu0 0.0
    %4763 = vmatpush1.msra.mxu0 0.0
    %4764 = vmatprep.subr.mxu0 0.0
    %4765 = vmatpush1.msra.mxu0 0.0
    %4766 = vmatprep.subr.mxu0 0.0
    %4767 = vmatpush1.msra.mxu0 0.0
    %4768 = vmatprep.subr.mxu0 0.0
    %4769 = vmatpush1.msra.mxu0 0.0
    %4770 = vmatprep.subr.mxu0 0.0
    %4771 = vmatpush1.msra.mxu0 0.0
    %4772 = vmatprep.subr.mxu0 0.0
    %4773 = vmatpush1.msra.mxu0 0.0
    %4774 = vmatprep.subr.mxu0 0.0
    %4775 = vmatpush1.msra.mxu0 0.0
    %4776 = vmatprep.subr.mxu0 0.0
    %4777 = vmatpush1.msra.mxu0 0.0
    %4778 = vmatprep.subr.mxu0 0.0
    %4779 = vmatpush1.msra.mxu0 0.0
    %4780 = vmatprep.subr.mxu0 0.0
    %4781 = vmatpush1.msra.mxu0 0.0
    %4782 = vmatprep.subr.mxu0 0.0
    %4783 = vmatpush1.msra.mxu0 0.0
    %4784 = vmatprep.subr.mxu0 0.0
    %4785 = vmatpush1.msra.mxu0 0.0
    %4786 = vmatprep.subr.mxu0 0.0
    %4787 = vmatpush1.msra.mxu0 0.0
    %4788 = vmatprep.mubr.f32.mxu0 0.0
    %4789 = vmatmul.mubr.f32.gmra.mrb[0].mxu0 %v4582
    %v4790 = vpop.f32.mrb[0].mxu0
    %v4791 = vadd.f32 %v3023, %v4790
    %v4792 = vpop.f32.mrb[0].mxu0
    %4793 = vdwg.mxu0
    %v4795 = vrot.slane %v4651, 2
    %v4797 = vadd.f32 %v2704, %v4795
    %v4798 = vxor.u32 %v4797, 2147483648
    %v4799 = vmul.f32 %v4798, 1.442695
    %v4800 = vpow.pop %v4799
    %v4801 = vadd.f32 %v4800, 1.0
    %v4802 = vrcp.pop %v4801
    %v4803 = vmul.f32 1.0, %v4802
    %v4805 = vrot.slane %v4721, 2
    %v4807 = vadd.f32 %v2790, %v4805
    %v4808 = vxor.u32 %v4807, 2147483648
    %v4809 = vmul.f32 %v4808, 1.442695
    %v4810 = vpow.pop %v4809
    %v4811 = vadd.f32 %v4810, 1.0
    %v4812 = vrcp.pop %v4811
    %v4813 = vmul.f32 1.0, %v4812
    %v4815 = vrot.slane %v4791, 2
    %v4817 = vmul.f32 %v4803, %v4815
    %v4818 = vadd.f32 %v2876, %v4817
    %v4819 = vtanh.pop %v4818
    %v4820 = vsub.f32 1.0, %v4813
    %v4821 = vmul.f32 %v4820, %v4819
    %v4822 = vrot.slane %v4579, 6
    %v4824 = vmul.f32 %v4813, %v4822
    %v4825 = vadd.f32 %v4821, %v4824
    %4826 = vst.msk [vmem:[#allocation40 - $0x6] sm:$0xc0] %vm1621, %v4825
    %v4827 = vld [vmem:[#allocation37] sm:$0xff]
    %v4828 = vld [vmem:[#allocation37 + $0x8] sm:$0xff]
    %v4829 = vld [vmem:[#allocation37 + $0x10] sm:$0xff]
    %v4830 = vld [vmem:[#allocation37 + $0x18] sm:$0xff]
    %v4831 = vld [vmem:[#allocation3] sm:$0x1]
    %v4833 = vlaneseq
    %v4834 = vshrl.u32 %v4833, 7
    %v4835 = vsub.s32 0, %v4834
    %v4836 = vrot.slane %v4831, %v4835
    %v4839 = vrot.slane %v4825, 6
    %v4840 = vsel %vm637, %v4839, 0
    %4842 = vmatprep.subr.mxu0 0.0
    %4843 = vmatpush1.msra.mxu0 %v4827
    %4844 = vmatprep.subr.mxu0 0.0
    %4845 = vmatpush1.msra.mxu0 %v4828
    %4846 = vmatprep.subr.mxu0 0.0
    %4847 = vmatpush1.msra.mxu0 %v4829
    %4848 = vmatprep.subr.mxu0 0.0
    %4849 = vmatpush1.msra.mxu0 %v4830
    %4850 = vmatprep.subr.mxu0 0.0
    %4851 = vmatpush1.msra.mxu0 0.0
    %4852 = vmatprep.subr.mxu0 0.0
    %4853 = vmatpush1.msra.mxu0 0.0
    %4854 = vmatprep.subr.mxu0 0.0
    %4855 = vmatpush1.msra.mxu0 0.0
    %4856 = vmatprep.subr.mxu0 0.0
    %4857 = vmatpush1.msra.mxu0 0.0
    %4858 = vmatprep.subr.mxu0 0.0
    %4859 = vmatpush1.msra.mxu0 0.0
    %4860 = vmatprep.subr.mxu0 0.0
    %4861 = vmatpush1.msra.mxu0 0.0
    %4862 = vmatprep.subr.mxu0 0.0
    %4863 = vmatpush1.msra.mxu0 0.0
    %4864 = vmatprep.subr.mxu0 0.0
    %4865 = vmatpush1.msra.mxu0 0.0
    %4866 = vmatprep.subr.mxu0 0.0
    %4867 = vmatpush1.msra.mxu0 0.0
    %4868 = vmatprep.subr.mxu0 0.0
    %4869 = vmatpush1.msra.mxu0 0.0
    %4870 = vmatprep.subr.mxu0 0.0
    %4871 = vmatpush1.msra.mxu0 0.0
    %4872 = vmatprep.subr.mxu0 0.0
    %4873 = vmatpush1.msra.mxu0 0.0
    %4874 = vmatprep.subr.mxu0 0.0
    %4875 = vmatpush1.msra.mxu0 0.0
    %4876 = vmatprep.subr.mxu0 0.0
    %4877 = vmatpush1.msra.mxu0 0.0
    %4878 = vmatprep.subr.mxu0 0.0
    %4879 = vmatpush1.msra.mxu0 0.0
    %4880 = vmatprep.subr.mxu0 0.0
    %4881 = vmatpush1.msra.mxu0 0.0
    %4882 = vmatprep.subr.mxu0 0.0
    %4883 = vmatpush1.msra.mxu0 0.0
    %4884 = vmatprep.subr.mxu0 0.0
    %4885 = vmatpush1.msra.mxu0 0.0
    %4886 = vmatprep.subr.mxu0 0.0
    %4887 = vmatpush1.msra.mxu0 0.0
    %4888 = vmatprep.subr.mxu0 0.0
    %4889 = vmatpush1.msra.mxu0 0.0
    %4890 = vmatprep.subr.mxu0 0.0
    %4891 = vmatpush1.msra.mxu0 0.0
    %4892 = vmatprep.subr.mxu0 0.0
    %4893 = vmatpush1.msra.mxu0 0.0
    %4894 = vmatprep.subr.mxu0 0.0
    %4895 = vmatpush1.msra.mxu0 0.0
    %4896 = vmatprep.subr.mxu0 0.0
    %4897 = vmatpush1.msra.mxu0 0.0
    %4898 = vmatprep.subr.mxu0 0.0
    %4899 = vmatpush1.msra.mxu0 0.0
    %4900 = vmatprep.subr.mxu0 0.0
    %4901 = vmatpush1.msra.mxu0 0.0
    %4902 = vmatprep.subr.mxu0 0.0
    %4903 = vmatpush1.msra.mxu0 0.0
    %4904 = vmatprep.subr.mxu0 0.0
    %4905 = vmatpush1.msra.mxu0 0.0
    %4906 = vmatprep.mubr.f32.mxu0 0.0
    %4907 = vmatmul.mubr.f32.gmra.mrb[0].mxu0 %v4840
    %v4908 = vpop.f32.mrb[0].mxu0
    %v4909 = vadd.f32 %v4836, %v4908
    %v4910 = vpop.f32.mrb[0].mxu0
    %4911 = vdwg.mxu0
    %vm4912 = vcmask 1024
    %4913 = vst.msk [vmem:[#allocation39] sm:$0x3] %vm4912, %v4909
    // Predicated region
    $region182: #{tpu_custom_call.1} parent=1 // pred_check
      _
    $region183: #{tpu_custom_call.1} parent=1 // pred_check_branch
      %4915 = sbr.rel (0) target = $region185
    $region184: #{tpu_custom_call.1} parent=1 // pred_region
      %s4917 = ssub.s32 32, 32
      %4918 = vsyncadd [#allocation6], %s4917
      %s4920 = sshll.u32 [#allocation39], 4
      %s4921 = int_to_ptr.vmem [resolvable:$true] %s4920
      %4923 = dma.vmem_to_hbm [thread:$0]  %s4921, 32, %s23, [#allocation6]
    $region185: #{tpu_custom_call.1} parent=1 // pred_fallthru
      _
    // Predicated region
    $region186: #{tpu_custom_call.1} parent=1 // pred_check
      _
    $region187: #{tpu_custom_call.1} parent=1 // pred_check_branch
      %4925 = sbr.rel (0) target = $region189
    $region188: #{tpu_custom_call.1} parent=1 // pred_region
      %s4927 = ssub.s32 32, 32
      %4928 = vsyncadd [#allocation41], %s4927
      %s4930 = sshll.u32 [#allocation40], 4
      %s4931 = int_to_ptr.vmem [resolvable:$true] %s4930
      %4933 = dma.vmem_to_hbm [thread:$0]  %s4931, 32, %s24, [#allocation41]
    $region189: #{tpu_custom_call.1} parent=1 // pred_fallthru
      _
    // Predicated region
    $region190: #{tpu_custom_call.1} parent=1 // pred_check
      _
    $region191: #{tpu_custom_call.1} parent=1 // pred_check_branch
      %4935 = sbr.rel (0) target = $region193
    $region192: #{tpu_custom_call.1} parent=1 // pred_region
      %4936 = dma.done [#allocation6], 32
    $region193: #{tpu_custom_call.1} parent=1 // pred_fallthru
      _
    // Predicated region
    $region194: #{tpu_custom_call.1} parent=1 // pred_check
      _
    $region195: #{tpu_custom_call.1} parent=1 // pred_check_branch
      %4938 = sbr.rel (0) target = $region197
    $region196: #{tpu_custom_call.1} parent=1 // pred_region
      %4939 = dma.done [#allocation41], 32
    $region197: #{tpu_custom_call.1} parent=1 // pred_fallthru
      _
    %4940 = vsyncpa [#allocation5], 1
    %4941 = vsyncpa [#allocation8], 1
    %4942 = vsyncpa [#allocation11], 1
    %4943 = vsyncpa [#allocation14], 1
    %4944 = vsyncpa [#allocation17], 1
    %4945 = vsyncpa [#allocation20], 1
    %4946 = vsyncpa [#allocation23], 1
    %4947 = vsyncpa [#allocation26], 1
    %4948 = vsyncpa [#allocation29], 1
    %4949 = vsyncpa [#allocation32], 1
    %4950 = vsyncpa [#allocation35], 1
    %4951 = vsyncpa [#allocation38], 1
    %4952 = vsyncpa [#allocation6], 1
    %4953 = vsyncpa [#allocation41], 1

</llo_original>
